<compile_context>
chip_gen: v6e
topology: v6e:2x2x1
jax: 0.10.0
libtpu: 0.0.40
codegen_flags: <defaults>
</compile_context>

<pallas_src>
import numpy as np
import jax
import jax.numpy as jnp
from jax import lax
from jax.experimental import pallas as pl
from jax.experimental.pallas import tpu as pltpu

GROUPS = 8
BN_EPS = 1e-5
LANE = 128          # TPU lane width; internal channel dim P is padded to it


# --------------------------------------------------------------------------- #
# Pallas kernel: one grid step = NB full images.
# --------------------------------------------------------------------------- #
def _fanext_kernel(x_ref, w1_ref, w2_ref, w3_ref, b1_ref, b2_ref, b3_ref,
                   out_ref, cols_ref):
    # x_ref   : (NB, H, W, Cin)  bf16  input block, Cin == 2*planes
    # w1_ref  : (Cin, P)         bf16  conv1 1x1 weight, bn1 scale folded in
    #                                  (P = planes padded to a multiple of 128)
    # w2_ref  : (3, 3P, P)       bf16  3x3 conv, per-dy (dx,cin)-flattened,
    #                                  grouped-concat dense-expanded, bn2 folded
    # w3_ref  : (P, Cin)         bf16  conv3 1x1 weight, bn3 scale folded in
    # b*_ref  : (1, C)           f32   folded BatchNorm biases (zero in pad lanes)
    # out_ref : (NB, H, W, Cin)  bf16
    # cols_ref: (NB, H+2, W, 3P) bf16  scratch: dx-im2col rows with zero H-halo
    NB, H, W, Cin = x_ref.shape
    P = w1_ref.shape[1]
    M = NB * H * W

    # conv1 (1x1) + bn1 + relu — one (M, Cin) x (Cin, P) bf16 MXU matmul, f32 acc
    h1 = jnp.dot(x_ref[...].reshape(M, Cin), w1_ref[...],
                 preferred_element_type=jnp.float32)
    h1 = jnp.maximum(h1 + b1_ref[...], 0.0)                        # (M, P) f32

    # dx-im2col: the W-neighbours come from XLU rolls; the wrapped edge column
    # is masked back to the zero-padding value with a small (1, W, P) iota
    # broadcast in the select (no full (M, P) int32 temp).  The three thirds
    # are stored in place as aligned 128-lane slices of the scratch — no
    # (M, 3P) concat temp and no sub-lane relayout.
    h1_3d = h1.reshape(NB * H, W, P)
    w_ids = lax.broadcasted_iota(jnp.int32, (1, W, P), 1)
    left = jnp.where(w_ids >= 1, pltpu.roll(h1_3d, shift=1, axis=1), 0.0)
    right = jnp.where(w_ids <= W - 2,
                      pltpu.roll(h1_3d, shift=W - 1, axis=1), 0.0)
    cols_ref[:, 1:H + 1, :, 0:P] = left.astype(jnp.bfloat16).reshape(NB, H, W, P)
    cols_ref[:, 1:H + 1, :, P:2 * P] = h1_3d.astype(jnp.bfloat16).reshape(NB, H, W, P)
    cols_ref[:, 1:H + 1, :, 2 * P:3 * P] = right.astype(jnp.bfloat16).reshape(NB, H, W, P)
    # Re-zero the two (tiny) H-halo rows every step: the scratch persists
    # across grid iterations, and this grid axis is "parallel" (may be split
    # across TensorCores), so a one-time program_id()==0 init would be unsafe.
    zero_row = jnp.zeros((NB, 1, W, 3 * P), cols_ref.dtype)
    cols_ref[:, 0:1, :, :] = zero_row
    cols_ref[:, H + 1:H + 2, :, :] = zero_row

    # conv2 (3x3, grouped-concat; dense block-diagonal weights) + bn2 + relu —
    # 3 fat matmuls with K = 3P (see TODO(synk) above about per-group matmuls
    # for very large planes).
    def tap(dy):                                   # static Python unroll
        patch = cols_ref[:, dy:dy + H, :, :].reshape(M, 3 * P)   # aligned read
        return jnp.dot(patch, w2_ref[dy], preferred_element_type=jnp.float32)

    h2 = tap(0) + tap(1) + tap(2)
    h2 = jnp.maximum(h2 + b2_ref[...], 0.0)                        # (M, P) f32

    # conv3 (1x1) + bn3
    h3 = jnp.dot(h2.astype(jnp.bfloat16), w3_ref[...],
                 preferred_element_type=jnp.float32)
    h3 = h3 + b3_ref[...]                                          # (M, Cin) f32

    # residual add + relu in f32; re-read the VMEM-resident input block rather
    # than keeping an f32 copy of x live across the whole kernel.
    res = x_ref[...].reshape(M, Cin).astype(jnp.float32)
    out_ref[...] = (jnp.maximum(h3 + res, 0.0)
                    .astype(out_ref.dtype).reshape(NB, H, W, Cin))


# --------------------------------------------------------------------------- #
# Parameter construction / folding (plain-JAX / numpy glue)
# --------------------------------------------------------------------------- #
def group_planlist(planes):
    k = int(np.log2(planes)) - 6
    return [2 ** k] + [2 ** i for i in range(k, k + 3)]


def init_params(key, inplanes, planes, dtype=jnp.float32):
    keys = jax.random.split(key, 10)

    def conv_w(k, shape):
        fan_in = int(np.prod(shape[1:]))
        return jax.random.normal(k, shape, dtype) / np.sqrt(fan_in)

    def bn(k, c):
        k1, k2, k3, k4 = jax.random.split(k, 4)
        gamma = 1.0 + 0.1 * jax.random.normal(k1, (c,), dtype)
        beta = 0.1 * jax.random.normal(k2, (c,), dtype)
        mean = 0.1 * jax.random.normal(k3, (c,), dtype)
        var = jax.random.uniform(k4, (c,), dtype, minval=0.5, maxval=1.5)
        return (gamma, beta, mean, var)

    gpl = group_planlist(planes)
    W1 = conv_w(keys[0], (planes, inplanes, 1, 1))
    W2s = [conv_w(keys[1 + i], (gp * GROUPS, planes // GROUPS, 3, 3))
           for i, gp in enumerate(gpl)]
    W3 = conv_w(keys[5], (planes * 2, planes, 1, 1))
    return dict(W1=W1, W2s=W2s, W3=W3,
                bn1=bn(keys[6], planes),
                bn2=bn(keys[7], planes),
                bn3=bn(keys[8], planes * 2))


def _fold_bn(bn_params):
    gamma, beta, mean, var = bn_params
    scale = gamma / jnp.sqrt(var + BN_EPS)
    bias = beta - mean * scale
    return scale, bias


def _build_dense_w2(branch_weights, planes):
    """Expand the concat of 4 grouped (groups=8) 3x3 convs into a dense
    (ky, kx, cin, cout) numpy tensor (zeros off-group)."""
    cin_g = planes // GROUPS
    W2 = np.zeros((3, 3, planes, planes), np.float32)
    off = 0
    for w in branch_weights:                       # torch layout (O, I/g, 3, 3)
        w = np.asarray(w)
        out_i = w.shape[0]
        og = out_i // GROUPS
        for g in range(GROUPS):
            for c in range(og):
                oc = off + g * og + c
                for j in range(cin_g):
                    W2[:, :, g * cin_g + j, oc] = w[g * og + c, j]
        off += out_i
    return W2


def _prepare_inputs(params, planes, lane=LANE):
    """Fold BN scales into conv weights, zero-pad the internal channel dim P
    to a multiple of the 128-lane width, cast matmul operands to bf16."""
    P = planes
    Pp = ((P + lane - 1) // lane) * lane
    Cin = params["W1"].shape[1]
    Cout = params["W3"].shape[0]                   # == 2 * planes

    s1, b1 = map(np.asarray, _fold_bn(params["bn1"]))
    s2, b2 = map(np.asarray, _fold_bn(params["bn2"]))
    s3, b3 = map(np.asarray, _fold_bn(params["bn3"]))

    w1 = np.zeros((Cin, Pp), np.float32)
    w1[:, :P] = np.asarray(params["W1"])[:, :, 0, 0].T * s1[None, :]

    w2d = _build_dense_w2(params["W2s"], P) * s2[None, None, None, :]  # (3,3,P,P)
    w2 = np.zeros((3, 3, Pp, Pp), np.float32)
    w2[:, :, :P, :P] = w2d
    w2 = w2.reshape(3, 3 * Pp, Pp)                 # (dy, dx*Pp + cin, cout)

    w3 = np.zeros((Pp, Cout), np.float32)
    w3[:P, :] = np.asarray(params["W3"])[:, :, 0, 0].T * s3[None, :]

    b1p = np.zeros((1, Pp), np.float32); b1p[0, :P] = b1
    b2p = np.zeros((1, Pp), np.float32); b2p[0, :P] = b2
    b3p = b3.reshape(1, Cout).astype(np.float32)

    return (jnp.asarray(w1, jnp.bfloat16), jnp.asarray(w2, jnp.bfloat16),
            jnp.asarray(w3, jnp.bfloat16),
            jnp.asarray(b1p), jnp.asarray(b2p), jnp.asarray(b3p), Pp)


def _vmem_capacity_bytes():
    """Physical per-core VMEM (v5e/v6e: 128 MiB, v7x: 64 MiB); fall back to a
    conservative 64 MiB if the query is unavailable."""
    try:
        cap = getattr(pltpu.get_tpu_info(), "vmem_capacity_bytes", None)
        if cap:
            return int(cap)
    except Exception:
        pass
    return 64 * 1024 * 1024


# --------------------------------------------------------------------------- #
# Wrappers
# --------------------------------------------------------------------------- #
def fanext_bottleneck_v2_nhwc(x_nhwc, params, *, block_n=1):
    """NHWC fused forward. x_nhwc: (N, H, W, inplanes), inplanes == 2*planes.
    Returns bf16 NHWC output. For v5e/v6e, raise block_n so M = NB*H*W reaches
    ~1024-2048 rows per matmul (more VMEM is available there)."""
    N, H, W, Cin = x_nhwc.shape
    P = params["W1"].shape[0]
    assert Cin == 2 * P, "identity residual requires inplanes == planes * expansion"
    assert N % block_n == 0
    NB = block_n

    w1, w2, w3, b1, b2, b3, Pp = _prepare_inputs(params, P)

    # bf16 activations at the HBM boundary (residual stays f32 in-kernel).
    x = x_nhwc.astype(jnp.bfloat16)

    # Per-step VMEM estimate: double-buffered bf16 in/out tiles + bf16 weights
    # (double-buffered by default) + im2col scratch + a rough bound on the
    # live f32 temporaries (h1/h2/h3/rolls).
    bytes_io = NB * H * W * Cin * 2
    bytes_w = 2 * (w1.size + w2.size + w3.size) + 4 * (b1.size + b2.size + b3.size)
    bytes_scratch = NB * (H + 2) * W * 3 * Pp * 2
    bytes_tmp = NB * H * W * (6 * Pp + 2 * Cin) * 4
    est = 4 * bytes_io + 2 * bytes_w + bytes_scratch + bytes_tmp

    cap = _vmem_capacity_bytes()
    vmem_limit = int(min(max(2 * est, 32 * 1024 * 1024), int(0.85 * cap)))
    vmem_limit = int(min(max(vmem_limit, est), cap))   # never clamp below the need

    # NOTE: the weight/bias specs have constant index_maps, so Pallas reuses
    # the fetched block across grid steps; pipeline_mode=pl.Buffered(1) would
    # also drop their second VMEM buffer but is left at the default for
    # cross-version compatibility (the saving is small at these weight sizes).
    # TODO(synk): optional fp8 (e4m3) weights on v7x once conv2 is MXU-bound.
    return pl.pallas_call(
        _fanext_kernel,
        out_shape=jax.ShapeDtypeStruct((N, H, W, Cin), jnp.bfloat16),
        grid_spec=pltpu.PrefetchScalarGridSpec(
            num_scalar_prefetch=0,
            grid=(N // NB,),
            in_specs=[
                pl.BlockSpec((NB, H, W, Cin), lambda n: (n, 0, 0, 0)),
                pl.BlockSpec((Cin, Pp), lambda n: (0, 0)),
                pl.BlockSpec((3, 3 * Pp, Pp), lambda n: (0, 0, 0)),
                pl.BlockSpec((Pp, Cin), lambda n: (0, 0)),
                pl.BlockSpec((1, Pp), lambda n: (0, 0)),
                pl.BlockSpec((1, Pp), lambda n: (0, 0)),
                pl.BlockSpec((1, Cin), lambda n: (0, 0)),
            ],
            out_specs=pl.BlockSpec((NB, H, W, Cin), lambda n: (n, 0, 0, 0)),
            scratch_shapes=[pltpu.VMEM((NB, H + 2, W, 3 * Pp), jnp.bfloat16)],
        ),
        compiler_params=pltpu.CompilerParams(
            dimension_semantics=("parallel",),
            vmem_limit_bytes=vmem_limit),
    )(x, w1, w2, w3, b1, b2, b3)


def fanext_bottleneck_v2(x_nchw, params, *, block_n=1):
    # NOTE: if the surrounding model keeps NHWC activations, call
    # fanext_bottleneck_v2_nhwc directly and skip these two full-tensor
    # HBM transposes (they cost roughly as much HBM traffic as the kernel).
    x = jnp.transpose(x_nchw, (0, 2, 3, 1))
    out = fanext_bottleneck_v2_nhwc(x, params, block_n=block_n)
    return jnp.transpose(out, (0, 3, 1, 2))


# --------------------------------------------------------------------------- #
# Pure-JAX f32 reference (NCHW, lax conv) for the correctness check
# --------------------------------------------------------------------------- #
def reference_nchw(x, params):
    dn = ("NCHW", "OIHW", "NCHW")

    def bn_apply(h, bnp):
        gamma, beta, mean, var = bnp
        scale = gamma / jnp.sqrt(var + BN_EPS)
        bias = beta - mean * scale
        return h * scale[None, :, None, None] + bias[None, :, None, None]

    h = lax.conv_general_dilated(x, params["W1"], (1, 1), "VALID",
                                 dimension_numbers=dn)
    h = jnp.maximum(bn_apply(h, params["bn1"]), 0.0)
    branches = [
        lax.conv_general_dilated(h, w, (1, 1), [(1, 1), (1, 1)],
                                 dimension_numbers=dn, feature_group_count=GROUPS)
        for w in params["W2s"]
    ]
    h = jnp.concatenate(branches, axis=1)
    h = jnp.maximum(bn_apply(h, params["bn2"]), 0.0)
    h = lax.conv_general_dilated(h, params["W3"], (1, 1), "VALID",
                                 dimension_numbers=dn)
    h = bn_apply(h, params["bn3"])
    return jnp.maximum(h + x, 0.0)


# --------------------------------------------------------------------------- #
if __name__ == "__main__":
    # Smallest valid config: planes=64 -> group_planlist=[1,1,2,4], groups=8,
    # inplanes = planes * expansion = 128 (identity residual), H=W=16, N=2.
    # Internally planes is padded to 128 lanes; each grid step's matmuls see
    # M = H*W = 256 rows.
    N, PLANES, H, W = 2, 64, 16, 16
    INPLANES = PLANES * 2

    key = jax.random.PRNGKey(0)
    kx, kp = jax.random.split(key)
    # Production path keeps activations NHWC (channels-last -> lane dim); the
    # NCHW wrapper exists only for torch-layout callers.
    x_nhwc = jax.random.normal(kx, (N, H, W, INPLANES), jnp.float32)
    params = init_params(kp, INPLANES, PLANES)

    out = fanext_bottleneck_v2_nhwc(x_nhwc, params, block_n=1)
    jax.block_until_ready(out)
    assert out.shape == (N, H, W, INPLANES)
    assert out.dtype == jnp.bfloat16

    ref = reference_nchw(jnp.transpose(x_nhwc, (0, 3, 1, 2)), params)
    ref = jnp.transpose(ref, (0, 2, 3, 1))
    ref_max = float(jnp.max(jnp.abs(ref)))
    err = float(jnp.max(jnp.abs(out.astype(jnp.float32) - ref)))
    # Tolerance accounts for bf16 activations/weights (f32 accumulation) plus
    # bf16 output rounding vs the pure f32 reference through three convs.
    tol = 3e-2 + 3e-2 * ref_max
    assert err < tol, f"mismatch vs reference: max abs err {err} (tol {tol})"

    print("KERNEL_OK")
</pallas_src>

<mosaic_0001>
module attributes {stable_mosaic.version = 11 : i64} {
  func.func @_fanext_kernel(%arg0: i32, %arg1: memref<1x16x16x128xbf16, #tpu.memory_space<vmem>>, %arg2: memref<128x128xbf16, #tpu.memory_space<vmem>>, %arg3: memref<3x384x128xbf16, #tpu.memory_space<vmem>>, %arg4: memref<128x128xbf16, #tpu.memory_space<vmem>>, %arg5: memref<1x128xf32, #tpu.memory_space<vmem>>, %arg6: memref<1x128xf32, #tpu.memory_space<vmem>>, %arg7: memref<1x128xf32, #tpu.memory_space<vmem>>, %arg8: memref<1x16x16x128xbf16, #tpu.memory_space<vmem>>, %arg9: memref<1x18x16x384xbf16, #tpu.memory_space<vmem>>) attributes {dimension_semantics = [#tpu.dimension_semantics<parallel>], iteration_bounds = array<i64: 2>, scalar_prefetch = 0 : i64, scratch_operands = 1 : i64, tpu.core_type = #tpu.core_type<tc>, window_params = [{transform_indices = @transform_0, window_bounds = array<i64: 1, 16, 16, 128>}, {pipeline_mode = #tpu.pipeline_mode<synchronous>, transform_indices = @transform_1, window_bounds = array<i64: 128, 128>}, {pipeline_mode = #tpu.pipeline_mode<synchronous>, transform_indices = @transform_2, window_bounds = array<i64: 3, 384, 128>}, {pipeline_mode = #tpu.pipeline_mode<synchronous>, transform_indices = @transform_3, window_bounds = array<i64: 128, 128>}, {pipeline_mode = #tpu.pipeline_mode<synchronous>, transform_indices = @transform_4, window_bounds = array<i64: 1, 128>}, {pipeline_mode = #tpu.pipeline_mode<synchronous>, transform_indices = @transform_5, window_bounds = array<i64: 1, 128>}, {pipeline_mode = #tpu.pipeline_mode<synchronous>, transform_indices = @transform_6, window_bounds = array<i64: 1, 128>}, {transform_indices = @transform_7, window_bounds = array<i64: 1, 16, 16, 128>}]} {
    %c0 = arith.constant 0 : index
    %c0_0 = arith.constant 0 : index
    %c0_1 = arith.constant 0 : index
    %c0_2 = arith.constant 0 : index
    %0 = vector.load %arg1[%c0, %c0_0, %c0_1, %c0_2] : memref<1x16x16x128xbf16, #tpu.memory_space<vmem>>, vector<1x16x16x128xbf16>
    %1 = vector.shape_cast %0 : vector<1x16x16x128xbf16> to vector<256x128xbf16>
    %c0_3 = arith.constant 0 : index
    %c0_4 = arith.constant 0 : index
    %2 = vector.load %arg2[%c0_3, %c0_4] : memref<128x128xbf16, #tpu.memory_space<vmem>>, vector<128x128xbf16>
    %cst = arith.constant dense<0.000000e+00> : vector<256x128xf32>
    %3 = tpu.matmul %1, %2, %cst {dimension_numbers = #tpu.dot_dimension_numbers<[1], [0], [0], [1], [0, 0, 1, 1], [], []>} : vector<256x128xbf16>, vector<128x128xbf16>, vector<256x128xf32> -> vector<256x128xf32>
    %c0_5 = arith.constant 0 : index
    %c0_6 = arith.constant 0 : index
    %4 = vector.load %arg5[%c0_5, %c0_6] : memref<1x128xf32, #tpu.memory_space<vmem>>, vector<1x128xf32>
    %5 = vector.broadcast %4 : vector<1x128xf32> to vector<256x128xf32>
    %6 = arith.addf %3, %5 : vector<256x128xf32>
    %cst_7 = arith.constant 0.000000e+00 : f32
    %7 = vector.broadcast %cst_7 : f32 to vector<256x128xf32>
    %8 = arith.maximumf %6, %7 : vector<256x128xf32>
    %9 = vector.shape_cast %8 : vector<256x128xf32> to vector<16x16x128xf32>
    %10 = tpu.iota {dimensions = array<i32: 1>} : vector<1x16x128xi32>
    %c1_i32 = arith.constant 1 : i32
    %11 = vector.broadcast %c1_i32 : i32 to vector<1x16x128xi32>
    %12 = arith.cmpi sge, %10, %11 : vector<1x16x128xi32>
    %c1_i32_8 = arith.constant 1 : i32
    %13 = tpu.dynamic_rotate %9 by %c1_i32_8 dim 1 : vector<16x16x128xf32>, i32 -> vector<16x16x128xf32>
    %cst_9 = arith.constant 0.000000e+00 : f32
    %14 = vector.shape_cast %12 : vector<1x16x128xi1> to vector<1x16x128xi1>
    %15 = vector.broadcast %14 : vector<1x16x128xi1> to vector<16x16x128xi1>
    %16 = vector.broadcast %cst_9 : f32 to vector<16x16x128xf32>
    %17 = arith.select %15, %13, %16 : vector<16x16x128xi1>, vector<16x16x128xf32>
    %c14_i32 = arith.constant 14 : i32
    %18 = vector.broadcast %c14_i32 : i32 to vector<1x16x128xi32>
    %19 = arith.cmpi sle, %10, %18 : vector<1x16x128xi32>
    %c15_i32 = arith.constant 15 : i32
    %20 = tpu.dynamic_rotate %9 by %c15_i32 dim 1 : vector<16x16x128xf32>, i32 -> vector<16x16x128xf32>
    %cst_10 = arith.constant 0.000000e+00 : f32
    %21 = vector.shape_cast %19 : vector<1x16x128xi1> to vector<1x16x128xi1>
    %22 = vector.broadcast %21 : vector<1x16x128xi1> to vector<16x16x128xi1>
    %23 = vector.broadcast %cst_10 : f32 to vector<16x16x128xf32>
    %24 = arith.select %22, %20, %23 : vector<16x16x128xi1>, vector<16x16x128xf32>
    %25 = arith.truncf %17 : vector<16x16x128xf32> to vector<16x16x128xbf16>
    %26 = vector.shape_cast %25 : vector<16x16x128xbf16> to vector<1x16x16x128xbf16>
    %c0_11 = arith.constant 0 : index
    %c1 = arith.constant 1 : index
    %c0_12 = arith.constant 0 : index
    %c0_13 = arith.constant 0 : index
    %27 = vector.load %arg9[%c0_11, %c1, %c0_12, %c0_13] : memref<1x18x16x384xbf16, #tpu.memory_space<vmem>>, vector<1x16x16x128xbf16>
    tpu.vector_store %arg9[%c0_11, %c1, %c0_12, %c0_13], %26 {strides = array<i32>} : memref<1x18x16x384xbf16, #tpu.memory_space<vmem>>, vector<1x16x16x128xbf16>,
    %28 = arith.truncf %9 : vector<16x16x128xf32> to vector<16x16x128xbf16>
    %29 = vector.shape_cast %28 : vector<16x16x128xbf16> to vector<1x16x16x128xbf16>
    %c0_14 = arith.constant 0 : index
    %c1_15 = arith.constant 1 : index
    %c0_16 = arith.constant 0 : index
    %c128 = arith.constant 128 : index
    %30 = vector.load %arg9[%c0_14, %c1_15, %c0_16, %c128] : memref<1x18x16x384xbf16, #tpu.memory_space<vmem>>, vector<1x16x16x128xbf16>
    tpu.vector_store %arg9[%c0_14, %c1_15, %c0_16, %c128], %29 {strides = array<i32>} : memref<1x18x16x384xbf16, #tpu.memory_space<vmem>>, vector<1x16x16x128xbf16>,
    %31 = arith.truncf %24 : vector<16x16x128xf32> to vector<16x16x128xbf16>
    %32 = vector.shape_cast %31 : vector<16x16x128xbf16> to vector<1x16x16x128xbf16>
    %c0_17 = arith.constant 0 : index
    %c1_18 = arith.constant 1 : index
    %c0_19 = arith.constant 0 : index
    %c256 = arith.constant 256 : index
    %33 = vector.load %arg9[%c0_17, %c1_18, %c0_19, %c256] : memref<1x18x16x384xbf16, #tpu.memory_space<vmem>>, vector<1x16x16x128xbf16>
    tpu.vector_store %arg9[%c0_17, %c1_18, %c0_19, %c256], %32 {strides = array<i32>} : memref<1x18x16x384xbf16, #tpu.memory_space<vmem>>, vector<1x16x16x128xbf16>,
    %cst_20 = arith.constant 0.000000e+00 : bf16
    %34 = vector.broadcast %cst_20 : bf16 to vector<1x1x16x384xbf16>
    %c0_21 = arith.constant 0 : index
    %c0_22 = arith.constant 0 : index
    %c0_23 = arith.constant 0 : index
    %c0_24 = arith.constant 0 : index
    %35 = vector.load %arg9[%c0_21, %c0_22, %c0_23, %c0_24] : memref<1x18x16x384xbf16, #tpu.memory_space<vmem>>, vector<1x1x16x384xbf16>
    tpu.vector_store %arg9[%c0_21, %c0_22, %c0_23, %c0_24], %34 {strides = array<i32>} : memref<1x18x16x384xbf16, #tpu.memory_space<vmem>>, vector<1x1x16x384xbf16>,
    %c0_25 = arith.constant 0 : index
    %c17 = arith.constant 17 : index
    %c0_26 = arith.constant 0 : index
    %c0_27 = arith.constant 0 : index
    %36 = vector.load %arg9[%c0_25, %c17, %c0_26, %c0_27] : memref<1x18x16x384xbf16, #tpu.memory_space<vmem>>, vector<1x1x16x384xbf16>
    tpu.vector_store %arg9[%c0_25, %c17, %c0_26, %c0_27], %34 {strides = array<i32>} : memref<1x18x16x384xbf16, #tpu.memory_space<vmem>>, vector<1x1x16x384xbf16>,
    %c0_28 = arith.constant 0 : index
    %c0_29 = arith.constant 0 : index
    %c0_30 = arith.constant 0 : index
    %c0_31 = arith.constant 0 : index
    %37 = vector.load %arg9[%c0_28, %c0_29, %c0_30, %c0_31] : memref<1x18x16x384xbf16, #tpu.memory_space<vmem>>, vector<1x16x16x384xbf16>
    %38 = vector.shape_cast %37 : vector<1x16x16x384xbf16> to vector<256x384xbf16>
    %c0_32 = arith.constant 0 : index
    %c0_33 = arith.constant 0 : index
    %c0_34 = arith.constant 0 : index
    %39 = vector.load %arg3[%c0_32, %c0_33, %c0_34] : memref<3x384x128xbf16, #tpu.memory_space<vmem>>, vector<1x384x128xbf16>
    %40 = vector.shape_cast %39 : vector<1x384x128xbf16> to vector<384x128xbf16>
    %cst_35 = arith.constant dense<0.000000e+00> : vector<256x128xf32>
    %41 = tpu.matmul %38, %40, %cst_35 {dimension_numbers = #tpu.dot_dimension_numbers<[1], [0], [0], [1], [0, 0, 1, 1], [], []>} : vector<256x384xbf16>, vector<384x128xbf16>, vector<256x128xf32> -> vector<256x128xf32>
    %c0_36 = arith.constant 0 : index
    %c1_37 = arith.constant 1 : index
    %c0_38 = arith.constant 0 : index
    %c0_39 = arith.constant 0 : index
    %42 = vector.load %arg9[%c0_36, %c1_37, %c0_38, %c0_39] : memref<1x18x16x384xbf16, #tpu.memory_space<vmem>>, vector<1x16x16x384xbf16>
    %43 = vector.shape_cast %42 : vector<1x16x16x384xbf16> to vector<256x384xbf16>
    %c1_40 = arith.constant 1 : index
    %c0_41 = arith.constant 0 : index
    %c0_42 = arith.constant 0 : index
    %44 = vector.load %arg3[%c1_40, %c0_41, %c0_42] : memref<3x384x128xbf16, #tpu.memory_space<vmem>>, vector<1x384x128xbf16>
    %45 = vector.shape_cast %44 : vector<1x384x128xbf16> to vector<384x128xbf16>
    %cst_43 = arith.constant dense<0.000000e+00> : vector<256x128xf32>
    %46 = tpu.matmul %43, %45, %cst_43 {dimension_numbers = #tpu.dot_dimension_numbers<[1], [0], [0], [1], [0, 0, 1, 1], [], []>} : vector<256x384xbf16>, vector<384x128xbf16>, vector<256x128xf32> -> vector<256x128xf32>
    %47 = arith.addf %41, %46 : vector<256x128xf32>
    %c0_44 = arith.constant 0 : index
    %c2 = arith.constant 2 : index
    %c0_45 = arith.constant 0 : index
    %c0_46 = arith.constant 0 : index
    %48 = vector.load %arg9[%c0_44, %c2, %c0_45, %c0_46] : memref<1x18x16x384xbf16, #tpu.memory_space<vmem>>, vector<1x16x16x384xbf16>
    %49 = vector.shape_cast %48 : vector<1x16x16x384xbf16> to vector<256x384xbf16>
    %c2_47 = arith.constant 2 : index
    %c0_48 = arith.constant 0 : index
    %c0_49 = arith.constant 0 : index
    %50 = vector.load %arg3[%c2_47, %c0_48, %c0_49] : memref<3x384x128xbf16, #tpu.memory_space<vmem>>, vector<1x384x128xbf16>
    %51 = vector.shape_cast %50 : vector<1x384x128xbf16> to vector<384x128xbf16>
    %cst_50 = arith.constant dense<0.000000e+00> : vector<256x128xf32>
    %52 = tpu.matmul %49, %51, %cst_50 {dimension_numbers = #tpu.dot_dimension_numbers<[1], [0], [0], [1], [0, 0, 1, 1], [], []>} : vector<256x384xbf16>, vector<384x128xbf16>, vector<256x128xf32> -> vector<256x128xf32>
    %53 = arith.addf %47, %52 : vector<256x128xf32>
    %c0_51 = arith.constant 0 : index
    %c0_52 = arith.constant 0 : index
    %54 = vector.load %arg6[%c0_51, %c0_52] : memref<1x128xf32, #tpu.memory_space<vmem>>, vector<1x128xf32>
    %55 = vector.broadcast %54 : vector<1x128xf32> to vector<256x128xf32>
    %56 = arith.addf %53, %55 : vector<256x128xf32>
    %cst_53 = arith.constant 0.000000e+00 : f32
    %57 = vector.broadcast %cst_53 : f32 to vector<256x128xf32>
    %58 = arith.maximumf %56, %57 : vector<256x128xf32>
    %59 = arith.truncf %58 : vector<256x128xf32> to vector<256x128xbf16>
    %c0_54 = arith.constant 0 : index
    %c0_55 = arith.constant 0 : index
    %60 = vector.load %arg4[%c0_54, %c0_55] : memref<128x128xbf16, #tpu.memory_space<vmem>>, vector<128x128xbf16>
    %cst_56 = arith.constant dense<0.000000e+00> : vector<256x128xf32>
    %61 = tpu.matmul %59, %60, %cst_56 {dimension_numbers = #tpu.dot_dimension_numbers<[1], [0], [0], [1], [0, 0, 1, 1], [], []>} : vector<256x128xbf16>, vector<128x128xbf16>, vector<256x128xf32> -> vector<256x128xf32>
    %c0_57 = arith.constant 0 : index
    %c0_58 = arith.constant 0 : index
    %62 = vector.load %arg7[%c0_57, %c0_58] : memref<1x128xf32, #tpu.memory_space<vmem>>, vector<1x128xf32>
    %63 = vector.broadcast %62 : vector<1x128xf32> to vector<256x128xf32>
    %64 = arith.addf %61, %63 : vector<256x128xf32>
    %c0_59 = arith.constant 0 : index
    %c0_60 = arith.constant 0 : index
    %c0_61 = arith.constant 0 : index
    %c0_62 = arith.constant 0 : index
    %65 = vector.load %arg1[%c0_59, %c0_60, %c0_61, %c0_62] : memref<1x16x16x128xbf16, #tpu.memory_space<vmem>>, vector<1x16x16x128xbf16>
    %66 = vector.shape_cast %65 : vector<1x16x16x128xbf16> to vector<256x128xbf16>
    %67 = arith.extf %66 : vector<256x128xbf16> to vector<256x128xf32>
    %68 = arith.addf %64, %67 : vector<256x128xf32>
    %cst_63 = arith.constant 0.000000e+00 : f32
    %69 = vector.broadcast %cst_63 : f32 to vector<256x128xf32>
    %70 = arith.maximumf %68, %69 : vector<256x128xf32>
    %71 = arith.truncf %70 : vector<256x128xf32> to vector<256x128xbf16>
    %72 = vector.shape_cast %71 : vector<256x128xbf16> to vector<1x16x16x128xbf16>
    %c0_64 = arith.constant 0 : index
    %c0_65 = arith.constant 0 : index
    %c0_66 = arith.constant 0 : index
    %c0_67 = arith.constant 0 : index
    %73 = vector.load %arg8[%c0_64, %c0_65, %c0_66, %c0_67] : memref<1x16x16x128xbf16, #tpu.memory_space<vmem>>, vector<1x16x16x128xbf16>
    tpu.vector_store %arg8[%c0_64, %c0_65, %c0_66, %c0_67], %72 {strides = array<i32>} : memref<1x16x16x128xbf16, #tpu.memory_space<vmem>>, vector<1x16x16x128xbf16>,
    return
  }
  func.func @transform_0(%arg0: i32) -> (i32, i32, i32, i32) {
    %c0_i32 = arith.constant 0 : i32
    %c0_i32_0 = arith.constant 0 : i32
    %c0_i32_1 = arith.constant 0 : i32
    %c0_i32_2 = arith.constant 0 : i32
    return %arg0, %c0_i32, %c0_i32_0, %c0_i32_1 : i32, i32, i32, i32
  }
  func.func @transform_1(%arg0: i32) -> (i32, i32) {
    %c0_i32 = arith.constant 0 : i32
    %c0_i32_0 = arith.constant 0 : i32
    %c0_i32_1 = arith.constant 0 : i32
    return %c0_i32, %c0_i32_0 : i32, i32
  }
  func.func @transform_2(%arg0: i32) -> (i32, i32, i32) {
    %c0_i32 = arith.constant 0 : i32
    %c0_i32_0 = arith.constant 0 : i32
    %c0_i32_1 = arith.constant 0 : i32
    %c0_i32_2 = arith.constant 0 : i32
    return %c0_i32, %c0_i32_0, %c0_i32_1 : i32, i32, i32
  }
  func.func @transform_3(%arg0: i32) -> (i32, i32) {
    %c0_i32 = arith.constant 0 : i32
    %c0_i32_0 = arith.constant 0 : i32
    %c0_i32_1 = arith.constant 0 : i32
    return %c0_i32, %c0_i32_0 : i32, i32
  }
  func.func @transform_4(%arg0: i32) -> (i32, i32) {
    %c0_i32 = arith.constant 0 : i32
    %c0_i32_0 = arith.constant 0 : i32
    %c0_i32_1 = arith.constant 0 : i32
    return %c0_i32, %c0_i32_0 : i32, i32
  }
  func.func @transform_5(%arg0: i32) -> (i32, i32) {
    %c0_i32 = arith.constant 0 : i32
    %c0_i32_0 = arith.constant 0 : i32
    %c0_i32_1 = arith.constant 0 : i32
    return %c0_i32, %c0_i32_0 : i32, i32
  }
  func.func @transform_6(%arg0: i32) -> (i32, i32) {
    %c0_i32 = arith.constant 0 : i32
    %c0_i32_0 = arith.constant 0 : i32
    %c0_i32_1 = arith.constant 0 : i32
    return %c0_i32, %c0_i32_0 : i32, i32
  }
  func.func @transform_7(%arg0: i32) -> (i32, i32, i32, i32) {
    %c0_i32 = arith.constant 0 : i32
    %c0_i32_0 = arith.constant 0 : i32
    %c0_i32_1 = arith.constant 0 : i32
    %c0_i32_2 = arith.constant 0 : i32
    return %arg0, %c0_i32, %c0_i32_0, %c0_i32_1 : i32, i32, i32, i32
  }
}

</mosaic_0001>

<llo_original>
// kernel: tpu_custom_call.1
$region0: #{tpu_custom_call.1}
  #allocation0 [shape = 'u32[]', space=smem, size = 0x4, offset = 0x4, fixed_abs, tag = 'smem constant byte address 0x4 - core index']
  #allocation1 [shape = 'u32[144,128]{1,0:T(1,128)}', space=vmem, size = 0x12000, scoped, tag = 'internal scratch']
  #allocation2 [shape = 'bf16[1,18,16,384]{3,2,1,0:T(8,128)(2,1)}', space=vmem, size = 0x36000, scoped, tag = 'scratch operand']
  %s0 = inlined_call_operand.hbm [shape: bf16[2,16,16,128], index: 0, kind: input, shape index: {}]
  %s1 = inlined_call_operand.hbm [shape: bf16[128,128], index: 1, kind: input, shape index: {}]
  %s2 = inlined_call_operand.hbm [shape: bf16[3,384,128], index: 2, kind: input, shape index: {}]
  %s3 = inlined_call_operand.hbm [shape: bf16[128,128], index: 3, kind: input, shape index: {}]
  %s4 = inlined_call_operand.vmem [shape: f32[1,128], index: 4, kind: input, shape index: {}]
  %s5 = inlined_call_operand.vmem [shape: f32[1,128], index: 5, kind: input, shape index: {}]
  %s6 = inlined_call_operand.vmem [shape: f32[1,128], index: 6, kind: input, shape index: {}]
  %s7 = inlined_call_operand.hbm [shape: bf16[2,16,16,128], index: 7, kind: output, shape index: {}]
  %s8 = sld [smem:[#allocation0]]
  $region77: #{tpu_custom_call.1} parent=0
    _
  %s10 = ssub.s32 1, %s8
  %s11 = scalar_select 0, %s10, %s8
  $region1: #{tpu_custom_call.1} parent=0
    #allocation3 [shape = 'u8[131072]{0}', space=vmem, size = 0x20000, scoped, tag = 'input window, operand 0']
    #allocation4 [shape = 's32[2]{0}', space=sflag, size = 0x8, scoped, tag = 'scoped memory for tpu_custom_call.1']
    #allocation5 [shape = 's32[2]{0}', space=sflag, size = 0x8, scoped, tag = 'scoped memory for tpu_custom_call.1']
    #allocation6 [shape = 'u8[32768]{0}', space=vmem, size = 0x8000, scoped, tag = 'input window, operand 1, single buffered']
    #allocation7 [shape = 's32[1]{0}', space=sflag, size = 0x4, scoped, tag = 'scoped memory for tpu_custom_call.1']
    #allocation8 [shape = 'u8[294912]{0}', space=vmem, size = 0x48000, scoped, tag = 'input window, operand 2, single buffered']
    #allocation9 [shape = 'u8[32768]{0}', space=vmem, size = 0x8000, scoped, tag = 'input window, operand 3, single buffered']
    #allocation10 [shape = 's32[1]{0}', space=sflag, size = 0x4, scoped, tag = 'scoped memory for tpu_custom_call.1']
    #allocation11 [shape = 'u8[131072]{0}', space=vmem, size = 0x20000, scoped, tag = 'output window, operand 0']
    %12 = vsyncpa [#allocation4], 0
    %s13 = scalar_lea.sflag [#allocation4], 1
    %14 = vsyncpa %s13, 0
    %15 = vsyncpa [#allocation7], 0
    %16 = vsyncpa [#allocation10], 0
    %17 = vsyncpa [#allocation5], 0
    %s18 = scalar_lea.sflag [#allocation5], 1
    %19 = vsyncpa %s18, 0
    loop: start=0, step=1, limit=4
    $region2: #{tpu_custom_call.1} parent=1 // loop_pre_header
      _
    $region3: #{tpu_custom_call.1} parent=1 // loop_header
      %s21 = sphi 0, %s25
      %p22 = scmp.ge.s32.totalorder %s21, 4
      %s31 = sphi 0, %s33
      %s34 = sphi 0, %s31
      %s35 = sphi 0, %s34
      %s51 = sphi 0, %s35
      %s55 = sphi 0, %s55
      %s57 = sphi 0, %s55
      %s58 = sphi 0, %s57
      %s72 = sphi 0, %s58
      %s76 = sphi 0, %s76
      %s78 = sphi 0, %s76
      %s79 = sphi 0, %s78
      %s93 = sphi 0, %s79
      %s97 = sphi 0, %s97
      %s99 = sphi 0, %s97
      %s100 = sphi 0, %s99
      %s114 = sphi 0, %s100
      %s118 = sphi 0, %s118
      %s120 = sphi 0, %s118
      %s121 = sphi 0, %s120
      %s135 = sphi 0, %s121
      %s139 = sphi 0, %s139
      %s141 = sphi 0, %s139
      %s142 = sphi 0, %s141
      %s156 = sphi 0, %s142
      %s160 = sphi 0, %s160
      %s162 = sphi 0, %s160
      %s163 = sphi 0, %s162
      %s177 = sphi 0, %s163
      %s183 = sphi 0, %s185
      %s186 = sphi 0, %s183
      %s187 = sphi 0, %s186
      %s203 = sphi 0, %s187
    $region4: #{tpu_custom_call.1} parent=1 // loop_header_branch
      %24 = sbr.rel (%p22) target = $region8
    $region5: #{tpu_custom_call.1} parent=1 // loop_body
      %s26 = ssub.s32 %s21, 1
      %s27 = ssub.s32 %s21, 2
      %s28 = sadd.s32 %s21, 1
      %s29 = ssub.s32 %s21, %s28
      %p30 = scmp.eq.s32.totalorder %s29, 0
      %s32 = sadd.s32 %s31, 1
      %s33 = scalar_select %p30, %s31, %s32
      %p36 = pneg %p30
      %p37 = scmp.eq.s32.totalorder %s21, 1
      %p38 = por %p36, %p37
      %p39 = scmp.ne.s32.totalorder %s31, %s34
      %p40 = scmp.eq.s32.totalorder %s21, 0
      %p41 = por %p39, %p40
      %p42 = scmp.ne.s32.totalorder %s31, %s34
      %p43 = scmp.eq.s32.totalorder %s26, 1
      %p44 = por %p42, %p43
      %p45 = scmp.ne.s32.totalorder %s34, %s35
      %p46 = scmp.eq.s32.totalorder %s26, 0
      %p47 = por %p45, %p46
      %p48 = scmp.ne.s32.totalorder %s34, %s35
      %p49 = scmp.eq.s32.totalorder %s27, 1
      %p50 = por %p48, %p49
      %p52 = scmp.ne.s32.totalorder %s35, %s51
      %p53 = scmp.eq.s32.totalorder %s27, 0
      %p54 = por %p52, %p53
      %s56 = sadd.s32 %s55, 1
      %p59 = scmp.eq.s32.totalorder %s21, 1
      %p60 = scmp.ne.s32.totalorder %s55, %s57
      %p61 = scmp.eq.s32.totalorder %s21, 0
      %p62 = por %p60, %p61
      %p63 = scmp.ne.s32.totalorder %s55, %s57
      %p64 = scmp.eq.s32.totalorder %s26, 1
      %p65 = por %p63, %p64
      %p66 = scmp.ne.s32.totalorder %s57, %s58
      %p67 = scmp.eq.s32.totalorder %s26, 0
      %p68 = por %p66, %p67
      %p69 = scmp.ne.s32.totalorder %s57, %s58
      %p70 = scmp.eq.s32.totalorder %s27, 1
      %p71 = por %p69, %p70
      %p73 = scmp.ne.s32.totalorder %s58, %s72
      %p74 = scmp.eq.s32.totalorder %s27, 0
      %p75 = por %p73, %p74
      %s77 = sadd.s32 %s76, 1
      %p80 = scmp.eq.s32.totalorder %s21, 1
      %p81 = scmp.ne.s32.totalorder %s76, %s78
      %p82 = scmp.eq.s32.totalorder %s21, 0
      %p83 = por %p81, %p82
      %p84 = scmp.ne.s32.totalorder %s76, %s78
      %p85 = scmp.eq.s32.totalorder %s26, 1
      %p86 = por %p84, %p85
      %p87 = scmp.ne.s32.totalorder %s78, %s79
      %p88 = scmp.eq.s32.totalorder %s26, 0
      %p89 = por %p87, %p88
      %p90 = scmp.ne.s32.totalorder %s78, %s79
      %p91 = scmp.eq.s32.totalorder %s27, 1
      %p92 = por %p90, %p91
      %p94 = scmp.ne.s32.totalorder %s79, %s93
      %p95 = scmp.eq.s32.totalorder %s27, 0
      %p96 = por %p94, %p95
      %s98 = sadd.s32 %s97, 1
      %p101 = scmp.eq.s32.totalorder %s21, 1
      %p102 = scmp.ne.s32.totalorder %s97, %s99
      %p103 = scmp.eq.s32.totalorder %s21, 0
      %p104 = por %p102, %p103
      %p105 = scmp.ne.s32.totalorder %s97, %s99
      %p106 = scmp.eq.s32.totalorder %s26, 1
      %p107 = por %p105, %p106
      %p108 = scmp.ne.s32.totalorder %s99, %s100
      %p109 = scmp.eq.s32.totalorder %s26, 0
      %p110 = por %p108, %p109
      %p111 = scmp.ne.s32.totalorder %s99, %s100
      %p112 = scmp.eq.s32.totalorder %s27, 1
      %p113 = por %p111, %p112
      %p115 = scmp.ne.s32.totalorder %s100, %s114
      %p116 = scmp.eq.s32.totalorder %s27, 0
      %p117 = por %p115, %p116
      %s119 = sadd.s32 %s118, 1
      %p122 = scmp.eq.s32.totalorder %s21, 1
      %p123 = scmp.ne.s32.totalorder %s118, %s120
      %p124 = scmp.eq.s32.totalorder %s21, 0
      %p125 = por %p123, %p124
      %p126 = scmp.ne.s32.totalorder %s118, %s120
      %p127 = scmp.eq.s32.totalorder %s26, 1
      %p128 = por %p126, %p127
      %p129 = scmp.ne.s32.totalorder %s120, %s121
      %p130 = scmp.eq.s32.totalorder %s26, 0
      %p131 = por %p129, %p130
      %p132 = scmp.ne.s32.totalorder %s120, %s121
      %p133 = scmp.eq.s32.totalorder %s27, 1
      %p134 = por %p132, %p133
      %p136 = scmp.ne.s32.totalorder %s121, %s135
      %p137 = scmp.eq.s32.totalorder %s27, 0
      %p138 = por %p136, %p137
      %s140 = sadd.s32 %s139, 1
      %p143 = scmp.eq.s32.totalorder %s21, 1
      %p144 = scmp.ne.s32.totalorder %s139, %s141
      %p145 = scmp.eq.s32.totalorder %s21, 0
      %p146 = por %p144, %p145
      %p147 = scmp.ne.s32.totalorder %s139, %s141
      %p148 = scmp.eq.s32.totalorder %s26, 1
      %p149 = por %p147, %p148
      %p150 = scmp.ne.s32.totalorder %s141, %s142
      %p151 = scmp.eq.s32.totalorder %s26, 0
      %p152 = por %p150, %p151
      %p153 = scmp.ne.s32.totalorder %s141, %s142
      %p154 = scmp.eq.s32.totalorder %s27, 1
      %p155 = por %p153, %p154
      %p157 = scmp.ne.s32.totalorder %s142, %s156
      %p158 = scmp.eq.s32.totalorder %s27, 0
      %p159 = por %p157, %p158
      %s161 = sadd.s32 %s160, 1
      %p164 = scmp.eq.s32.totalorder %s21, 1
      %p165 = scmp.ne.s32.totalorder %s160, %s162
      %p166 = scmp.eq.s32.totalorder %s21, 0
      %p167 = por %p165, %p166
      %p168 = scmp.ne.s32.totalorder %s160, %s162
      %p169 = scmp.eq.s32.totalorder %s26, 1
      %p170 = por %p168, %p169
      %p171 = scmp.ne.s32.totalorder %s162, %s163
      %p172 = scmp.eq.s32.totalorder %s26, 0
      %p173 = por %p171, %p172
      %p174 = scmp.ne.s32.totalorder %s162, %s163
      %p175 = scmp.eq.s32.totalorder %s27, 1
      %p176 = por %p174, %p175
      %p178 = scmp.ne.s32.totalorder %s163, %s177
      %p179 = scmp.eq.s32.totalorder %s27, 0
      %p180 = por %p178, %p179
      %s181 = ssub.s32 %s21, %s28
      %p182 = scmp.eq.s32.totalorder %s181, 0
      %s184 = sadd.s32 %s183, 1
      %s185 = scalar_select %p182, %s183, %s184
      %p188 = pneg %p182
      %p189 = scmp.eq.s32.totalorder %s21, 1
      %p190 = por %p188, %p189
      %p191 = scmp.ne.s32.totalorder %s183, %s186
      %p192 = scmp.eq.s32.totalorder %s21, 0
      %p193 = por %p191, %p192
      %p194 = scmp.ne.s32.totalorder %s183, %s186
      %p195 = scmp.eq.s32.totalorder %s26, 1
      %p196 = por %p194, %p195
      %p197 = scmp.ne.s32.totalorder %s186, %s187
      %p198 = scmp.eq.s32.totalorder %s26, 0
      %p199 = por %p197, %p198
      %p200 = scmp.ne.s32.totalorder %s186, %s187
      %p201 = scmp.eq.s32.totalorder %s27, 1
      %p202 = por %p200, %p201
      %p204 = scmp.ne.s32.totalorder %s187, %s203
      %p205 = scmp.eq.s32.totalorder %s27, 0
      %p206 = por %p204, %p205
      %p207 = scmp.le.s32.totalorder 1, %s21
      %p208 = scmp.lt.s32.totalorder %s21, 3
      %p209 = pnand %p207, %p208
      %p210 = pneg %p209
      // Predicated region
      $region9: #{tpu_custom_call.1} parent=5 // pred_check
        _
      $region10: #{tpu_custom_call.1} parent=5 // pred_check_branch
        %212 = sbr.rel (%p209) target = $region12
      $region11: #{tpu_custom_call.1} parent=5 // pred_region
        %s213 = ssub.s32 %s21, 1
        // Predicated region
        $region13: #{tpu_custom_call.1} parent=11 // pred_check
          %p214 = pneg %p68
        $region14: #{tpu_custom_call.1} parent=11 // pred_check_branch
          %216 = sbr.rel (%p214) target = $region16
        $region15: #{tpu_custom_call.1} parent=11 // pred_region
          %s218 = ssub.s32 1024, 1024
          %219 = vsyncadd [#allocation7], %s218
          %s220 = sshll.u32 [#allocation6], 4
          %s221 = int_to_ptr.vmem [resolvable:$true] %s220
          %226 = dma.hbm_to_vmem [thread:$0]  %s1, 1024, %s221, [#allocation7], 64, 64, 4
        $region16: #{tpu_custom_call.1} parent=11 // pred_fallthru
          _
        // Predicated region
        $region17: #{tpu_custom_call.1} parent=11 // pred_check
          %p227 = pneg %p89
        $region18: #{tpu_custom_call.1} parent=11 // pred_check_branch
          %229 = sbr.rel (%p227) target = $region20
        $region19: #{tpu_custom_call.1} parent=11 // pred_region
          %s231 = ssub.s32 9216, 9216
          %232 = vsyncadd [#allocation7], %s231
          %s233 = sshll.u32 [#allocation8], 4
          %s234 = int_to_ptr.vmem [resolvable:$true] %s233
          %239 = dma.hbm_to_vmem [thread:$0]  %s2, 9216, %s234, [#allocation7], 64, 64, 4
        $region20: #{tpu_custom_call.1} parent=11 // pred_fallthru
          _
        // Predicated region
        $region21: #{tpu_custom_call.1} parent=11 // pred_check
          %p240 = pneg %p110
        $region22: #{tpu_custom_call.1} parent=11 // pred_check_branch
          %242 = sbr.rel (%p240) target = $region24
        $region23: #{tpu_custom_call.1} parent=11 // pred_region
          %s244 = ssub.s32 1024, 1024
          %245 = vsyncadd [#allocation10], %s244
          %s246 = sshll.u32 [#allocation9], 4
          %s247 = int_to_ptr.vmem [resolvable:$true] %s246
          %252 = dma.hbm_to_vmem [thread:$0]  %s3, 1024, %s247, [#allocation10], 64, 64, 4
        $region24: #{tpu_custom_call.1} parent=11 // pred_fallthru
          _
        // Predicated region
        $region25: #{tpu_custom_call.1} parent=11 // pred_check
          %p253 = pneg %p131
        $region26: #{tpu_custom_call.1} parent=11 // pred_check_branch
          %255 = sbr.rel (%p253) target = $region28
        $region27: #{tpu_custom_call.1} parent=11 // pred_region
          _
        $region28: #{tpu_custom_call.1} parent=11 // pred_fallthru
          _
        // Predicated region
        $region29: #{tpu_custom_call.1} parent=11 // pred_check
          %p256 = pneg %p152
        $region30: #{tpu_custom_call.1} parent=11 // pred_check_branch
          %258 = sbr.rel (%p256) target = $region32
        $region31: #{tpu_custom_call.1} parent=11 // pred_region
          _
        $region32: #{tpu_custom_call.1} parent=11 // pred_fallthru
          _
        // Predicated region
        $region33: #{tpu_custom_call.1} parent=11 // pred_check
          %p259 = pneg %p173
        $region34: #{tpu_custom_call.1} parent=11 // pred_check_branch
          %261 = sbr.rel (%p259) target = $region36
        $region35: #{tpu_custom_call.1} parent=11 // pred_region
          _
        $region36: #{tpu_custom_call.1} parent=11 // pred_fallthru
          _
      $region12: #{tpu_custom_call.1} parent=5 // pred_fallthru
        _
      %p262 = scmp.lt.s32.totalorder %s21, 2
      // Predicated region
      $region37: #{tpu_custom_call.1} parent=5 // pred_check
        %p263 = pneg %p262
      $region38: #{tpu_custom_call.1} parent=5 // pred_check_branch
        %265 = sbr.rel (%p263) target = $region40
      $region39: #{tpu_custom_call.1} parent=5 // pred_region
        // Predicated region
        $region41: #{tpu_custom_call.1} parent=39 // pred_check
          %p266 = pneg %p41
        $region42: #{tpu_custom_call.1} parent=39 // pred_check_branch
          %268 = sbr.rel (%p266) target = $region44
        $region43: #{tpu_custom_call.1} parent=39 // pred_region
          %s269 = sand.u32 %s31, 1
          %s270 = scalar_lea.sflag [#allocation4], %s269
          %s271 = sand.u32 %s31, 1
          %s272 = smul.addr %s271, 128
          %s273 = scalar_lea.vmem [#allocation3], %s272
          %s275 = ssub.s32 2048, 2048
          %276 = vsyncadd %s270, %s275
          %s277 = smul.addr %s21, 32
          %s278 = smul.addr %s277, 64
          %s279 = scalar_lea.hbm %s0, %s278
          %s280 = sshll.u32 %s273, 4
          %s281 = int_to_ptr.vmem [resolvable:$true] %s280
          %286 = dma.hbm_to_vmem [thread:$0]  %s279, 2048, %s281, %s270, 64, 64, 4
        $region44: #{tpu_custom_call.1} parent=39 // pred_fallthru
          _
      $region40: #{tpu_custom_call.1} parent=5 // pred_fallthru
        _
      %p287 = scmp.le.s32.totalorder 1, %s21
      %p288 = scmp.lt.s32.totalorder %s21, 3
      %p289 = pnand %p287, %p288
      %p290 = pneg %p289
      // Predicated region
      $region45: #{tpu_custom_call.1} parent=5 // pred_check
        _
      $region46: #{tpu_custom_call.1} parent=5 // pred_check_branch
        %292 = sbr.rel (%p289) target = $region48
      $region47: #{tpu_custom_call.1} parent=5 // pred_region
        %s293 = ssub.s32 %s21, 1
        %s294 = sand.u32 %s34, 1
        %s295 = scalar_lea.sflag [#allocation4], %s294
        %s296 = sand.u32 %s34, 1
        %s297 = smul.addr %s296, 128
        %s298 = scalar_lea.vmem [#allocation3], %s297
        // Predicated region
        $region49: #{tpu_custom_call.1} parent=47 // pred_check
          %p299 = pneg %p47
        $region50: #{tpu_custom_call.1} parent=47 // pred_check_branch
          %301 = sbr.rel (%p299) target = $region52
        $region51: #{tpu_custom_call.1} parent=47 // pred_region
          %302 = dma.done %s295, 2048
        $region52: #{tpu_custom_call.1} parent=47 // pred_fallthru
          _
        // Predicated region
        $region53: #{tpu_custom_call.1} parent=47 // pred_check
          %p303 = pneg %p68
        $region54: #{tpu_custom_call.1} parent=47 // pred_check_branch
          %305 = sbr.rel (%p303) target = $region56
        $region55: #{tpu_custom_call.1} parent=47 // pred_region
          %306 = dma.done [#allocation7], 1024
        $region56: #{tpu_custom_call.1} parent=47 // pred_fallthru
          _
        // Predicated region
        $region57: #{tpu_custom_call.1} parent=47 // pred_check
          %p307 = pneg %p89
        $region58: #{tpu_custom_call.1} parent=47 // pred_check_branch
          %309 = sbr.rel (%p307) target = $region60
        $region59: #{tpu_custom_call.1} parent=47 // pred_region
          %310 = dma.done [#allocation7], 9216
        $region60: #{tpu_custom_call.1} parent=47 // pred_fallthru
          _
        // Predicated region
        $region61: #{tpu_custom_call.1} parent=47 // pred_check
          %p311 = pneg %p110
        $region62: #{tpu_custom_call.1} parent=47 // pred_check_branch
          %313 = sbr.rel (%p311) target = $region64
        $region63: #{tpu_custom_call.1} parent=47 // pred_region
          %314 = dma.done [#allocation10], 1024
        $region64: #{tpu_custom_call.1} parent=47 // pred_fallthru
          _
        %s315 = sand.u32 %s34, 1
        %s316 = scalar_lea.sflag [#allocation4], %s315
        %s317 = sand.u32 %s34, 1
        %s318 = smul.addr %s317, 128
        %s319 = scalar_lea.vmem [#allocation3], %s318
        %p320 = pneg %p47
        %p321 = pneg %p44
        %p322 = pneg %p68
        %p323 = pneg %p65
        %p324 = pneg %p89
        %p325 = pneg %p86
        %p326 = pneg %p110
        %p327 = pneg %p107
        %p328 = pneg %p131
        %p329 = pneg %p128
        %p330 = pneg %p152
        %p331 = pneg %p149
        %p332 = pneg %p173
        %p333 = pneg %p170
        %p334 = pneg %p199
        %p335 = pneg %p196
        %s336 = sand.u32 %s186, 1
        %s337 = scalar_lea.sflag [#allocation5], %s336
        %s338 = sand.u32 %s186, 1
        %s339 = smul.addr %s338, 128
        %s340 = scalar_lea.vmem [#allocation11], %s339
        %v342 = vld [vmem:[%s298] sm:$0xf]
        %v343 = vld [vmem:[%s298 + $0x4] sm:$0xf]
        %v344 = vld [vmem:[%s298 + $0x8] sm:$0xf]
        %v345 = vld [vmem:[%s298 + $0xc] sm:$0xf]
        %v346 = vld [vmem:[%s298 + $0x10] sm:$0xf]
        %v347 = vld [vmem:[%s298 + $0x14] sm:$0xf]
        %v348 = vld [vmem:[%s298 + $0x18] sm:$0xf]
        %v349 = vld [vmem:[%s298 + $0x1c] sm:$0xf]
        %v350 = vld [vmem:[%s298 + $0x20] sm:$0xf]
        %v351 = vld [vmem:[%s298 + $0x24] sm:$0xf]
        %v352 = vld [vmem:[%s298 + $0x28] sm:$0xf]
        %v353 = vld [vmem:[%s298 + $0x2c] sm:$0xf]
        %v354 = vld [vmem:[%s298 + $0x30] sm:$0xf]
        %v355 = vld [vmem:[%s298 + $0x34] sm:$0xf]
        %v356 = vld [vmem:[%s298 + $0x38] sm:$0xf]
        %v357 = vld [vmem:[%s298 + $0x3c] sm:$0xf]
        %v358 = vld [vmem:[%s298 + $0x40] sm:$0xf]
        %v359 = vld [vmem:[%s298 + $0x44] sm:$0xf]
        %v360 = vld [vmem:[%s298 + $0x48] sm:$0xf]
        %v361 = vld [vmem:[%s298 + $0x4c] sm:$0xf]
        %v362 = vld [vmem:[%s298 + $0x50] sm:$0xf]
        %v363 = vld [vmem:[%s298 + $0x54] sm:$0xf]
        %v364 = vld [vmem:[%s298 + $0x58] sm:$0xf]
        %v365 = vld [vmem:[%s298 + $0x5c] sm:$0xf]
        %v366 = vld [vmem:[%s298 + $0x60] sm:$0xf]
        %v367 = vld [vmem:[%s298 + $0x64] sm:$0xf]
        %v368 = vld [vmem:[%s298 + $0x68] sm:$0xf]
        %v369 = vld [vmem:[%s298 + $0x6c] sm:$0xf]
        %v370 = vld [vmem:[%s298 + $0x70] sm:$0xf]
        %v371 = vld [vmem:[%s298 + $0x74] sm:$0xf]
        %v372 = vld [vmem:[%s298 + $0x78] sm:$0xf]
        %v373 = vld [vmem:[%s298 + $0x7c] sm:$0xf]
        %v374 = vld [vmem:[#allocation6] sm:$0xf]
        %v375 = vld [vmem:[#allocation6 + $0x4] sm:$0xf]
        %v376 = vld [vmem:[#allocation6 + $0x8] sm:$0xf]
        %v377 = vld [vmem:[#allocation6 + $0xc] sm:$0xf]
        %v378 = vld [vmem:[#allocation6 + $0x10] sm:$0xf]
        %v379 = vld [vmem:[#allocation6 + $0x14] sm:$0xf]
        %v380 = vld [vmem:[#allocation6 + $0x18] sm:$0xf]
        %v381 = vld [vmem:[#allocation6 + $0x1c] sm:$0xf]
        %v382 = vld [vmem:[#allocation6 + $0x20] sm:$0xf]
        %v383 = vld [vmem:[#allocation6 + $0x24] sm:$0xf]
        %v384 = vld [vmem:[#allocation6 + $0x28] sm:$0xf]
        %v385 = vld [vmem:[#allocation6 + $0x2c] sm:$0xf]
        %v386 = vld [vmem:[#allocation6 + $0x30] sm:$0xf]
        %v387 = vld [vmem:[#allocation6 + $0x34] sm:$0xf]
        %v388 = vld [vmem:[#allocation6 + $0x38] sm:$0xf]
        %v389 = vld [vmem:[#allocation6 + $0x3c] sm:$0xf]
        %v390 = vld [vmem:[%s4] sm:$0x1]
        %v392 = vlaneseq
        %v393 = vshrl.u32 %v392, 7
        %v394 = vsub.s32 0, %v393
        %v395 = vrot.slane %v390, %v394
        %v429 = vunpack.c.l.b16 %v342
        %v430 = vunpack.c.l.b16 %v343
        %v431 = vunpack.c.l.b16 %v344
        %v432 = vunpack.c.l.b16 %v345
        %v433 = vunpack.c.l.b16 %v346
        %v434 = vunpack.c.l.b16 %v347
        %v435 = vunpack.c.l.b16 %v348
        %v436 = vunpack.c.l.b16 %v349
        %v437 = vunpack.c.l.b16 %v350
        %v438 = vunpack.c.l.b16 %v351
        %v439 = vunpack.c.l.b16 %v352
        %v440 = vunpack.c.l.b16 %v353
        %v441 = vunpack.c.l.b16 %v354
        %v442 = vunpack.c.l.b16 %v355
        %v443 = vunpack.c.l.b16 %v356
        %v444 = vunpack.c.l.b16 %v357
        %v445 = vunpack.c.l.b16 %v358
        %v446 = vunpack.c.l.b16 %v359
        %v447 = vunpack.c.l.b16 %v360
        %v448 = vunpack.c.l.b16 %v361
        %v449 = vunpack.c.l.b16 %v362
        %v450 = vunpack.c.l.b16 %v363
        %v451 = vunpack.c.l.b16 %v364
        %v452 = vunpack.c.l.b16 %v365
        %v453 = vunpack.c.l.b16 %v366
        %v454 = vunpack.c.l.b16 %v367
        %v455 = vunpack.c.l.b16 %v368
        %v456 = vunpack.c.l.b16 %v369
        %v457 = vunpack.c.l.b16 %v370
        %v458 = vunpack.c.l.b16 %v371
        %v459 = vunpack.c.l.b16 %v372
        %v460 = vunpack.c.l.b16 %v373
        %v461 = vpack.c.b16 %v430, %v429
        %v462 = vpack.c.b16 %v432, %v431
        %v463 = vpack.c.b16 %v434, %v433
        %v464 = vpack.c.b16 %v436, %v435
        %v465 = vpack.c.b16 %v438, %v437
        %v466 = vpack.c.b16 %v440, %v439
        %v467 = vpack.c.b16 %v442, %v441
        %v468 = vpack.c.b16 %v444, %v443
        %v469 = vpack.c.b16 %v446, %v445
        %v470 = vpack.c.b16 %v448, %v447
        %v471 = vpack.c.b16 %v450, %v449
        %v472 = vpack.c.b16 %v452, %v451
        %v473 = vpack.c.b16 %v454, %v453
        %v474 = vpack.c.b16 %v456, %v455
        %v475 = vpack.c.b16 %v458, %v457
        %v476 = vpack.c.b16 %v460, %v459
        %v509 = vunpack.c.l.b16 %v374
        %v510 = vunpack.c.l.b16 %v375
        %v511 = vunpack.c.l.b16 %v376
        %v512 = vunpack.c.l.b16 %v377
        %v513 = vunpack.c.l.b16 %v378
        %v514 = vunpack.c.l.b16 %v379
        %v515 = vunpack.c.l.b16 %v380
        %v516 = vunpack.c.l.b16 %v381
        %v517 = vunpack.c.l.b16 %v382
        %v518 = vunpack.c.l.b16 %v383
        %v519 = vunpack.c.l.b16 %v384
        %v520 = vunpack.c.l.b16 %v385
        %v521 = vunpack.c.l.b16 %v386
        %v522 = vunpack.c.l.b16 %v387
        %v523 = vunpack.c.l.b16 %v388
        %v524 = vunpack.c.l.b16 %v389
        %v525 = vpack.c.b16 %v510, %v509
        %v526 = vpack.c.b16 %v512, %v511
        %v527 = vpack.c.b16 %v514, %v513
        %v528 = vpack.c.b16 %v516, %v515
        %v529 = vpack.c.b16 %v518, %v517
        %v530 = vpack.c.b16 %v520, %v519
        %v531 = vpack.c.b16 %v522, %v521
        %v532 = vpack.c.b16 %v524, %v523
        %541 = vmatprep.subr.bf16.mxu0 0
        %542 = vmatpush1.bf16.msra.mxu0 %v532
        %543 = vmatprep.subr.bf16.mxu0 0
        %544 = vmatpush1.bf16.msra.mxu0 %v531
        %545 = vmatprep.subr.bf16.mxu0 0
        %546 = vmatpush1.bf16.msra.mxu0 %v530
        %547 = vmatprep.subr.bf16.mxu0 0
        %548 = vmatpush1.bf16.msra.mxu0 %v529
        %549 = vmatprep.subr.bf16.mxu0 0
        %550 = vmatpush1.bf16.msra.mxu0 %v528
        %551 = vmatprep.subr.bf16.mxu0 0
        %552 = vmatpush1.bf16.msra.mxu0 %v527
        %553 = vmatprep.subr.bf16.mxu0 0
        %554 = vmatpush1.bf16.msra.mxu0 %v526
        %555 = vmatprep.subr.bf16.mxu0 0
        %556 = vmatpush1.bf16.msra.mxu0 %v525
        %557 = vmatprep.subr.bf16.mxu0 0
        %558 = vmatpush2.bf16.msra.mxu0 0
        %559 = vmatprep.subr.bf16.mxu0 0
        %560 = vmatpush2.bf16.msra.mxu0 0
        %561 = vmatprep.subr.bf16.mxu0 0
        %562 = vmatpush2.bf16.msra.mxu0 0
        %563 = vmatprep.subr.bf16.mxu0 0
        %564 = vmatpush2.bf16.msra.mxu0 0
        %565 = vmatprep.subr.bf16.mxu0 0
        %566 = vmatpush2.bf16.msra.mxu0 0
        %567 = vmatprep.subr.bf16.mxu0 0
        %568 = vmatpush2.bf16.msra.mxu0 0
        %569 = vmatprep.subr.bf16.mxu0 0
        %570 = vmatpush2.bf16.msra.mxu0 0
        %571 = vmatprep.subr.bf16.mxu0 0
        %572 = vmatpush2.bf16.msra.mxu0 0
        %573 = vmatprep.mubr.bf16.mxu0 0
        %574 = vmatmul.mubr.bf16.gmra.mxu0 %v461
        %v575 = vpop.f32.mrf.mxu0
        %v576 = vadd.f32 %v395, %v575
        %v577 = vpop.f32.mrf.mxu0
        %v578 = vpop.f32.mrf.mxu0
        %v579 = vadd.f32 %v395, %v578
        %v580 = vpop.f32.mrf.mxu0
        %581 = vmatprep.mubr.bf16.mxu0 0
        %582 = vmatmul.mubr.bf16.gmra.mxu0 %v462
        %v583 = vpop.f32.mrf.mxu0
        %v584 = vadd.f32 %v395, %v583
        %v585 = vpop.f32.mrf.mxu0
        %v586 = vpop.f32.mrf.mxu0
        %v587 = vadd.f32 %v395, %v586
        %v588 = vpop.f32.mrf.mxu0
        %589 = vmatprep.mubr.bf16.mxu0 0
        %590 = vmatmul.mubr.bf16.gmra.mxu0 %v463
        %v591 = vpop.f32.mrf.mxu0
        %v592 = vadd.f32 %v395, %v591
        %v593 = vpop.f32.mrf.mxu0
        %v594 = vpop.f32.mrf.mxu0
        %v595 = vadd.f32 %v395, %v594
        %v596 = vpop.f32.mrf.mxu0
        %597 = vmatprep.mubr.bf16.mxu0 0
        %598 = vmatmul.mubr.bf16.gmra.mxu0 %v464
        %v599 = vpop.f32.mrf.mxu0
        %v600 = vadd.f32 %v395, %v599
        %v601 = vpop.f32.mrf.mxu0
        %v602 = vpop.f32.mrf.mxu0
        %v603 = vadd.f32 %v395, %v602
        %v604 = vpop.f32.mrf.mxu0
        %605 = vmatprep.mubr.bf16.mxu0 0
        %606 = vmatmul.mubr.bf16.gmra.mxu0 %v465
        %v607 = vpop.f32.mrf.mxu0
        %v608 = vadd.f32 %v395, %v607
        %v609 = vpop.f32.mrf.mxu0
        %v610 = vpop.f32.mrf.mxu0
        %v611 = vadd.f32 %v395, %v610
        %v612 = vpop.f32.mrf.mxu0
        %613 = vmatprep.mubr.bf16.mxu0 0
        %614 = vmatmul.mubr.bf16.gmra.mxu0 %v466
        %v615 = vpop.f32.mrf.mxu0
        %v616 = vadd.f32 %v395, %v615
        %v617 = vpop.f32.mrf.mxu0
        %v618 = vpop.f32.mrf.mxu0
        %v619 = vadd.f32 %v395, %v618
        %v620 = vpop.f32.mrf.mxu0
        %621 = vmatprep.mubr.bf16.mxu0 0
        %622 = vmatmul.mubr.bf16.gmra.mxu0 %v467
        %v623 = vpop.f32.mrf.mxu0
        %v624 = vadd.f32 %v395, %v623
        %v625 = vpop.f32.mrf.mxu0
        %v626 = vpop.f32.mrf.mxu0
        %v627 = vadd.f32 %v395, %v626
        %v628 = vpop.f32.mrf.mxu0
        %629 = vmatprep.mubr.bf16.mxu0 0
        %630 = vmatmul.mubr.bf16.gmra.mxu0 %v468
        %v631 = vpop.f32.mrf.mxu0
        %v632 = vadd.f32 %v395, %v631
        %v633 = vpop.f32.mrf.mxu0
        %v634 = vpop.f32.mrf.mxu0
        %v635 = vadd.f32 %v395, %v634
        %v636 = vpop.f32.mrf.mxu0
        %637 = vmatprep.mubr.bf16.mxu0 0
        %638 = vmatmul.mubr.bf16.gmra.mxu0 %v469
        %v639 = vpop.f32.mrf.mxu0
        %v640 = vadd.f32 %v395, %v639
        %v641 = vpop.f32.mrf.mxu0
        %v642 = vpop.f32.mrf.mxu0
        %v643 = vadd.f32 %v395, %v642
        %v644 = vpop.f32.mrf.mxu0
        %645 = vmatprep.mubr.bf16.mxu0 0
        %646 = vmatmul.mubr.bf16.gmra.mxu0 %v470
        %v647 = vpop.f32.mrf.mxu0
        %v648 = vadd.f32 %v395, %v647
        %v649 = vpop.f32.mrf.mxu0
        %v650 = vpop.f32.mrf.mxu0
        %v651 = vadd.f32 %v395, %v650
        %v652 = vpop.f32.mrf.mxu0
        %653 = vmatprep.mubr.bf16.mxu0 0
        %654 = vmatmul.mubr.bf16.gmra.mxu0 %v471
        %v655 = vpop.f32.mrf.mxu0
        %v656 = vadd.f32 %v395, %v655
        %v657 = vpop.f32.mrf.mxu0
        %v658 = vpop.f32.mrf.mxu0
        %v659 = vadd.f32 %v395, %v658
        %v660 = vpop.f32.mrf.mxu0
        %661 = vmatprep.mubr.bf16.mxu0 0
        %662 = vmatmul.mubr.bf16.gmra.mxu0 %v472
        %v663 = vpop.f32.mrf.mxu0
        %v664 = vadd.f32 %v395, %v663
        %v665 = vpop.f32.mrf.mxu0
        %v666 = vpop.f32.mrf.mxu0
        %v667 = vadd.f32 %v395, %v666
        %v668 = vpop.f32.mrf.mxu0
        %669 = vmatprep.mubr.bf16.mxu0 0
        %670 = vmatmul.mubr.bf16.gmra.mxu0 %v473
        %v671 = vpop.f32.mrf.mxu0
        %v672 = vadd.f32 %v395, %v671
        %v673 = vpop.f32.mrf.mxu0
        %v674 = vpop.f32.mrf.mxu0
        %v675 = vadd.f32 %v395, %v674
        %v676 = vpop.f32.mrf.mxu0
        %677 = vmatprep.mubr.bf16.mxu0 0
        %678 = vmatmul.mubr.bf16.gmra.mxu0 %v474
        %v679 = vpop.f32.mrf.mxu0
        %v680 = vadd.f32 %v395, %v679
        %v681 = vpop.f32.mrf.mxu0
        %v682 = vpop.f32.mrf.mxu0
        %v683 = vadd.f32 %v395, %v682
        %v684 = vpop.f32.mrf.mxu0
        %685 = vmatprep.mubr.bf16.mxu0 0
        %686 = vmatmul.mubr.bf16.gmra.mxu0 %v475
        %v687 = vpop.f32.mrf.mxu0
        %v688 = vadd.f32 %v395, %v687
        %v689 = vpop.f32.mrf.mxu0
        %v690 = vpop.f32.mrf.mxu0
        %v691 = vadd.f32 %v395, %v690
        %v692 = vpop.f32.mrf.mxu0
        %693 = vmatprep.mubr.bf16.mxu0 0
        %694 = vmatmul.mubr.bf16.gmra.mxu0 %v476
        %v695 = vpop.f32.mrf.mxu0
        %v696 = vadd.f32 %v395, %v695
        %v697 = vpop.f32.mrf.mxu0
        %v698 = vpop.f32.mrf.mxu0
        %v699 = vadd.f32 %v395, %v698
        %v700 = vpop.f32.mrf.mxu0
        %701 = vdwg.mxu0
        %v702 = vmax.f32 %v576, 0.0
        %v703 = vmax.f32 %v579, 0.0
        %v704 = vmax.f32 %v584, 0.0
        %v705 = vmax.f32 %v587, 0.0
        %v706 = vmax.f32 %v592, 0.0
        %v707 = vmax.f32 %v595, 0.0
        %v708 = vmax.f32 %v600, 0.0
        %v709 = vmax.f32 %v603, 0.0
        %v710 = vmax.f32 %v608, 0.0
        %v711 = vmax.f32 %v611, 0.0
        %v712 = vmax.f32 %v616, 0.0
        %v713 = vmax.f32 %v619, 0.0
        %v714 = vmax.f32 %v624, 0.0
        %v715 = vmax.f32 %v627, 0.0
        %v716 = vmax.f32 %v632, 0.0
        %v717 = vmax.f32 %v635, 0.0
        %v718 = vmax.f32 %v640, 0.0
        %v719 = vmax.f32 %v643, 0.0
        %v720 = vmax.f32 %v648, 0.0
        %v721 = vmax.f32 %v651, 0.0
        %v722 = vmax.f32 %v656, 0.0
        %v723 = vmax.f32 %v659, 0.0
        %v724 = vmax.f32 %v664, 0.0
        %v725 = vmax.f32 %v667, 0.0
        %v726 = vmax.f32 %v672, 0.0
        %v727 = vmax.f32 %v675, 0.0
        %v728 = vmax.f32 %v680, 0.0
        %v729 = vmax.f32 %v683, 0.0
        %v730 = vmax.f32 %v688, 0.0
        %v731 = vmax.f32 %v691, 0.0
        %v732 = vmax.f32 %v696, 0.0
        %v733 = vmax.f32 %v699, 0.0
        %v734 = vlaneseq
        %v735 = vshrl.u32 %v734, 7
        %v736 = vadd.s32 %v735, 8
        %vm737 = vcmp.ge.s32.totalorder %v735, 1
        %vm738 = vcmp.ge.s32.totalorder %v736, 1
        %v739 = vrot.slane %v702, 7
        %v740 = vrot.slane %v704, 7
        %v741 = vrot.slane %v706, 7
        %v742 = vrot.slane %v708, 7
        %v743 = vrot.slane %v710, 7
        %v744 = vrot.slane %v712, 7
        %v745 = vrot.slane %v714, 7
        %v746 = vrot.slane %v716, 7
        %v747 = vrot.slane %v718, 7
        %v748 = vrot.slane %v720, 7
        %v749 = vrot.slane %v722, 7
        %v750 = vrot.slane %v724, 7
        %v751 = vrot.slane %v726, 7
        %v752 = vrot.slane %v728, 7
        %v753 = vrot.slane %v730, 7
        %v754 = vrot.slane %v732, 7
        %v755 = vrot.slane %v703, 7
        %v756 = vrot.slane %v705, 7
        %v757 = vrot.slane %v707, 7
        %v758 = vrot.slane %v709, 7
        %v759 = vrot.slane %v711, 7
        %v760 = vrot.slane %v713, 7
        %v761 = vrot.slane %v715, 7
        %v762 = vrot.slane %v717, 7
        %v763 = vrot.slane %v719, 7
        %v764 = vrot.slane %v721, 7
        %v765 = vrot.slane %v723, 7
        %v766 = vrot.slane %v725, 7
        %v767 = vrot.slane %v727, 7
        %v768 = vrot.slane %v729, 7
        %v769 = vrot.slane %v731, 7
        %v770 = vrot.slane %v733, 7
        %vm771 = vcmp.lt.s32.totalorder %v735, 1
        %v772 = vsel %vm771, %v739, %v755
        %v773 = vsel %vm771, %v740, %v756
        %v774 = vsel %vm771, %v741, %v757
        %v775 = vsel %vm771, %v742, %v758
        %v776 = vsel %vm771, %v743, %v759
        %v777 = vsel %vm771, %v744, %v760
        %v778 = vsel %vm771, %v745, %v761
        %v779 = vsel %vm771, %v746, %v762
        %v780 = vsel %vm771, %v747, %v763
        %v781 = vsel %vm771, %v748, %v764
        %v782 = vsel %vm771, %v749, %v765
        %v783 = vsel %vm771, %v750, %v766
        %v784 = vsel %vm771, %v751, %v767
        %v785 = vsel %vm771, %v752, %v768
        %v786 = vsel %vm771, %v753, %v769
        %v787 = vsel %vm771, %v754, %v770
        %v788 = vsel %vm771, %v755, %v739
        %v789 = vsel %vm771, %v756, %v740
        %v790 = vsel %vm771, %v757, %v741
        %v791 = vsel %vm771, %v758, %v742
        %v792 = vsel %vm771, %v759, %v743
        %v793 = vsel %vm771, %v760, %v744
        %v794 = vsel %vm771, %v761, %v745
        %v795 = vsel %vm771, %v762, %v746
        %v796 = vsel %vm771, %v763, %v747
        %v797 = vsel %vm771, %v764, %v748
        %v798 = vsel %vm771, %v765, %v749
        %v799 = vsel %vm771, %v766, %v750
        %v800 = vsel %vm771, %v767, %v751
        %v801 = vsel %vm771, %v768, %v752
        %v802 = vsel %vm771, %v769, %v753
        %v803 = vsel %vm771, %v770, %v754
        %v804 = vsel %vm737, 1, 0
        %v805 = vsel %vm738, 1, 0
        %vm806 = vcmp.eq.s32.totalorder %v804, 1
        %vm807 = vcmp.eq.s32.totalorder %v805, 1
        %v808 = vsel %vm806, %v788, 0.0
        %v809 = vsel %vm807, %v772, 0.0
        %v810 = vsel %vm806, %v789, 0.0
        %v811 = vsel %vm807, %v773, 0.0
        %v812 = vsel %vm806, %v790, 0.0
        %v813 = vsel %vm807, %v774, 0.0
        %v814 = vsel %vm806, %v791, 0.0
        %v815 = vsel %vm807, %v775, 0.0
        %v816 = vsel %vm806, %v792, 0.0
        %v817 = vsel %vm807, %v776, 0.0
        %v818 = vsel %vm806, %v793, 0.0
        %v819 = vsel %vm807, %v777, 0.0
        %v820 = vsel %vm806, %v794, 0.0
        %v821 = vsel %vm807, %v778, 0.0
        %v822 = vsel %vm806, %v795, 0.0
        %v823 = vsel %vm807, %v779, 0.0
        %v824 = vsel %vm806, %v796, 0.0
        %v825 = vsel %vm807, %v780, 0.0
        %v826 = vsel %vm806, %v797, 0.0
        %v827 = vsel %vm807, %v781, 0.0
        %v828 = vsel %vm806, %v798, 0.0
        %v829 = vsel %vm807, %v782, 0.0
        %v830 = vsel %vm806, %v799, 0.0
        %v831 = vsel %vm807, %v783, 0.0
        %v832 = vsel %vm806, %v800, 0.0
        %v833 = vsel %vm807, %v784, 0.0
        %v834 = vsel %vm806, %v801, 0.0
        %v835 = vsel %vm807, %v785, 0.0
        %v836 = vsel %vm806, %v802, 0.0
        %v837 = vsel %vm807, %v786, 0.0
        %v838 = vsel %vm806, %v803, 0.0
        %v839 = vsel %vm807, %v787, 0.0
        %vm840 = vcmp.le.s32.totalorder %v735, 14
        %vm841 = vcmp.le.s32.totalorder %v736, 14
        %v842 = vrot.slane %v702, 1
        %v843 = vrot.slane %v704, 1
        %v844 = vrot.slane %v706, 1
        %v845 = vrot.slane %v708, 1
        %v846 = vrot.slane %v710, 1
        %v847 = vrot.slane %v712, 1
        %v848 = vrot.slane %v714, 1
        %v849 = vrot.slane %v716, 1
        %v850 = vrot.slane %v718, 1
        %v851 = vrot.slane %v720, 1
        %v852 = vrot.slane %v722, 1
        %v853 = vrot.slane %v724, 1
        %v854 = vrot.slane %v726, 1
        %v855 = vrot.slane %v728, 1
        %v856 = vrot.slane %v730, 1
        %v857 = vrot.slane %v732, 1
        %v858 = vrot.slane %v703, 1
        %v859 = vrot.slane %v705, 1
        %v860 = vrot.slane %v707, 1
        %v861 = vrot.slane %v709, 1
        %v862 = vrot.slane %v711, 1
        %v863 = vrot.slane %v713, 1
        %v864 = vrot.slane %v715, 1
        %v865 = vrot.slane %v717, 1
        %v866 = vrot.slane %v719, 1
        %v867 = vrot.slane %v721, 1
        %v868 = vrot.slane %v723, 1
        %v869 = vrot.slane %v725, 1
        %v870 = vrot.slane %v727, 1
        %v871 = vrot.slane %v729, 1
        %v872 = vrot.slane %v731, 1
        %v873 = vrot.slane %v733, 1
        %vm874 = vcmp.lt.s32.totalorder %v735, 7
        %v875 = vsel %vm874, %v842, %v858
        %v876 = vsel %vm874, %v843, %v859
        %v877 = vsel %vm874, %v844, %v860
        %v878 = vsel %vm874, %v845, %v861
        %v879 = vsel %vm874, %v846, %v862
        %v880 = vsel %vm874, %v847, %v863
        %v881 = vsel %vm874, %v848, %v864
        %v882 = vsel %vm874, %v849, %v865
        %v883 = vsel %vm874, %v850, %v866
        %v884 = vsel %vm874, %v851, %v867
        %v885 = vsel %vm874, %v852, %v868
        %v886 = vsel %vm874, %v853, %v869
        %v887 = vsel %vm874, %v854, %v870
        %v888 = vsel %vm874, %v855, %v871
        %v889 = vsel %vm874, %v856, %v872
        %v890 = vsel %vm874, %v857, %v873
        %v891 = vsel %vm874, %v858, %v842
        %v892 = vsel %vm874, %v859, %v843
        %v893 = vsel %vm874, %v860, %v844
        %v894 = vsel %vm874, %v861, %v845
        %v895 = vsel %vm874, %v862, %v846
        %v896 = vsel %vm874, %v863, %v847
        %v897 = vsel %vm874, %v864, %v848
        %v898 = vsel %vm874, %v865, %v849
        %v899 = vsel %vm874, %v866, %v850
        %v900 = vsel %vm874, %v867, %v851
        %v901 = vsel %vm874, %v868, %v852
        %v902 = vsel %vm874, %v869, %v853
        %v903 = vsel %vm874, %v870, %v854
        %v904 = vsel %vm874, %v871, %v855
        %v905 = vsel %vm874, %v872, %v856
        %v906 = vsel %vm874, %v873, %v857
        %v907 = vsel %vm840, 1, 0
        %v908 = vsel %vm841, 1, 0
        %vm909 = vcmp.eq.s32.totalorder %v907, 1
        %vm910 = vcmp.eq.s32.totalorder %v908, 1
        %v911 = vsel %vm909, %v875, 0.0
        %v912 = vsel %vm910, %v891, 0.0
        %v913 = vsel %vm909, %v876, 0.0
        %v914 = vsel %vm910, %v892, 0.0
        %v915 = vsel %vm909, %v877, 0.0
        %v916 = vsel %vm910, %v893, 0.0
        %v917 = vsel %vm909, %v878, 0.0
        %v918 = vsel %vm910, %v894, 0.0
        %v919 = vsel %vm909, %v879, 0.0
        %v920 = vsel %vm910, %v895, 0.0
        %v921 = vsel %vm909, %v880, 0.0
        %v922 = vsel %vm910, %v896, 0.0
        %v923 = vsel %vm909, %v881, 0.0
        %v924 = vsel %vm910, %v897, 0.0
        %v925 = vsel %vm909, %v882, 0.0
        %v926 = vsel %vm910, %v898, 0.0
        %v927 = vsel %vm909, %v883, 0.0
        %v928 = vsel %vm910, %v899, 0.0
        %v929 = vsel %vm909, %v884, 0.0
        %v930 = vsel %vm910, %v900, 0.0
        %v931 = vsel %vm909, %v885, 0.0
        %v932 = vsel %vm910, %v901, 0.0
        %v933 = vsel %vm909, %v886, 0.0
        %v934 = vsel %vm910, %v902, 0.0
        %v935 = vsel %vm909, %v887, 0.0
        %v936 = vsel %vm910, %v903, 0.0
        %v937 = vsel %vm909, %v888, 0.0
        %v938 = vsel %vm910, %v904, 0.0
        %v939 = vsel %vm909, %v889, 0.0
        %v940 = vsel %vm910, %v905, 0.0
        %v941 = vsel %vm909, %v890, 0.0
        %v942 = vsel %vm910, %v906, 0.0
        %v943 = vpack.c.bf16 %v809, %v808
        %v944 = vpack.c.bf16 %v811, %v810
        %v945 = vpack.c.bf16 %v813, %v812
        %v946 = vpack.c.bf16 %v815, %v814
        %v947 = vpack.c.bf16 %v817, %v816
        %v948 = vpack.c.bf16 %v819, %v818
        %v949 = vpack.c.bf16 %v821, %v820
        %v950 = vpack.c.bf16 %v823, %v822
        %v951 = vpack.c.bf16 %v825, %v824
        %v952 = vpack.c.bf16 %v827, %v826
        %v953 = vpack.c.bf16 %v829, %v828
        %v954 = vpack.c.bf16 %v831, %v830
        %v955 = vpack.c.bf16 %v833, %v832
        %v956 = vpack.c.bf16 %v835, %v834
        %v957 = vpack.c.bf16 %v837, %v836
        %v958 = vpack.c.bf16 %v839, %v838
        %v975 = vunpack.c.l.b16 %v943
        %v976 = vunpack.c.h.b16 %v943
        %v977 = vunpack.c.l.b16 %v944
        %v978 = vunpack.c.h.b16 %v944
        %v979 = vunpack.c.l.b16 %v945
        %v980 = vunpack.c.h.b16 %v945
        %v981 = vunpack.c.l.b16 %v946
        %v982 = vunpack.c.h.b16 %v946
        %v983 = vunpack.c.l.b16 %v947
        %v984 = vunpack.c.h.b16 %v947
        %v985 = vunpack.c.l.b16 %v948
        %v986 = vunpack.c.h.b16 %v948
        %v987 = vunpack.c.l.b16 %v949
        %v988 = vunpack.c.h.b16 %v949
        %v989 = vunpack.c.l.b16 %v950
        %v990 = vunpack.c.h.b16 %v950
        %v991 = vunpack.c.l.b16 %v951
        %v992 = vunpack.c.h.b16 %v951
        %v993 = vunpack.c.l.b16 %v952
        %v994 = vunpack.c.h.b16 %v952
        %v995 = vunpack.c.l.b16 %v953
        %v996 = vunpack.c.h.b16 %v953
        %v997 = vunpack.c.l.b16 %v954
        %v998 = vunpack.c.h.b16 %v954
        %v999 = vunpack.c.l.b16 %v955
        %v1000 = vunpack.c.h.b16 %v955
        %v1001 = vunpack.c.l.b16 %v956
        %v1002 = vunpack.c.h.b16 %v956
        %v1003 = vunpack.c.l.b16 %v957
        %v1004 = vunpack.c.h.b16 %v957
        %v1005 = vunpack.c.l.b16 %v958
        %v1006 = vunpack.c.h.b16 %v958
        %v1007 = vpack.c.b16 %v975, %v975
        %v1008 = vpack.c.b16 %v976, %v976
        %v1009 = vpack.c.b16 %v977, %v977
        %v1010 = vpack.c.b16 %v978, %v978
        %v1011 = vpack.c.b16 %v979, %v979
        %v1012 = vpack.c.b16 %v980, %v980
        %v1013 = vpack.c.b16 %v981, %v981
        %v1014 = vpack.c.b16 %v982, %v982
        %v1015 = vpack.c.b16 %v983, %v983
        %v1016 = vpack.c.b16 %v984, %v984
        %v1017 = vpack.c.b16 %v985, %v985
        %v1018 = vpack.c.b16 %v986, %v986
        %v1019 = vpack.c.b16 %v987, %v987
        %v1020 = vpack.c.b16 %v988, %v988
        %v1021 = vpack.c.b16 %v989, %v989
        %v1022 = vpack.c.b16 %v990, %v990
        %v1023 = vpack.c.b16 %v991, %v991
        %v1024 = vpack.c.b16 %v992, %v992
        %v1025 = vpack.c.b16 %v993, %v993
        %v1026 = vpack.c.b16 %v994, %v994
        %v1027 = vpack.c.b16 %v995, %v995
        %v1028 = vpack.c.b16 %v996, %v996
        %v1029 = vpack.c.b16 %v997, %v997
        %v1030 = vpack.c.b16 %v998, %v998
        %v1031 = vpack.c.b16 %v999, %v999
        %v1032 = vpack.c.b16 %v1000, %v1000
        %v1033 = vpack.c.b16 %v1001, %v1001
        %v1034 = vpack.c.b16 %v1002, %v1002
        %v1035 = vpack.c.b16 %v1003, %v1003
        %v1036 = vpack.c.b16 %v1004, %v1004
        %v1037 = vpack.c.b16 %v1005, %v1005
        %v1038 = vpack.c.b16 %v1006, %v1006
        %s1071 = scalar_lea.vmem [#allocation2], 24
        %1072 = vst [vmem:[%s1071] sm:$0xf] %v1007
        %1073 = vst [vmem:[%s1071 + $0xc] sm:$0xf] %v1008
        %1074 = vst [vmem:[%s1071 + $0x18] sm:$0xf] %v1009
        %1075 = vst [vmem:[%s1071 + $0x24] sm:$0xf] %v1010
        %1076 = vst [vmem:[%s1071 + $0x30] sm:$0xf] %v1011
        %1077 = vst [vmem:[%s1071 + $0x3c] sm:$0xf] %v1012
        %1078 = vst [vmem:[%s1071 + $0x48] sm:$0xf] %v1013
        %1079 = vst [vmem:[%s1071 + $0x54] sm:$0xf] %v1014
        %1080 = vst [vmem:[%s1071 + $0x60] sm:$0xf] %v1015
        %1081 = vst [vmem:[%s1071 + $0x6c] sm:$0xf] %v1016
        %1082 = vst [vmem:[%s1071 + $0x78] sm:$0xf] %v1017
        %1083 = vst [vmem:[%s1071 + $0x84] sm:$0xf] %v1018
        %1084 = vst [vmem:[%s1071 + $0x90] sm:$0xf] %v1019
        %1085 = vst [vmem:[%s1071 + $0x9c] sm:$0xf] %v1020
        %1086 = vst [vmem:[%s1071 + $0xa8] sm:$0xf] %v1021
        %1087 = vst [vmem:[%s1071 + $0xb4] sm:$0xf] %v1022
        %1088 = vst [vmem:[%s1071 + $0xc0] sm:$0xf] %v1023
        %1089 = vst [vmem:[%s1071 + $0xcc] sm:$0xf] %v1024
        %1090 = vst [vmem:[%s1071 + $0xd8] sm:$0xf] %v1025
        %1091 = vst [vmem:[%s1071 + $0xe4] sm:$0xf] %v1026
        %1092 = vst [vmem:[%s1071 + $0xf0] sm:$0xf] %v1027
        %1093 = vst [vmem:[%s1071 + $0xfc] sm:$0xf] %v1028
        %1094 = vst [vmem:[%s1071 + $0x108] sm:$0xf] %v1029
        %1095 = vst [vmem:[%s1071 + $0x114] sm:$0xf] %v1030
        %1096 = vst [vmem:[%s1071 + $0x120] sm:$0xf] %v1031
        %1097 = vst [vmem:[%s1071 + $0x12c] sm:$0xf] %v1032
        %1098 = vst [vmem:[%s1071 + $0x138] sm:$0xf] %v1033
        %1099 = vst [vmem:[%s1071 + $0x144] sm:$0xf] %v1034
        %1100 = vst [vmem:[%s1071 + $0x150] sm:$0xf] %v1035
        %1101 = vst [vmem:[%s1071 + $0x15c] sm:$0xf] %v1036
        %1102 = vst [vmem:[%s1071 + $0x168] sm:$0xf] %v1037
        %1103 = vst [vmem:[%s1071 + $0x174] sm:$0xf] %v1038
        %v1104 = vpack.c.bf16 %v703, %v702
        %v1105 = vpack.c.bf16 %v705, %v704
        %v1106 = vpack.c.bf16 %v707, %v706
        %v1107 = vpack.c.bf16 %v709, %v708
        %v1108 = vpack.c.bf16 %v711, %v710
        %v1109 = vpack.c.bf16 %v713, %v712
        %v1110 = vpack.c.bf16 %v715, %v714
        %v1111 = vpack.c.bf16 %v717, %v716
        %v1112 = vpack.c.bf16 %v719, %v718
        %v1113 = vpack.c.bf16 %v721, %v720
        %v1114 = vpack.c.bf16 %v723, %v722
        %v1115 = vpack.c.bf16 %v725, %v724
        %v1116 = vpack.c.bf16 %v727, %v726
        %v1117 = vpack.c.bf16 %v729, %v728
        %v1118 = vpack.c.bf16 %v731, %v730
        %v1119 = vpack.c.bf16 %v733, %v732
        %v1136 = vunpack.c.l.b16 %v1104
        %v1137 = vunpack.c.h.b16 %v1104
        %v1138 = vunpack.c.l.b16 %v1105
        %v1139 = vunpack.c.h.b16 %v1105
        %v1140 = vunpack.c.l.b16 %v1106
        %v1141 = vunpack.c.h.b16 %v1106
        %v1142 = vunpack.c.l.b16 %v1107
        %v1143 = vunpack.c.h.b16 %v1107
        %v1144 = vunpack.c.l.b16 %v1108
        %v1145 = vunpack.c.h.b16 %v1108
        %v1146 = vunpack.c.l.b16 %v1109
        %v1147 = vunpack.c.h.b16 %v1109
        %v1148 = vunpack.c.l.b16 %v1110
        %v1149 = vunpack.c.h.b16 %v1110
        %v1150 = vunpack.c.l.b16 %v1111
        %v1151 = vunpack.c.h.b16 %v1111
        %v1152 = vunpack.c.l.b16 %v1112
        %v1153 = vunpack.c.h.b16 %v1112
        %v1154 = vunpack.c.l.b16 %v1113
        %v1155 = vunpack.c.h.b16 %v1113
        %v1156 = vunpack.c.l.b16 %v1114
        %v1157 = vunpack.c.h.b16 %v1114
        %v1158 = vunpack.c.l.b16 %v1115
        %v1159 = vunpack.c.h.b16 %v1115
        %v1160 = vunpack.c.l.b16 %v1116
        %v1161 = vunpack.c.h.b16 %v1116
        %v1162 = vunpack.c.l.b16 %v1117
        %v1163 = vunpack.c.h.b16 %v1117
        %v1164 = vunpack.c.l.b16 %v1118
        %v1165 = vunpack.c.h.b16 %v1118
        %v1166 = vunpack.c.l.b16 %v1119
        %v1167 = vunpack.c.h.b16 %v1119
        %v1168 = vpack.c.b16 %v1136, %v1136
        %v1169 = vpack.c.b16 %v1137, %v1137
        %v1170 = vpack.c.b16 %v1138, %v1138
        %v1171 = vpack.c.b16 %v1139, %v1139
        %v1172 = vpack.c.b16 %v1140, %v1140
        %v1173 = vpack.c.b16 %v1141, %v1141
        %v1174 = vpack.c.b16 %v1142, %v1142
        %v1175 = vpack.c.b16 %v1143, %v1143
        %v1176 = vpack.c.b16 %v1144, %v1144
        %v1177 = vpack.c.b16 %v1145, %v1145
        %v1178 = vpack.c.b16 %v1146, %v1146
        %v1179 = vpack.c.b16 %v1147, %v1147
        %v1180 = vpack.c.b16 %v1148, %v1148
        %v1181 = vpack.c.b16 %v1149, %v1149
        %v1182 = vpack.c.b16 %v1150, %v1150
        %v1183 = vpack.c.b16 %v1151, %v1151
        %v1184 = vpack.c.b16 %v1152, %v1152
        %v1185 = vpack.c.b16 %v1153, %v1153
        %v1186 = vpack.c.b16 %v1154, %v1154
        %v1187 = vpack.c.b16 %v1155, %v1155
        %v1188 = vpack.c.b16 %v1156, %v1156
        %v1189 = vpack.c.b16 %v1157, %v1157
        %v1190 = vpack.c.b16 %v1158, %v1158
        %v1191 = vpack.c.b16 %v1159, %v1159
        %v1192 = vpack.c.b16 %v1160, %v1160
        %v1193 = vpack.c.b16 %v1161, %v1161
        %v1194 = vpack.c.b16 %v1162, %v1162
        %v1195 = vpack.c.b16 %v1163, %v1163
        %v1196 = vpack.c.b16 %v1164, %v1164
        %v1197 = vpack.c.b16 %v1165, %v1165
        %v1198 = vpack.c.b16 %v1166, %v1166
        %v1199 = vpack.c.b16 %v1167, %v1167
        %1232 = vst [vmem:[%s1071 + $0x4] sm:$0xf] %v1168
        %1233 = vst [vmem:[%s1071 + $0x10] sm:$0xf] %v1169
        %1234 = vst [vmem:[%s1071 + $0x1c] sm:$0xf] %v1170
        %1235 = vst [vmem:[%s1071 + $0x28] sm:$0xf] %v1171
        %1236 = vst [vmem:[%s1071 + $0x34] sm:$0xf] %v1172
        %1237 = vst [vmem:[%s1071 + $0x40] sm:$0xf] %v1173
        %1238 = vst [vmem:[%s1071 + $0x4c] sm:$0xf] %v1174
        %1239 = vst [vmem:[%s1071 + $0x58] sm:$0xf] %v1175
        %1240 = vst [vmem:[%s1071 + $0x64] sm:$0xf] %v1176
        %1241 = vst [vmem:[%s1071 + $0x70] sm:$0xf] %v1177
        %1242 = vst [vmem:[%s1071 + $0x7c] sm:$0xf] %v1178
        %1243 = vst [vmem:[%s1071 + $0x88] sm:$0xf] %v1179
        %1244 = vst [vmem:[%s1071 + $0x94] sm:$0xf] %v1180
        %1245 = vst [vmem:[%s1071 + $0xa0] sm:$0xf] %v1181
        %1246 = vst [vmem:[%s1071 + $0xac] sm:$0xf] %v1182
        %1247 = vst [vmem:[%s1071 + $0xb8] sm:$0xf] %v1183
        %1248 = vst [vmem:[%s1071 + $0xc4] sm:$0xf] %v1184
        %1249 = vst [vmem:[%s1071 + $0xd0] sm:$0xf] %v1185
        %1250 = vst [vmem:[%s1071 + $0xdc] sm:$0xf] %v1186
        %1251 = vst [vmem:[%s1071 + $0xe8] sm:$0xf] %v1187
        %1252 = vst [vmem:[%s1071 + $0xf4] sm:$0xf] %v1188
        %1253 = vst [vmem:[%s1071 + $0x100] sm:$0xf] %v1189
        %1254 = vst [vmem:[%s1071 + $0x10c] sm:$0xf] %v1190
        %1255 = vst [vmem:[%s1071 + $0x118] sm:$0xf] %v1191
        %1256 = vst [vmem:[%s1071 + $0x124] sm:$0xf] %v1192
        %1257 = vst [vmem:[%s1071 + $0x130] sm:$0xf] %v1193
        %1258 = vst [vmem:[%s1071 + $0x13c] sm:$0xf] %v1194
        %1259 = vst [vmem:[%s1071 + $0x148] sm:$0xf] %v1195
        %1260 = vst [vmem:[%s1071 + $0x154] sm:$0xf] %v1196
        %1261 = vst [vmem:[%s1071 + $0x160] sm:$0xf] %v1197
        %1262 = vst [vmem:[%s1071 + $0x16c] sm:$0xf] %v1198
        %1263 = vst [vmem:[%s1071 + $0x178] sm:$0xf] %v1199
        %v1264 = vpack.c.bf16 %v912, %v911
        %v1265 = vpack.c.bf16 %v914, %v913
        %v1266 = vpack.c.bf16 %v916, %v915
        %v1267 = vpack.c.bf16 %v918, %v917
        %v1268 = vpack.c.bf16 %v920, %v919
        %v1269 = vpack.c.bf16 %v922, %v921
        %v1270 = vpack.c.bf16 %v924, %v923
        %v1271 = vpack.c.bf16 %v926, %v925
        %v1272 = vpack.c.bf16 %v928, %v927
        %v1273 = vpack.c.bf16 %v930, %v929
        %v1274 = vpack.c.bf16 %v932, %v931
        %v1275 = vpack.c.bf16 %v934, %v933
        %v1276 = vpack.c.bf16 %v936, %v935
        %v1277 = vpack.c.bf16 %v938, %v937
        %v1278 = vpack.c.bf16 %v940, %v939
        %v1279 = vpack.c.bf16 %v942, %v941
        %v1296 = vunpack.c.l.b16 %v1264
        %v1297 = vunpack.c.h.b16 %v1264
        %v1298 = vunpack.c.l.b16 %v1265
        %v1299 = vunpack.c.h.b16 %v1265
        %v1300 = vunpack.c.l.b16 %v1266
        %v1301 = vunpack.c.h.b16 %v1266
        %v1302 = vunpack.c.l.b16 %v1267
        %v1303 = vunpack.c.h.b16 %v1267
        %v1304 = vunpack.c.l.b16 %v1268
        %v1305 = vunpack.c.h.b16 %v1268
        %v1306 = vunpack.c.l.b16 %v1269
        %v1307 = vunpack.c.h.b16 %v1269
        %v1308 = vunpack.c.l.b16 %v1270
        %v1309 = vunpack.c.h.b16 %v1270
        %v1310 = vunpack.c.l.b16 %v1271
        %v1311 = vunpack.c.h.b16 %v1271
        %v1312 = vunpack.c.l.b16 %v1272
        %v1313 = vunpack.c.h.b16 %v1272
        %v1314 = vunpack.c.l.b16 %v1273
        %v1315 = vunpack.c.h.b16 %v1273
        %v1316 = vunpack.c.l.b16 %v1274
        %v1317 = vunpack.c.h.b16 %v1274
        %v1318 = vunpack.c.l.b16 %v1275
        %v1319 = vunpack.c.h.b16 %v1275
        %v1320 = vunpack.c.l.b16 %v1276
        %v1321 = vunpack.c.h.b16 %v1276
        %v1322 = vunpack.c.l.b16 %v1277
        %v1323 = vunpack.c.h.b16 %v1277
        %v1324 = vunpack.c.l.b16 %v1278
        %v1325 = vunpack.c.h.b16 %v1278
        %v1326 = vunpack.c.l.b16 %v1279
        %v1327 = vunpack.c.h.b16 %v1279
        %v1328 = vpack.c.b16 %v1296, %v1296
        %v1329 = vpack.c.b16 %v1297, %v1297
        %v1330 = vpack.c.b16 %v1298, %v1298
        %v1331 = vpack.c.b16 %v1299, %v1299
        %v1332 = vpack.c.b16 %v1300, %v1300
        %v1333 = vpack.c.b16 %v1301, %v1301
        %v1334 = vpack.c.b16 %v1302, %v1302
        %v1335 = vpack.c.b16 %v1303, %v1303
        %v1336 = vpack.c.b16 %v1304, %v1304
        %v1337 = vpack.c.b16 %v1305, %v1305
        %v1338 = vpack.c.b16 %v1306, %v1306
        %v1339 = vpack.c.b16 %v1307, %v1307
        %v1340 = vpack.c.b16 %v1308, %v1308
        %v1341 = vpack.c.b16 %v1309, %v1309
        %v1342 = vpack.c.b16 %v1310, %v1310
        %v1343 = vpack.c.b16 %v1311, %v1311
        %v1344 = vpack.c.b16 %v1312, %v1312
        %v1345 = vpack.c.b16 %v1313, %v1313
        %v1346 = vpack.c.b16 %v1314, %v1314
        %v1347 = vpack.c.b16 %v1315, %v1315
        %v1348 = vpack.c.b16 %v1316, %v1316
        %v1349 = vpack.c.b16 %v1317, %v1317
        %v1350 = vpack.c.b16 %v1318, %v1318
        %v1351 = vpack.c.b16 %v1319, %v1319
        %v1352 = vpack.c.b16 %v1320, %v1320
        %v1353 = vpack.c.b16 %v1321, %v1321
        %v1354 = vpack.c.b16 %v1322, %v1322
        %v1355 = vpack.c.b16 %v1323, %v1323
        %v1356 = vpack.c.b16 %v1324, %v1324
        %v1357 = vpack.c.b16 %v1325, %v1325
        %v1358 = vpack.c.b16 %v1326, %v1326
        %v1359 = vpack.c.b16 %v1327, %v1327
        %1392 = vst [vmem:[%s1071 + $0x8] sm:$0xf] %v1328
        %1393 = vst [vmem:[%s1071 + $0x14] sm:$0xf] %v1329
        %1394 = vst [vmem:[%s1071 + $0x20] sm:$0xf] %v1330
        %1395 = vst [vmem:[%s1071 + $0x2c] sm:$0xf] %v1331
        %1396 = vst [vmem:[%s1071 + $0x38] sm:$0xf] %v1332
        %1397 = vst [vmem:[%s1071 + $0x44] sm:$0xf] %v1333
        %1398 = vst [vmem:[%s1071 + $0x50] sm:$0xf] %v1334
        %1399 = vst [vmem:[%s1071 + $0x5c] sm:$0xf] %v1335
        %1400 = vst [vmem:[%s1071 + $0x68] sm:$0xf] %v1336
        %1401 = vst [vmem:[%s1071 + $0x74] sm:$0xf] %v1337
        %1402 = vst [vmem:[%s1071 + $0x80] sm:$0xf] %v1338
        %1403 = vst [vmem:[%s1071 + $0x8c] sm:$0xf] %v1339
        %1404 = vst [vmem:[%s1071 + $0x98] sm:$0xf] %v1340
        %1405 = vst [vmem:[%s1071 + $0xa4] sm:$0xf] %v1341
        %1406 = vst [vmem:[%s1071 + $0xb0] sm:$0xf] %v1342
        %1407 = vst [vmem:[%s1071 + $0xbc] sm:$0xf] %v1343
        %1408 = vst [vmem:[%s1071 + $0xc8] sm:$0xf] %v1344
        %1409 = vst [vmem:[%s1071 + $0xd4] sm:$0xf] %v1345
        %1410 = vst [vmem:[%s1071 + $0xe0] sm:$0xf] %v1346
        %1411 = vst [vmem:[%s1071 + $0xec] sm:$0xf] %v1347
        %1412 = vst [vmem:[%s1071 + $0xf8] sm:$0xf] %v1348
        %1413 = vst [vmem:[%s1071 + $0x104] sm:$0xf] %v1349
        %1414 = vst [vmem:[%s1071 + $0x110] sm:$0xf] %v1350
        %1415 = vst [vmem:[%s1071 + $0x11c] sm:$0xf] %v1351
        %1416 = vst [vmem:[%s1071 + $0x128] sm:$0xf] %v1352
        %1417 = vst [vmem:[%s1071 + $0x134] sm:$0xf] %v1353
        %1418 = vst [vmem:[%s1071 + $0x140] sm:$0xf] %v1354
        %1419 = vst [vmem:[%s1071 + $0x14c] sm:$0xf] %v1355
        %1420 = vst [vmem:[%s1071 + $0x158] sm:$0xf] %v1356
        %1421 = vst [vmem:[%s1071 + $0x164] sm:$0xf] %v1357
        %1422 = vst [vmem:[%s1071 + $0x170] sm:$0xf] %v1358
        %1423 = vst [vmem:[%s1071 + $0x17c] sm:$0xf] %v1359
        %1424 = vst [vmem:[#allocation2] sm:$0xff] 0
        %1425 = vst [vmem:[#allocation2 + $0x8] sm:$0xf] 0
        %1426 = vst [vmem:[#allocation2 + $0xc] sm:$0xff] 0
        %1427 = vst [vmem:[#allocation2 + $0x14] sm:$0xf] 0
        %s1428 = scalar_lea.vmem [#allocation2], 408
        %1429 = vst [vmem:[%s1428] sm:$0xff] 0
        %1430 = vst [vmem:[%s1428 + $0x8] sm:$0xf] 0
        %1431 = vst [vmem:[%s1428 + $0xc] sm:$0xff] 0
        %1432 = vst [vmem:[%s1428 + $0x14] sm:$0xf] 0
        %v1433 = vld [vmem:[#allocation2] sm:$0xff]
        %v1434 = vld [vmem:[#allocation2 + $0x8] sm:$0xf]
        %v1435 = vld [vmem:[#allocation2 + $0xc] sm:$0xff]
        %v1436 = vld [vmem:[#allocation2 + $0x14] sm:$0xf]
        %v1437 = vld [vmem:[#allocation2 + $0x18] sm:$0xff]
        %v1438 = vld [vmem:[#allocation2 + $0x20] sm:$0xf]
        %v1439 = vld [vmem:[#allocation2 + $0x24] sm:$0xff]
        %v1440 = vld [vmem:[#allocation2 + $0x2c] sm:$0xf]
        %v1441 = vld [vmem:[#allocation2 + $0x30] sm:$0xff]
        %v1442 = vld [vmem:[#allocation2 + $0x38] sm:$0xf]
        %v1443 = vld [vmem:[#allocation2 + $0x3c] sm:$0xff]
        %v1444 = vld [vmem:[#allocation2 + $0x44] sm:$0xf]
        %v1445 = vld [vmem:[#allocation2 + $0x48] sm:$0xff]
        %v1446 = vld [vmem:[#allocation2 + $0x50] sm:$0xf]
        %v1447 = vld [vmem:[#allocation2 + $0x54] sm:$0xff]
        %v1448 = vld [vmem:[#allocation2 + $0x5c] sm:$0xf]
        %v1449 = vld [vmem:[#allocation2 + $0x60] sm:$0xff]
        %v1450 = vld [vmem:[#allocation2 + $0x68] sm:$0xf]
        %v1451 = vld [vmem:[#allocation2 + $0x6c] sm:$0xff]
        %v1452 = vld [vmem:[#allocation2 + $0x74] sm:$0xf]
        %v1453 = vld [vmem:[#allocation2 + $0x78] sm:$0xff]
        %v1454 = vld [vmem:[#allocation2 + $0x80] sm:$0xf]
        %v1455 = vld [vmem:[#allocation2 + $0x84] sm:$0xff]
        %v1456 = vld [vmem:[#allocation2 + $0x8c] sm:$0xf]
        %v1457 = vld [vmem:[#allocation2 + $0x90] sm:$0xff]
        %v1458 = vld [vmem:[#allocation2 + $0x98] sm:$0xf]
        %v1459 = vld [vmem:[#allocation2 + $0x9c] sm:$0xff]
        %v1460 = vld [vmem:[#allocation2 + $0xa4] sm:$0xf]
        %v1461 = vld [vmem:[#allocation2 + $0xa8] sm:$0xff]
        %v1462 = vld [vmem:[#allocation2 + $0xb0] sm:$0xf]
        %v1463 = vld [vmem:[#allocation2 + $0xb4] sm:$0xff]
        %v1464 = vld [vmem:[#allocation2 + $0xbc] sm:$0xf]
        %v1465 = vld [vmem:[#allocation2 + $0xc0] sm:$0xff]
        %v1466 = vld [vmem:[#allocation2 + $0xc8] sm:$0xf]
        %v1467 = vld [vmem:[#allocation2 + $0xcc] sm:$0xff]
        %v1468 = vld [vmem:[#allocation2 + $0xd4] sm:$0xf]
        %v1469 = vld [vmem:[#allocation2 + $0xd8] sm:$0xff]
        %v1470 = vld [vmem:[#allocation2 + $0xe0] sm:$0xf]
        %v1471 = vld [vmem:[#allocation2 + $0xe4] sm:$0xff]
        %v1472 = vld [vmem:[#allocation2 + $0xec] sm:$0xf]
        %v1473 = vld [vmem:[#allocation2 + $0xf0] sm:$0xff]
        %v1474 = vld [vmem:[#allocation2 + $0xf8] sm:$0xf]
        %v1475 = vld [vmem:[#allocation2 + $0xfc] sm:$0xff]
        %v1476 = vld [vmem:[#allocation2 + $0x104] sm:$0xf]
        %v1477 = vld [vmem:[#allocation2 + $0x108] sm:$0xff]
        %v1478 = vld [vmem:[#allocation2 + $0x110] sm:$0xf]
        %v1479 = vld [vmem:[#allocation2 + $0x114] sm:$0xff]
        %v1480 = vld [vmem:[#allocation2 + $0x11c] sm:$0xf]
        %v1481 = vld [vmem:[#allocation2 + $0x120] sm:$0xff]
        %v1482 = vld [vmem:[#allocation2 + $0x128] sm:$0xf]
        %v1483 = vld [vmem:[#allocation2 + $0x12c] sm:$0xff]
        %v1484 = vld [vmem:[#allocation2 + $0x134] sm:$0xf]
        %v1485 = vld [vmem:[#allocation2 + $0x138] sm:$0xff]
        %v1486 = vld [vmem:[#allocation2 + $0x140] sm:$0xf]
        %v1487 = vld [vmem:[#allocation2 + $0x144] sm:$0xff]
        %v1488 = vld [vmem:[#allocation2 + $0x14c] sm:$0xf]
        %v1489 = vld [vmem:[#allocation2 + $0x150] sm:$0xff]
        %v1490 = vld [vmem:[#allocation2 + $0x158] sm:$0xf]
        %v1491 = vld [vmem:[#allocation2 + $0x15c] sm:$0xff]
        %v1492 = vld [vmem:[#allocation2 + $0x164] sm:$0xf]
        %v1493 = vld [vmem:[#allocation2 + $0x168] sm:$0xff]
        %v1494 = vld [vmem:[#allocation2 + $0x170] sm:$0xf]
        %v1495 = vld [vmem:[#allocation2 + $0x174] sm:$0xff]
        %v1496 = vld [vmem:[#allocation2 + $0x17c] sm:$0xf]
        %v1497 = vld [vmem:[#allocation8] sm:$0xf]
        %v1498 = vld [vmem:[#allocation8 + $0x4] sm:$0xf]
        %v1499 = vld [vmem:[#allocation8 + $0x8] sm:$0xf]
        %v1500 = vld [vmem:[#allocation8 + $0xc] sm:$0xf]
        %v1501 = vld [vmem:[#allocation8 + $0x10] sm:$0xf]
        %v1502 = vld [vmem:[#allocation8 + $0x14] sm:$0xf]
        %v1503 = vld [vmem:[#allocation8 + $0x18] sm:$0xf]
        %v1504 = vld [vmem:[#allocation8 + $0x1c] sm:$0xf]
        %v1505 = vld [vmem:[#allocation8 + $0x20] sm:$0xf]
        %v1506 = vld [vmem:[#allocation8 + $0x24] sm:$0xf]
        %v1507 = vld [vmem:[#allocation8 + $0x28] sm:$0xf]
        %v1508 = vld [vmem:[#allocation8 + $0x2c] sm:$0xf]
        %v1509 = vld [vmem:[#allocation8 + $0x30] sm:$0xf]
        %v1510 = vld [vmem:[#allocation8 + $0x34] sm:$0xf]
        %v1511 = vld [vmem:[#allocation8 + $0x38] sm:$0xf]
        %v1512 = vld [vmem:[#allocation8 + $0x3c] sm:$0xf]
        %v1513 = vld [vmem:[#allocation8 + $0x40] sm:$0xf]
        %v1514 = vld [vmem:[#allocation8 + $0x44] sm:$0xf]
        %v1515 = vld [vmem:[#allocation8 + $0x48] sm:$0xf]
        %v1516 = vld [vmem:[#allocation8 + $0x4c] sm:$0xf]
        %v1517 = vld [vmem:[#allocation8 + $0x50] sm:$0xf]
        %v1518 = vld [vmem:[#allocation8 + $0x54] sm:$0xf]
        %v1519 = vld [vmem:[#allocation8 + $0x58] sm:$0xf]
        %v1520 = vld [vmem:[#allocation8 + $0x5c] sm:$0xf]
        %v1521 = vld [vmem:[#allocation8 + $0x60] sm:$0xf]
        %v1522 = vld [vmem:[#allocation8 + $0x64] sm:$0xf]
        %v1523 = vld [vmem:[#allocation8 + $0x68] sm:$0xf]
        %v1524 = vld [vmem:[#allocation8 + $0x6c] sm:$0xf]
        %v1525 = vld [vmem:[#allocation8 + $0x70] sm:$0xf]
        %v1526 = vld [vmem:[#allocation8 + $0x74] sm:$0xf]
        %v1527 = vld [vmem:[#allocation8 + $0x78] sm:$0xf]
        %v1528 = vld [vmem:[#allocation8 + $0x7c] sm:$0xf]
        %v1529 = vld [vmem:[#allocation8 + $0x80] sm:$0xf]
        %v1530 = vld [vmem:[#allocation8 + $0x84] sm:$0xf]
        %v1531 = vld [vmem:[#allocation8 + $0x88] sm:$0xf]
        %v1532 = vld [vmem:[#allocation8 + $0x8c] sm:$0xf]
        %v1533 = vld [vmem:[#allocation8 + $0x90] sm:$0xf]
        %v1534 = vld [vmem:[#allocation8 + $0x94] sm:$0xf]
        %v1535 = vld [vmem:[#allocation8 + $0x98] sm:$0xf]
        %v1536 = vld [vmem:[#allocation8 + $0x9c] sm:$0xf]
        %v1537 = vld [vmem:[#allocation8 + $0xa0] sm:$0xf]
        %v1538 = vld [vmem:[#allocation8 + $0xa4] sm:$0xf]
        %v1539 = vld [vmem:[#allocation8 + $0xa8] sm:$0xf]
        %v1540 = vld [vmem:[#allocation8 + $0xac] sm:$0xf]
        %v1541 = vld [vmem:[#allocation8 + $0xb0] sm:$0xf]
        %v1542 = vld [vmem:[#allocation8 + $0xb4] sm:$0xf]
        %v1543 = vld [vmem:[#allocation8 + $0xb8] sm:$0xf]
        %v1544 = vld [vmem:[#allocation8 + $0xbc] sm:$0xf]
        %v1545 = vld [vmem:[%s1071] sm:$0xff]
        %v1546 = vld [vmem:[%s1071 + $0x8] sm:$0xf]
        %v1547 = vld [vmem:[%s1071 + $0xc] sm:$0xff]
        %v1548 = vld [vmem:[%s1071 + $0x14] sm:$0xf]
        %v1549 = vld [vmem:[%s1071 + $0x18] sm:$0xff]
        %v1550 = vld [vmem:[%s1071 + $0x20] sm:$0xf]
        %v1551 = vld [vmem:[%s1071 + $0x24] sm:$0xff]
        %v1552 = vld [vmem:[%s1071 + $0x2c] sm:$0xf]
        %v1553 = vld [vmem:[%s1071 + $0x30] sm:$0xff]
        %v1554 = vld [vmem:[%s1071 + $0x38] sm:$0xf]
        %v1555 = vld [vmem:[%s1071 + $0x3c] sm:$0xff]
        %v1556 = vld [vmem:[%s1071 + $0x44] sm:$0xf]
        %v1557 = vld [vmem:[%s1071 + $0x48] sm:$0xff]
        %v1558 = vld [vmem:[%s1071 + $0x50] sm:$0xf]
        %v1559 = vld [vmem:[%s1071 + $0x54] sm:$0xff]
        %v1560 = vld [vmem:[%s1071 + $0x5c] sm:$0xf]
        %v1561 = vld [vmem:[%s1071 + $0x60] sm:$0xff]
        %v1562 = vld [vmem:[%s1071 + $0x68] sm:$0xf]
        %v1563 = vld [vmem:[%s1071 + $0x6c] sm:$0xff]
        %v1564 = vld [vmem:[%s1071 + $0x74] sm:$0xf]
        %v1565 = vld [vmem:[%s1071 + $0x78] sm:$0xff]
        %v1566 = vld [vmem:[%s1071 + $0x80] sm:$0xf]
        %v1567 = vld [vmem:[%s1071 + $0x84] sm:$0xff]
        %v1568 = vld [vmem:[%s1071 + $0x8c] sm:$0xf]
        %v1569 = vld [vmem:[%s1071 + $0x90] sm:$0xff]
        %v1570 = vld [vmem:[%s1071 + $0x98] sm:$0xf]
        %v1571 = vld [vmem:[%s1071 + $0x9c] sm:$0xff]
        %v1572 = vld [vmem:[%s1071 + $0xa4] sm:$0xf]
        %v1573 = vld [vmem:[%s1071 + $0xa8] sm:$0xff]
        %v1574 = vld [vmem:[%s1071 + $0xb0] sm:$0xf]
        %v1575 = vld [vmem:[%s1071 + $0xb4] sm:$0xff]
        %v1576 = vld [vmem:[%s1071 + $0xbc] sm:$0xf]
        %v1577 = vld [vmem:[%s1071 + $0xc0] sm:$0xff]
        %v1578 = vld [vmem:[%s1071 + $0xc8] sm:$0xf]
        %v1579 = vld [vmem:[%s1071 + $0xcc] sm:$0xff]
        %v1580 = vld [vmem:[%s1071 + $0xd4] sm:$0xf]
        %v1581 = vld [vmem:[%s1071 + $0xd8] sm:$0xff]
        %v1582 = vld [vmem:[%s1071 + $0xe0] sm:$0xf]
        %v1583 = vld [vmem:[%s1071 + $0xe4] sm:$0xff]
        %v1584 = vld [vmem:[%s1071 + $0xec] sm:$0xf]
        %v1585 = vld [vmem:[%s1071 + $0xf0] sm:$0xff]
        %v1586 = vld [vmem:[%s1071 + $0xf8] sm:$0xf]
        %v1587 = vld [vmem:[%s1071 + $0xfc] sm:$0xff]
        %v1588 = vld [vmem:[%s1071 + $0x104] sm:$0xf]
        %v1589 = vld [vmem:[%s1071 + $0x108] sm:$0xff]
        %v1590 = vld [vmem:[%s1071 + $0x110] sm:$0xf]
        %v1591 = vld [vmem:[%s1071 + $0x114] sm:$0xff]
        %v1592 = vld [vmem:[%s1071 + $0x11c] sm:$0xf]
        %v1593 = vld [vmem:[%s1071 + $0x120] sm:$0xff]
        %v1594 = vld [vmem:[%s1071 + $0x128] sm:$0xf]
        %v1595 = vld [vmem:[%s1071 + $0x12c] sm:$0xff]
        %v1596 = vld [vmem:[%s1071 + $0x134] sm:$0xf]
        %v1597 = vld [vmem:[%s1071 + $0x138] sm:$0xff]
        %v1598 = vld [vmem:[%s1071 + $0x140] sm:$0xf]
        %v1599 = vld [vmem:[%s1071 + $0x144] sm:$0xff]
        %v1600 = vld [vmem:[%s1071 + $0x14c] sm:$0xf]
        %v1601 = vld [vmem:[%s1071 + $0x150] sm:$0xff]
        %v1602 = vld [vmem:[%s1071 + $0x158] sm:$0xf]
        %v1603 = vld [vmem:[%s1071 + $0x15c] sm:$0xff]
        %v1604 = vld [vmem:[%s1071 + $0x164] sm:$0xf]
        %v1605 = vld [vmem:[%s1071 + $0x168] sm:$0xff]
        %v1606 = vld [vmem:[%s1071 + $0x170] sm:$0xf]
        %v1607 = vld [vmem:[%s1071 + $0x174] sm:$0xff]
        %v1608 = vld [vmem:[%s1071 + $0x17c] sm:$0xf]
        %s1609 = scalar_lea.vmem [#allocation8], 192
        %v1610 = vld [vmem:[%s1609] sm:$0xf]
        %v1611 = vld [vmem:[%s1609 + $0x4] sm:$0xf]
        %v1612 = vld [vmem:[%s1609 + $0x8] sm:$0xf]
        %v1613 = vld [vmem:[%s1609 + $0xc] sm:$0xf]
        %v1614 = vld [vmem:[%s1609 + $0x10] sm:$0xf]
        %v1615 = vld [vmem:[%s1609 + $0x14] sm:$0xf]
        %v1616 = vld [vmem:[%s1609 + $0x18] sm:$0xf]
        %v1617 = vld [vmem:[%s1609 + $0x1c] sm:$0xf]
        %v1618 = vld [vmem:[%s1609 + $0x20] sm:$0xf]
        %v1619 = vld [vmem:[%s1609 + $0x24] sm:$0xf]
        %v1620 = vld [vmem:[%s1609 + $0x28] sm:$0xf]
        %v1621 = vld [vmem:[%s1609 + $0x2c] sm:$0xf]
        %v1622 = vld [vmem:[%s1609 + $0x30] sm:$0xf]
        %v1623 = vld [vmem:[%s1609 + $0x34] sm:$0xf]
        %v1624 = vld [vmem:[%s1609 + $0x38] sm:$0xf]
        %v1625 = vld [vmem:[%s1609 + $0x3c] sm:$0xf]
        %v1626 = vld [vmem:[%s1609 + $0x40] sm:$0xf]
        %v1627 = vld [vmem:[%s1609 + $0x44] sm:$0xf]
        %v1628 = vld [vmem:[%s1609 + $0x48] sm:$0xf]
        %v1629 = vld [vmem:[%s1609 + $0x4c] sm:$0xf]
        %v1630 = vld [vmem:[%s1609 + $0x50] sm:$0xf]
        %v1631 = vld [vmem:[%s1609 + $0x54] sm:$0xf]
        %v1632 = vld [vmem:[%s1609 + $0x58] sm:$0xf]
        %v1633 = vld [vmem:[%s1609 + $0x5c] sm:$0xf]
        %v1634 = vld [vmem:[%s1609 + $0x60] sm:$0xf]
        %v1635 = vld [vmem:[%s1609 + $0x64] sm:$0xf]
        %v1636 = vld [vmem:[%s1609 + $0x68] sm:$0xf]
        %v1637 = vld [vmem:[%s1609 + $0x6c] sm:$0xf]
        %v1638 = vld [vmem:[%s1609 + $0x70] sm:$0xf]
        %v1639 = vld [vmem:[%s1609 + $0x74] sm:$0xf]
        %v1640 = vld [vmem:[%s1609 + $0x78] sm:$0xf]
        %v1641 = vld [vmem:[%s1609 + $0x7c] sm:$0xf]
        %v1642 = vld [vmem:[%s1609 + $0x80] sm:$0xf]
        %v1643 = vld [vmem:[%s1609 + $0x84] sm:$0xf]
        %v1644 = vld [vmem:[%s1609 + $0x88] sm:$0xf]
        %v1645 = vld [vmem:[%s1609 + $0x8c] sm:$0xf]
        %v1646 = vld [vmem:[%s1609 + $0x90] sm:$0xf]
        %v1647 = vld [vmem:[%s1609 + $0x94] sm:$0xf]
        %v1648 = vld [vmem:[%s1609 + $0x98] sm:$0xf]
        %v1649 = vld [vmem:[%s1609 + $0x9c] sm:$0xf]
        %v1650 = vld [vmem:[%s1609 + $0xa0] sm:$0xf]
        %v1651 = vld [vmem:[%s1609 + $0xa4] sm:$0xf]
        %v1652 = vld [vmem:[%s1609 + $0xa8] sm:$0xf]
        %v1653 = vld [vmem:[%s1609 + $0xac] sm:$0xf]
        %v1654 = vld [vmem:[%s1609 + $0xb0] sm:$0xf]
        %v1655 = vld [vmem:[%s1609 + $0xb4] sm:$0xf]
        %v1656 = vld [vmem:[%s1609 + $0xb8] sm:$0xf]
        %v1657 = vld [vmem:[%s1609 + $0xbc] sm:$0xf]
        %v1722 = vunpack.c.l.b16 %v1545
        %v1723 = vunpack.c.h.b16 %v1545
        %v1724 = vunpack.c.l.b16 %v1546
        %v1725 = vunpack.c.l.b16 %v1547
        %v1726 = vunpack.c.h.b16 %v1547
        %v1727 = vunpack.c.l.b16 %v1548
        %v1728 = vunpack.c.l.b16 %v1549
        %v1729 = vunpack.c.h.b16 %v1549
        %v1730 = vunpack.c.l.b16 %v1550
        %v1731 = vunpack.c.l.b16 %v1551
        %v1732 = vunpack.c.h.b16 %v1551
        %v1733 = vunpack.c.l.b16 %v1552
        %v1734 = vunpack.c.l.b16 %v1553
        %v1735 = vunpack.c.h.b16 %v1553
        %v1736 = vunpack.c.l.b16 %v1554
        %v1737 = vunpack.c.l.b16 %v1555
        %v1738 = vunpack.c.h.b16 %v1555
        %v1739 = vunpack.c.l.b16 %v1556
        %v1740 = vunpack.c.l.b16 %v1557
        %v1741 = vunpack.c.h.b16 %v1557
        %v1742 = vunpack.c.l.b16 %v1558
        %v1743 = vunpack.c.l.b16 %v1559
        %v1744 = vunpack.c.h.b16 %v1559
        %v1745 = vunpack.c.l.b16 %v1560
        %v1746 = vunpack.c.l.b16 %v1561
        %v1747 = vunpack.c.h.b16 %v1561
        %v1748 = vunpack.c.l.b16 %v1562
        %v1749 = vunpack.c.l.b16 %v1563
        %v1750 = vunpack.c.h.b16 %v1563
        %v1751 = vunpack.c.l.b16 %v1564
        %v1752 = vunpack.c.l.b16 %v1565
        %v1753 = vunpack.c.h.b16 %v1565
        %v1754 = vunpack.c.l.b16 %v1566
        %v1755 = vunpack.c.l.b16 %v1567
        %v1756 = vunpack.c.h.b16 %v1567
        %v1757 = vunpack.c.l.b16 %v1568
        %v1758 = vunpack.c.l.b16 %v1569
        %v1759 = vunpack.c.h.b16 %v1569
        %v1760 = vunpack.c.l.b16 %v1570
        %v1761 = vunpack.c.l.b16 %v1571
        %v1762 = vunpack.c.h.b16 %v1571
        %v1763 = vunpack.c.l.b16 %v1572
        %v1764 = vunpack.c.l.b16 %v1573
        %v1765 = vunpack.c.h.b16 %v1573
        %v1766 = vunpack.c.l.b16 %v1574
        %v1767 = vunpack.c.l.b16 %v1575
        %v1768 = vunpack.c.h.b16 %v1575
        %v1769 = vunpack.c.l.b16 %v1576
        %v1770 = vunpack.c.l.b16 %v1577
        %v1771 = vunpack.c.h.b16 %v1577
        %v1772 = vunpack.c.l.b16 %v1578
        %v1773 = vunpack.c.l.b16 %v1579
        %v1774 = vunpack.c.h.b16 %v1579
        %v1775 = vunpack.c.l.b16 %v1580
        %v1776 = vunpack.c.l.b16 %v1581
        %v1777 = vunpack.c.h.b16 %v1581
        %v1778 = vunpack.c.l.b16 %v1582
        %v1779 = vunpack.c.l.b16 %v1583
        %v1780 = vunpack.c.h.b16 %v1583
        %v1781 = vunpack.c.l.b16 %v1584
        %v1782 = vunpack.c.l.b16 %v1585
        %v1783 = vunpack.c.h.b16 %v1585
        %v1784 = vunpack.c.l.b16 %v1586
        %v1785 = vunpack.c.l.b16 %v1587
        %v1786 = vunpack.c.h.b16 %v1587
        %v1787 = vunpack.c.l.b16 %v1588
        %v1788 = vunpack.c.l.b16 %v1589
        %v1789 = vunpack.c.h.b16 %v1589
        %v1790 = vunpack.c.l.b16 %v1590
        %v1791 = vunpack.c.l.b16 %v1591
        %v1792 = vunpack.c.h.b16 %v1591
        %v1793 = vunpack.c.l.b16 %v1592
        %v1794 = vunpack.c.l.b16 %v1593
        %v1795 = vunpack.c.h.b16 %v1593
        %v1796 = vunpack.c.l.b16 %v1594
        %v1797 = vunpack.c.l.b16 %v1595
        %v1798 = vunpack.c.h.b16 %v1595
        %v1799 = vunpack.c.l.b16 %v1596
        %v1800 = vunpack.c.l.b16 %v1597
        %v1801 = vunpack.c.h.b16 %v1597
        %v1802 = vunpack.c.l.b16 %v1598
        %v1803 = vunpack.c.l.b16 %v1599
        %v1804 = vunpack.c.h.b16 %v1599
        %v1805 = vunpack.c.l.b16 %v1600
        %v1806 = vunpack.c.l.b16 %v1601
        %v1807 = vunpack.c.h.b16 %v1601
        %v1808 = vunpack.c.l.b16 %v1602
        %v1809 = vunpack.c.l.b16 %v1603
        %v1810 = vunpack.c.h.b16 %v1603
        %v1811 = vunpack.c.l.b16 %v1604
        %v1812 = vunpack.c.l.b16 %v1605
        %v1813 = vunpack.c.h.b16 %v1605
        %v1814 = vunpack.c.l.b16 %v1606
        %v1815 = vunpack.c.l.b16 %v1607
        %v1816 = vunpack.c.h.b16 %v1607
        %v1817 = vunpack.c.l.b16 %v1608
        %v1818 = vpack.c.b16 %v1725, %v1722
        %v1819 = vpack.c.b16 %v1726, %v1723
        %v1820 = vpack.c.b16 %v1727, %v1724
        %v1821 = vpack.c.b16 %v1731, %v1728
        %v1822 = vpack.c.b16 %v1732, %v1729
        %v1823 = vpack.c.b16 %v1733, %v1730
        %v1824 = vpack.c.b16 %v1737, %v1734
        %v1825 = vpack.c.b16 %v1738, %v1735
        %v1826 = vpack.c.b16 %v1739, %v1736
        %v1827 = vpack.c.b16 %v1743, %v1740
        %v1828 = vpack.c.b16 %v1744, %v1741
        %v1829 = vpack.c.b16 %v1745, %v1742
        %v1830 = vpack.c.b16 %v1749, %v1746
        %v1831 = vpack.c.b16 %v1750, %v1747
        %v1832 = vpack.c.b16 %v1751, %v1748
        %v1833 = vpack.c.b16 %v1755, %v1752
        %v1834 = vpack.c.b16 %v1756, %v1753
        %v1835 = vpack.c.b16 %v1757, %v1754
        %v1836 = vpack.c.b16 %v1761, %v1758
        %v1837 = vpack.c.b16 %v1762, %v1759
        %v1838 = vpack.c.b16 %v1763, %v1760
        %v1839 = vpack.c.b16 %v1767, %v1764
        %v1840 = vpack.c.b16 %v1768, %v1765
        %v1841 = vpack.c.b16 %v1769, %v1766
        %v1842 = vpack.c.b16 %v1773, %v1770
        %v1843 = vpack.c.b16 %v1774, %v1771
        %v1844 = vpack.c.b16 %v1775, %v1772
        %v1845 = vpack.c.b16 %v1779, %v1776
        %v1846 = vpack.c.b16 %v1780, %v1777
        %v1847 = vpack.c.b16 %v1781, %v1778
        %v1848 = vpack.c.b16 %v1785, %v1782
        %v1849 = vpack.c.b16 %v1786, %v1783
        %v1850 = vpack.c.b16 %v1787, %v1784
        %v1851 = vpack.c.b16 %v1791, %v1788
        %v1852 = vpack.c.b16 %v1792, %v1789
        %v1853 = vpack.c.b16 %v1793, %v1790
        %v1854 = vpack.c.b16 %v1797, %v1794
        %v1855 = vpack.c.b16 %v1798, %v1795
        %v1856 = vpack.c.b16 %v1799, %v1796
        %v1857 = vpack.c.b16 %v1803, %v1800
        %v1858 = vpack.c.b16 %v1804, %v1801
        %v1859 = vpack.c.b16 %v1805, %v1802
        %v1860 = vpack.c.b16 %v1809, %v1806
        %v1861 = vpack.c.b16 %v1810, %v1807
        %v1862 = vpack.c.b16 %v1811, %v1808
        %v1863 = vpack.c.b16 %v1815, %v1812
        %v1864 = vpack.c.b16 %v1816, %v1813
        %v1865 = vpack.c.b16 %v1817, %v1814
        %v1962 = vunpack.c.l.b16 %v1610
        %v1963 = vunpack.c.l.b16 %v1611
        %v1964 = vunpack.c.l.b16 %v1612
        %v1965 = vunpack.c.l.b16 %v1613
        %v1966 = vunpack.c.l.b16 %v1614
        %v1967 = vunpack.c.l.b16 %v1615
        %v1968 = vunpack.c.l.b16 %v1616
        %v1969 = vunpack.c.l.b16 %v1617
        %v1970 = vunpack.c.l.b16 %v1618
        %v1971 = vunpack.c.l.b16 %v1619
        %v1972 = vunpack.c.l.b16 %v1620
        %v1973 = vunpack.c.l.b16 %v1621
        %v1974 = vunpack.c.l.b16 %v1622
        %v1975 = vunpack.c.l.b16 %v1623
        %v1976 = vunpack.c.l.b16 %v1624
        %v1977 = vunpack.c.l.b16 %v1625
        %v1978 = vunpack.c.l.b16 %v1626
        %v1979 = vunpack.c.l.b16 %v1627
        %v1980 = vunpack.c.l.b16 %v1628
        %v1981 = vunpack.c.l.b16 %v1629
        %v1982 = vunpack.c.l.b16 %v1630
        %v1983 = vunpack.c.l.b16 %v1631
        %v1984 = vunpack.c.l.b16 %v1632
        %v1985 = vunpack.c.l.b16 %v1633
        %v1986 = vunpack.c.l.b16 %v1634
        %v1987 = vunpack.c.l.b16 %v1635
        %v1988 = vunpack.c.l.b16 %v1636
        %v1989 = vunpack.c.l.b16 %v1637
        %v1990 = vunpack.c.l.b16 %v1638
        %v1991 = vunpack.c.l.b16 %v1639
        %v1992 = vunpack.c.l.b16 %v1640
        %v1993 = vunpack.c.l.b16 %v1641
        %v1994 = vunpack.c.l.b16 %v1642
        %v1995 = vunpack.c.l.b16 %v1643
        %v1996 = vunpack.c.l.b16 %v1644
        %v1997 = vunpack.c.l.b16 %v1645
        %v1998 = vunpack.c.l.b16 %v1646
        %v1999 = vunpack.c.l.b16 %v1647
        %v2000 = vunpack.c.l.b16 %v1648
        %v2001 = vunpack.c.l.b16 %v1649
        %v2002 = vunpack.c.l.b16 %v1650
        %v2003 = vunpack.c.l.b16 %v1651
        %v2004 = vunpack.c.l.b16 %v1652
        %v2005 = vunpack.c.l.b16 %v1653
        %v2006 = vunpack.c.l.b16 %v1654
        %v2007 = vunpack.c.l.b16 %v1655
        %v2008 = vunpack.c.l.b16 %v1656
        %v2009 = vunpack.c.l.b16 %v1657
        %v2010 = vpack.c.b16 %v1963, %v1962
        %v2011 = vpack.c.b16 %v1965, %v1964
        %v2012 = vpack.c.b16 %v1967, %v1966
        %v2013 = vpack.c.b16 %v1969, %v1968
        %v2014 = vpack.c.b16 %v1971, %v1970
        %v2015 = vpack.c.b16 %v1973, %v1972
        %v2016 = vpack.c.b16 %v1975, %v1974
        %v2017 = vpack.c.b16 %v1977, %v1976
        %v2018 = vpack.c.b16 %v1979, %v1978
        %v2019 = vpack.c.b16 %v1981, %v1980
        %v2020 = vpack.c.b16 %v1983, %v1982
        %v2021 = vpack.c.b16 %v1985, %v1984
        %v2022 = vpack.c.b16 %v1987, %v1986
        %v2023 = vpack.c.b16 %v1989, %v1988
        %v2024 = vpack.c.b16 %v1991, %v1990
        %v2025 = vpack.c.b16 %v1993, %v1992
        %v2026 = vpack.c.b16 %v1995, %v1994
        %v2027 = vpack.c.b16 %v1997, %v1996
        %v2028 = vpack.c.b16 %v1999, %v1998
        %v2029 = vpack.c.b16 %v2001, %v2000
        %v2030 = vpack.c.b16 %v2003, %v2002
        %v2031 = vpack.c.b16 %v2005, %v2004
        %v2032 = vpack.c.b16 %v2007, %v2006
        %v2033 = vpack.c.b16 %v2009, %v2008
        %2058 = vmatprep.subr.bf16.mxu0 0
        %2059 = vmatpush1.bf16.msra.mxu0 %v2017
        %2060 = vmatprep.subr.bf16.mxu0 0
        %2061 = vmatpush1.bf16.msra.mxu0 %v2016
        %2062 = vmatprep.subr.bf16.mxu0 0
        %2063 = vmatpush1.bf16.msra.mxu0 %v2015
        %2064 = vmatprep.subr.bf16.mxu0 0
        %2065 = vmatpush1.bf16.msra.mxu0 %v2014
        %2066 = vmatprep.subr.bf16.mxu0 0
        %2067 = vmatpush1.bf16.msra.mxu0 %v2013
        %2068 = vmatprep.subr.bf16.mxu0 0
        %2069 = vmatpush1.bf16.msra.mxu0 %v2012
        %2070 = vmatprep.subr.bf16.mxu0 0
        %2071 = vmatpush1.bf16.msra.mxu0 %v2011
        %2072 = vmatprep.subr.bf16.mxu0 0
        %2073 = vmatpush1.bf16.msra.mxu0 %v2010
        %2074 = vmatprep.subr.bf16.mxu0 0
        %2075 = vmatpush2.bf16.msra.mxu0 %v2025
        %2076 = vmatprep.subr.bf16.mxu0 0
        %2077 = vmatpush2.bf16.msra.mxu0 %v2024
        %2078 = vmatprep.subr.bf16.mxu0 0
        %2079 = vmatpush2.bf16.msra.mxu0 %v2023
        %2080 = vmatprep.subr.bf16.mxu0 0
        %2081 = vmatpush2.bf16.msra.mxu0 %v2022
        %2082 = vmatprep.subr.bf16.mxu0 0
        %2083 = vmatpush2.bf16.msra.mxu0 %v2021
        %2084 = vmatprep.subr.bf16.mxu0 0
        %2085 = vmatpush2.bf16.msra.mxu0 %v2020
        %2086 = vmatprep.subr.bf16.mxu0 0
        %2087 = vmatpush2.bf16.msra.mxu0 %v2019
        %2088 = vmatprep.subr.bf16.mxu0 0
        %2089 = vmatpush2.bf16.msra.mxu0 %v2018
        %2090 = vmatprep.mubr.bf16.mxu0 %v1819
        %2091 = vmatmul.mubr.bf16.gmra.mxu0 %v1818
        %v2092 = vpop.f32.mrf.mxu0
        %v2093 = vadd.f32 0.0, %v2092
        %v2094 = vpop.f32.mrf.mxu0
        %v2095 = vpop.f32.mrf.mxu0
        %v2096 = vadd.f32 0.0, %v2095
        %v2097 = vpop.f32.mrf.mxu0
        %2098 = vmatprep.mubr.bf16.mxu0 %v1822
        %2099 = vmatmul.mubr.bf16.gmra.mxu0 %v1821
        %v2100 = vpop.f32.mrf.mxu0
        %v2101 = vadd.f32 0.0, %v2100
        %v2102 = vpop.f32.mrf.mxu0
        %v2103 = vpop.f32.mrf.mxu0
        %v2104 = vadd.f32 0.0, %v2103
        %v2105 = vpop.f32.mrf.mxu0
        %2106 = vmatprep.mubr.bf16.mxu0 %v1825
        %2107 = vmatmul.mubr.bf16.gmra.mxu0 %v1824
        %v2108 = vpop.f32.mrf.mxu0
        %v2109 = vadd.f32 0.0, %v2108
        %v2110 = vpop.f32.mrf.mxu0
        %v2111 = vpop.f32.mrf.mxu0
        %v2112 = vadd.f32 0.0, %v2111
        %v2113 = vpop.f32.mrf.mxu0
        %2114 = vmatprep.mubr.bf16.mxu0 %v1828
        %2115 = vmatmul.mubr.bf16.gmra.mxu0 %v1827
        %v2116 = vpop.f32.mrf.mxu0
        %v2117 = vadd.f32 0.0, %v2116
        %v2118 = vpop.f32.mrf.mxu0
        %v2119 = vpop.f32.mrf.mxu0
        %v2120 = vadd.f32 0.0, %v2119
        %v2121 = vpop.f32.mrf.mxu0
        %2122 = vmatprep.mubr.bf16.mxu0 %v1831
        %2123 = vmatmul.mubr.bf16.gmra.mxu0 %v1830
        %v2124 = vpop.f32.mrf.mxu0
        %v2125 = vadd.f32 0.0, %v2124
        %v2126 = vpop.f32.mrf.mxu0
        %v2127 = vpop.f32.mrf.mxu0
        %v2128 = vadd.f32 0.0, %v2127
        %v2129 = vpop.f32.mrf.mxu0
        %2130 = vmatprep.mubr.bf16.mxu0 %v1834
        %2131 = vmatmul.mubr.bf16.gmra.mxu0 %v1833
        %v2132 = vpop.f32.mrf.mxu0
        %v2133 = vadd.f32 0.0, %v2132
        %v2134 = vpop.f32.mrf.mxu0
        %v2135 = vpop.f32.mrf.mxu0
        %v2136 = vadd.f32 0.0, %v2135
        %v2137 = vpop.f32.mrf.mxu0
        %2138 = vmatprep.mubr.bf16.mxu0 %v1837
        %2139 = vmatmul.mubr.bf16.gmra.mxu0 %v1836
        %v2140 = vpop.f32.mrf.mxu0
        %v2141 = vadd.f32 0.0, %v2140
        %v2142 = vpop.f32.mrf.mxu0
        %v2143 = vpop.f32.mrf.mxu0
        %v2144 = vadd.f32 0.0, %v2143
        %v2145 = vpop.f32.mrf.mxu0
        %2146 = vmatprep.mubr.bf16.mxu0 %v1840
        %2147 = vmatmul.mubr.bf16.gmra.mxu0 %v1839
        %v2148 = vpop.f32.mrf.mxu0
        %v2149 = vadd.f32 0.0, %v2148
        %v2150 = vpop.f32.mrf.mxu0
        %v2151 = vpop.f32.mrf.mxu0
        %v2152 = vadd.f32 0.0, %v2151
        %v2153 = vpop.f32.mrf.mxu0
        %2154 = vmatprep.mubr.bf16.mxu0 %v1843
        %2155 = vmatmul.mubr.bf16.gmra.mxu0 %v1842
        %v2156 = vpop.f32.mrf.mxu0
        %v2157 = vadd.f32 0.0, %v2156
        %v2158 = vpop.f32.mrf.mxu0
        %v2159 = vpop.f32.mrf.mxu0
        %v2160 = vadd.f32 0.0, %v2159
        %v2161 = vpop.f32.mrf.mxu0
        %2162 = vmatprep.mubr.bf16.mxu0 %v1846
        %2163 = vmatmul.mubr.bf16.gmra.mxu0 %v1845
        %v2164 = vpop.f32.mrf.mxu0
        %v2165 = vadd.f32 0.0, %v2164
        %v2166 = vpop.f32.mrf.mxu0
        %v2167 = vpop.f32.mrf.mxu0
        %v2168 = vadd.f32 0.0, %v2167
        %v2169 = vpop.f32.mrf.mxu0
        %2170 = vmatprep.mubr.bf16.mxu0 %v1849
        %2171 = vmatmul.mubr.bf16.gmra.mxu0 %v1848
        %v2172 = vpop.f32.mrf.mxu0
        %v2173 = vadd.f32 0.0, %v2172
        %v2174 = vpop.f32.mrf.mxu0
        %v2175 = vpop.f32.mrf.mxu0
        %v2176 = vadd.f32 0.0, %v2175
        %v2177 = vpop.f32.mrf.mxu0
        %2178 = vmatprep.mubr.bf16.mxu0 %v1852
        %2179 = vmatmul.mubr.bf16.gmra.mxu0 %v1851
        %v2180 = vpop.f32.mrf.mxu0
        %v2181 = vadd.f32 0.0, %v2180
        %v2182 = vpop.f32.mrf.mxu0
        %v2183 = vpop.f32.mrf.mxu0
        %v2184 = vadd.f32 0.0, %v2183
        %v2185 = vpop.f32.mrf.mxu0
        %2186 = vmatprep.mubr.bf16.mxu0 %v1855
        %2187 = vmatmul.mubr.bf16.gmra.mxu0 %v1854
        %v2188 = vpop.f32.mrf.mxu0
        %v2189 = vadd.f32 0.0, %v2188
        %v2190 = vpop.f32.mrf.mxu0
        %v2191 = vpop.f32.mrf.mxu0
        %v2192 = vadd.f32 0.0, %v2191
        %v2193 = vpop.f32.mrf.mxu0
        %2194 = vmatprep.mubr.bf16.mxu0 %v1858
        %2195 = vmatmul.mubr.bf16.gmra.mxu0 %v1857
        %v2196 = vpop.f32.mrf.mxu0
        %v2197 = vadd.f32 0.0, %v2196
        %v2198 = vpop.f32.mrf.mxu0
        %v2199 = vpop.f32.mrf.mxu0
        %v2200 = vadd.f32 0.0, %v2199
        %v2201 = vpop.f32.mrf.mxu0
        %2202 = vmatprep.mubr.bf16.mxu0 %v1861
        %2203 = vmatmul.mubr.bf16.gmra.mxu0 %v1860
        %v2204 = vpop.f32.mrf.mxu0
        %v2205 = vadd.f32 0.0, %v2204
        %v2206 = vpop.f32.mrf.mxu0
        %v2207 = vpop.f32.mrf.mxu0
        %v2208 = vadd.f32 0.0, %v2207
        %v2209 = vpop.f32.mrf.mxu0
        %2210 = vmatprep.mubr.bf16.mxu0 %v1864
        %2211 = vmatmul.mubr.bf16.gmra.mxu0 %v1863
        %v2212 = vpop.f32.mrf.mxu0
        %v2213 = vadd.f32 0.0, %v2212
        %v2214 = vpop.f32.mrf.mxu0
        %v2215 = vpop.f32.mrf.mxu0
        %v2216 = vadd.f32 0.0, %v2215
        %v2217 = vpop.f32.mrf.mxu0
        %2218 = vdwg.mxu0
        %2219 = vmatprep.subr.bf16.mxu0 0
        %2220 = vmatpush1.bf16.msra.mxu0 %v2033
        %2221 = vmatprep.subr.bf16.mxu0 0
        %2222 = vmatpush1.bf16.msra.mxu0 %v2032
        %2223 = vmatprep.subr.bf16.mxu0 0
        %2224 = vmatpush1.bf16.msra.mxu0 %v2031
        %2225 = vmatprep.subr.bf16.mxu0 0
        %2226 = vmatpush1.bf16.msra.mxu0 %v2030
        %2227 = vmatprep.subr.bf16.mxu0 0
        %2228 = vmatpush1.bf16.msra.mxu0 %v2029
        %2229 = vmatprep.subr.bf16.mxu0 0
        %2230 = vmatpush1.bf16.msra.mxu0 %v2028
        %2231 = vmatprep.subr.bf16.mxu0 0
        %2232 = vmatpush1.bf16.msra.mxu0 %v2027
        %2233 = vmatprep.subr.bf16.mxu0 0
        %2234 = vmatpush1.bf16.msra.mxu0 %v2026
        %2235 = vmatprep.subr.bf16.mxu0 0
        %2236 = vmatpush2.bf16.msra.mxu0 0
        %2237 = vmatprep.subr.bf16.mxu0 0
        %2238 = vmatpush2.bf16.msra.mxu0 0
        %2239 = vmatprep.subr.bf16.mxu0 0
        %2240 = vmatpush2.bf16.msra.mxu0 0
        %2241 = vmatprep.subr.bf16.mxu0 0
        %2242 = vmatpush2.bf16.msra.mxu0 0
        %2243 = vmatprep.subr.bf16.mxu0 0
        %2244 = vmatpush2.bf16.msra.mxu0 0
        %2245 = vmatprep.subr.bf16.mxu0 0
        %2246 = vmatpush2.bf16.msra.mxu0 0
        %2247 = vmatprep.subr.bf16.mxu0 0
        %2248 = vmatpush2.bf16.msra.mxu0 0
        %2249 = vmatprep.subr.bf16.mxu0 0
        %2250 = vmatpush2.bf16.msra.mxu0 0
        %2251 = vmatprep.mubr.bf16.mxu0 0
        %2252 = vmatmul.mubr.bf16.gmra.mxu0 %v1820
        %v2253 = vpop.f32.mrf.mxu0
        %v2254 = vadd.f32 %v2093, %v2253
        %v2255 = vpop.f32.mrf.mxu0
        %v2256 = vpop.f32.mrf.mxu0
        %v2257 = vadd.f32 %v2096, %v2256
        %v2258 = vpop.f32.mrf.mxu0
        %2259 = vmatprep.mubr.bf16.mxu0 0
        %2260 = vmatmul.mubr.bf16.gmra.mxu0 %v1823
        %v2261 = vpop.f32.mrf.mxu0
        %v2262 = vadd.f32 %v2101, %v2261
        %v2263 = vpop.f32.mrf.mxu0
        %v2264 = vpop.f32.mrf.mxu0
        %v2265 = vadd.f32 %v2104, %v2264
        %v2266 = vpop.f32.mrf.mxu0
        %2267 = vmatprep.mubr.bf16.mxu0 0
        %2268 = vmatmul.mubr.bf16.gmra.mxu0 %v1826
        %v2269 = vpop.f32.mrf.mxu0
        %v2270 = vadd.f32 %v2109, %v2269
        %v2271 = vpop.f32.mrf.mxu0
        %v2272 = vpop.f32.mrf.mxu0
        %v2273 = vadd.f32 %v2112, %v2272
        %v2274 = vpop.f32.mrf.mxu0
        %2275 = vmatprep.mubr.bf16.mxu0 0
        %2276 = vmatmul.mubr.bf16.gmra.mxu0 %v1829
        %v2277 = vpop.f32.mrf.mxu0
        %v2278 = vadd.f32 %v2117, %v2277
        %v2279 = vpop.f32.mrf.mxu0
        %v2280 = vpop.f32.mrf.mxu0
        %v2281 = vadd.f32 %v2120, %v2280
        %v2282 = vpop.f32.mrf.mxu0
        %2283 = vmatprep.mubr.bf16.mxu0 0
        %2284 = vmatmul.mubr.bf16.gmra.mxu0 %v1832
        %v2285 = vpop.f32.mrf.mxu0
        %v2286 = vadd.f32 %v2125, %v2285
        %v2287 = vpop.f32.mrf.mxu0
        %v2288 = vpop.f32.mrf.mxu0
        %v2289 = vadd.f32 %v2128, %v2288
        %v2290 = vpop.f32.mrf.mxu0
        %2291 = vmatprep.mubr.bf16.mxu0 0
        %2292 = vmatmul.mubr.bf16.gmra.mxu0 %v1835
        %v2293 = vpop.f32.mrf.mxu0
        %v2294 = vadd.f32 %v2133, %v2293
        %v2295 = vpop.f32.mrf.mxu0
        %v2296 = vpop.f32.mrf.mxu0
        %v2297 = vadd.f32 %v2136, %v2296
        %v2298 = vpop.f32.mrf.mxu0
        %2299 = vmatprep.mubr.bf16.mxu0 0
        %2300 = vmatmul.mubr.bf16.gmra.mxu0 %v1838
        %v2301 = vpop.f32.mrf.mxu0
        %v2302 = vadd.f32 %v2141, %v2301
        %v2303 = vpop.f32.mrf.mxu0
        %v2304 = vpop.f32.mrf.mxu0
        %v2305 = vadd.f32 %v2144, %v2304
        %v2306 = vpop.f32.mrf.mxu0
        %2307 = vmatprep.mubr.bf16.mxu0 0
        %2308 = vmatmul.mubr.bf16.gmra.mxu0 %v1841
        %v2309 = vpop.f32.mrf.mxu0
        %v2310 = vadd.f32 %v2149, %v2309
        %v2311 = vpop.f32.mrf.mxu0
        %v2312 = vpop.f32.mrf.mxu0
        %v2313 = vadd.f32 %v2152, %v2312
        %v2314 = vpop.f32.mrf.mxu0
        %2315 = vmatprep.mubr.bf16.mxu0 0
        %2316 = vmatmul.mubr.bf16.gmra.mxu0 %v1844
        %v2317 = vpop.f32.mrf.mxu0
        %v2318 = vadd.f32 %v2157, %v2317
        %v2319 = vpop.f32.mrf.mxu0
        %v2320 = vpop.f32.mrf.mxu0
        %v2321 = vadd.f32 %v2160, %v2320
        %v2322 = vpop.f32.mrf.mxu0
        %2323 = vmatprep.mubr.bf16.mxu0 0
        %2324 = vmatmul.mubr.bf16.gmra.mxu0 %v1847
        %v2325 = vpop.f32.mrf.mxu0
        %v2326 = vadd.f32 %v2165, %v2325
        %v2327 = vpop.f32.mrf.mxu0
        %v2328 = vpop.f32.mrf.mxu0
        %v2329 = vadd.f32 %v2168, %v2328
        %v2330 = vpop.f32.mrf.mxu0
        %2331 = vmatprep.mubr.bf16.mxu0 0
        %2332 = vmatmul.mubr.bf16.gmra.mxu0 %v1850
        %v2333 = vpop.f32.mrf.mxu0
        %v2334 = vadd.f32 %v2173, %v2333
        %v2335 = vpop.f32.mrf.mxu0
        %v2336 = vpop.f32.mrf.mxu0
        %v2337 = vadd.f32 %v2176, %v2336
        %v2338 = vpop.f32.mrf.mxu0
        %2339 = vmatprep.mubr.bf16.mxu0 0
        %2340 = vmatmul.mubr.bf16.gmra.mxu0 %v1853
        %v2341 = vpop.f32.mrf.mxu0
        %v2342 = vadd.f32 %v2181, %v2341
        %v2343 = vpop.f32.mrf.mxu0
        %v2344 = vpop.f32.mrf.mxu0
        %v2345 = vadd.f32 %v2184, %v2344
        %v2346 = vpop.f32.mrf.mxu0
        %2347 = vmatprep.mubr.bf16.mxu0 0
        %2348 = vmatmul.mubr.bf16.gmra.mxu0 %v1856
        %v2349 = vpop.f32.mrf.mxu0
        %v2350 = vadd.f32 %v2189, %v2349
        %v2351 = vpop.f32.mrf.mxu0
        %v2352 = vpop.f32.mrf.mxu0
        %v2353 = vadd.f32 %v2192, %v2352
        %v2354 = vpop.f32.mrf.mxu0
        %2355 = vmatprep.mubr.bf16.mxu0 0
        %2356 = vmatmul.mubr.bf16.gmra.mxu0 %v1859
        %v2357 = vpop.f32.mrf.mxu0
        %v2358 = vadd.f32 %v2197, %v2357
        %v2359 = vpop.f32.mrf.mxu0
        %v2360 = vpop.f32.mrf.mxu0
        %v2361 = vadd.f32 %v2200, %v2360
        %v2362 = vpop.f32.mrf.mxu0
        %2363 = vmatprep.mubr.bf16.mxu0 0
        %2364 = vmatmul.mubr.bf16.gmra.mxu0 %v1862
        %v2365 = vpop.f32.mrf.mxu0
        %v2366 = vadd.f32 %v2205, %v2365
        %v2367 = vpop.f32.mrf.mxu0
        %v2368 = vpop.f32.mrf.mxu0
        %v2369 = vadd.f32 %v2208, %v2368
        %v2370 = vpop.f32.mrf.mxu0
        %2371 = vmatprep.mubr.bf16.mxu0 0
        %2372 = vmatmul.mubr.bf16.gmra.mxu0 %v1865
        %v2373 = vpop.f32.mrf.mxu0
        %v2374 = vadd.f32 %v2213, %v2373
        %v2375 = vpop.f32.mrf.mxu0
        %v2376 = vpop.f32.mrf.mxu0
        %v2377 = vadd.f32 %v2216, %v2376
        %v2378 = vpop.f32.mrf.mxu0
        %2379 = vdwg.mxu0
        %v2444 = vunpack.c.l.b16 %v1433
        %v2445 = vunpack.c.h.b16 %v1433
        %v2446 = vunpack.c.l.b16 %v1434
        %v2447 = vunpack.c.l.b16 %v1435
        %v2448 = vunpack.c.h.b16 %v1435
        %v2449 = vunpack.c.l.b16 %v1436
        %v2450 = vunpack.c.l.b16 %v1437
        %v2451 = vunpack.c.h.b16 %v1437
        %v2452 = vunpack.c.l.b16 %v1438
        %v2453 = vunpack.c.l.b16 %v1439
        %v2454 = vunpack.c.h.b16 %v1439
        %v2455 = vunpack.c.l.b16 %v1440
        %v2456 = vunpack.c.l.b16 %v1441
        %v2457 = vunpack.c.h.b16 %v1441
        %v2458 = vunpack.c.l.b16 %v1442
        %v2459 = vunpack.c.l.b16 %v1443
        %v2460 = vunpack.c.h.b16 %v1443
        %v2461 = vunpack.c.l.b16 %v1444
        %v2462 = vunpack.c.l.b16 %v1445
        %v2463 = vunpack.c.h.b16 %v1445
        %v2464 = vunpack.c.l.b16 %v1446
        %v2465 = vunpack.c.l.b16 %v1447
        %v2466 = vunpack.c.h.b16 %v1447
        %v2467 = vunpack.c.l.b16 %v1448
        %v2468 = vunpack.c.l.b16 %v1449
        %v2469 = vunpack.c.h.b16 %v1449
        %v2470 = vunpack.c.l.b16 %v1450
        %v2471 = vunpack.c.l.b16 %v1451
        %v2472 = vunpack.c.h.b16 %v1451
        %v2473 = vunpack.c.l.b16 %v1452
        %v2474 = vunpack.c.l.b16 %v1453
        %v2475 = vunpack.c.h.b16 %v1453
        %v2476 = vunpack.c.l.b16 %v1454
        %v2477 = vunpack.c.l.b16 %v1455
        %v2478 = vunpack.c.h.b16 %v1455
        %v2479 = vunpack.c.l.b16 %v1456
        %v2480 = vunpack.c.l.b16 %v1457
        %v2481 = vunpack.c.h.b16 %v1457
        %v2482 = vunpack.c.l.b16 %v1458
        %v2483 = vunpack.c.l.b16 %v1459
        %v2484 = vunpack.c.h.b16 %v1459
        %v2485 = vunpack.c.l.b16 %v1460
        %v2486 = vunpack.c.l.b16 %v1461
        %v2487 = vunpack.c.h.b16 %v1461
        %v2488 = vunpack.c.l.b16 %v1462
        %v2489 = vunpack.c.l.b16 %v1463
        %v2490 = vunpack.c.h.b16 %v1463
        %v2491 = vunpack.c.l.b16 %v1464
        %v2492 = vunpack.c.l.b16 %v1465
        %v2493 = vunpack.c.h.b16 %v1465
        %v2494 = vunpack.c.l.b16 %v1466
        %v2495 = vunpack.c.l.b16 %v1467
        %v2496 = vunpack.c.h.b16 %v1467
        %v2497 = vunpack.c.l.b16 %v1468
        %v2498 = vunpack.c.l.b16 %v1469
        %v2499 = vunpack.c.h.b16 %v1469
        %v2500 = vunpack.c.l.b16 %v1470
        %v2501 = vunpack.c.l.b16 %v1471
        %v2502 = vunpack.c.h.b16 %v1471
        %v2503 = vunpack.c.l.b16 %v1472
        %v2504 = vunpack.c.l.b16 %v1473
        %v2505 = vunpack.c.h.b16 %v1473
        %v2506 = vunpack.c.l.b16 %v1474
        %v2507 = vunpack.c.l.b16 %v1475
        %v2508 = vunpack.c.h.b16 %v1475
        %v2509 = vunpack.c.l.b16 %v1476
        %v2510 = vunpack.c.l.b16 %v1477
        %v2511 = vunpack.c.h.b16 %v1477
        %v2512 = vunpack.c.l.b16 %v1478
        %v2513 = vunpack.c.l.b16 %v1479
        %v2514 = vunpack.c.h.b16 %v1479
        %v2515 = vunpack.c.l.b16 %v1480
        %v2516 = vunpack.c.l.b16 %v1481
        %v2517 = vunpack.c.h.b16 %v1481
        %v2518 = vunpack.c.l.b16 %v1482
        %v2519 = vunpack.c.l.b16 %v1483
        %v2520 = vunpack.c.h.b16 %v1483
        %v2521 = vunpack.c.l.b16 %v1484
        %v2522 = vunpack.c.l.b16 %v1485
        %v2523 = vunpack.c.h.b16 %v1485
        %v2524 = vunpack.c.l.b16 %v1486
        %v2525 = vunpack.c.l.b16 %v1487
        %v2526 = vunpack.c.h.b16 %v1487
        %v2527 = vunpack.c.l.b16 %v1488
        %v2528 = vunpack.c.l.b16 %v1489
        %v2529 = vunpack.c.h.b16 %v1489
        %v2530 = vunpack.c.l.b16 %v1490
        %v2531 = vunpack.c.l.b16 %v1491
        %v2532 = vunpack.c.h.b16 %v1491
        %v2533 = vunpack.c.l.b16 %v1492
        %v2534 = vunpack.c.l.b16 %v1493
        %v2535 = vunpack.c.h.b16 %v1493
        %v2536 = vunpack.c.l.b16 %v1494
        %v2537 = vunpack.c.l.b16 %v1495
        %v2538 = vunpack.c.h.b16 %v1495
        %v2539 = vunpack.c.l.b16 %v1496
        %v2540 = vpack.c.b16 %v2447, %v2444
        %v2541 = vpack.c.b16 %v2448, %v2445
        %v2542 = vpack.c.b16 %v2449, %v2446
        %v2543 = vpack.c.b16 %v2453, %v2450
        %v2544 = vpack.c.b16 %v2454, %v2451
        %v2545 = vpack.c.b16 %v2455, %v2452
        %v2546 = vpack.c.b16 %v2459, %v2456
        %v2547 = vpack.c.b16 %v2460, %v2457
        %v2548 = vpack.c.b16 %v2461, %v2458
        %v2549 = vpack.c.b16 %v2465, %v2462
        %v2550 = vpack.c.b16 %v2466, %v2463
        %v2551 = vpack.c.b16 %v2467, %v2464
        %v2552 = vpack.c.b16 %v2471, %v2468
        %v2553 = vpack.c.b16 %v2472, %v2469
        %v2554 = vpack.c.b16 %v2473, %v2470
        %v2555 = vpack.c.b16 %v2477, %v2474
        %v2556 = vpack.c.b16 %v2478, %v2475
        %v2557 = vpack.c.b16 %v2479, %v2476
        %v2558 = vpack.c.b16 %v2483, %v2480
        %v2559 = vpack.c.b16 %v2484, %v2481
        %v2560 = vpack.c.b16 %v2485, %v2482
        %v2561 = vpack.c.b16 %v2489, %v2486
        %v2562 = vpack.c.b16 %v2490, %v2487
        %v2563 = vpack.c.b16 %v2491, %v2488
        %v2564 = vpack.c.b16 %v2495, %v2492
        %v2565 = vpack.c.b16 %v2496, %v2493
        %v2566 = vpack.c.b16 %v2497, %v2494
        %v2567 = vpack.c.b16 %v2501, %v2498
        %v2568 = vpack.c.b16 %v2502, %v2499
        %v2569 = vpack.c.b16 %v2503, %v2500
        %v2570 = vpack.c.b16 %v2507, %v2504
        %v2571 = vpack.c.b16 %v2508, %v2505
        %v2572 = vpack.c.b16 %v2509, %v2506
        %v2573 = vpack.c.b16 %v2513, %v2510
        %v2574 = vpack.c.b16 %v2514, %v2511
        %v2575 = vpack.c.b16 %v2515, %v2512
        %v2576 = vpack.c.b16 %v2519, %v2516
        %v2577 = vpack.c.b16 %v2520, %v2517
        %v2578 = vpack.c.b16 %v2521, %v2518
        %v2579 = vpack.c.b16 %v2525, %v2522
        %v2580 = vpack.c.b16 %v2526, %v2523
        %v2581 = vpack.c.b16 %v2527, %v2524
        %v2582 = vpack.c.b16 %v2531, %v2528
        %v2583 = vpack.c.b16 %v2532, %v2529
        %v2584 = vpack.c.b16 %v2533, %v2530
        %v2585 = vpack.c.b16 %v2537, %v2534
        %v2586 = vpack.c.b16 %v2538, %v2535
        %v2587 = vpack.c.b16 %v2539, %v2536
        %v2684 = vunpack.c.l.b16 %v1497
        %v2685 = vunpack.c.l.b16 %v1498
        %v2686 = vunpack.c.l.b16 %v1499
        %v2687 = vunpack.c.l.b16 %v1500
        %v2688 = vunpack.c.l.b16 %v1501
        %v2689 = vunpack.c.l.b16 %v1502
        %v2690 = vunpack.c.l.b16 %v1503
        %v2691 = vunpack.c.l.b16 %v1504
        %v2692 = vunpack.c.l.b16 %v1505
        %v2693 = vunpack.c.l.b16 %v1506
        %v2694 = vunpack.c.l.b16 %v1507
        %v2695 = vunpack.c.l.b16 %v1508
        %v2696 = vunpack.c.l.b16 %v1509
        %v2697 = vunpack.c.l.b16 %v1510
        %v2698 = vunpack.c.l.b16 %v1511
        %v2699 = vunpack.c.l.b16 %v1512
        %v2700 = vunpack.c.l.b16 %v1513
        %v2701 = vunpack.c.l.b16 %v1514
        %v2702 = vunpack.c.l.b16 %v1515
        %v2703 = vunpack.c.l.b16 %v1516
        %v2704 = vunpack.c.l.b16 %v1517
        %v2705 = vunpack.c.l.b16 %v1518
        %v2706 = vunpack.c.l.b16 %v1519
        %v2707 = vunpack.c.l.b16 %v1520
        %v2708 = vunpack.c.l.b16 %v1521
        %v2709 = vunpack.c.l.b16 %v1522
        %v2710 = vunpack.c.l.b16 %v1523
        %v2711 = vunpack.c.l.b16 %v1524
        %v2712 = vunpack.c.l.b16 %v1525
        %v2713 = vunpack.c.l.b16 %v1526
        %v2714 = vunpack.c.l.b16 %v1527
        %v2715 = vunpack.c.l.b16 %v1528
        %v2716 = vunpack.c.l.b16 %v1529
        %v2717 = vunpack.c.l.b16 %v1530
        %v2718 = vunpack.c.l.b16 %v1531
        %v2719 = vunpack.c.l.b16 %v1532
        %v2720 = vunpack.c.l.b16 %v1533
        %v2721 = vunpack.c.l.b16 %v1534
        %v2722 = vunpack.c.l.b16 %v1535
        %v2723 = vunpack.c.l.b16 %v1536
        %v2724 = vunpack.c.l.b16 %v1537
        %v2725 = vunpack.c.l.b16 %v1538
        %v2726 = vunpack.c.l.b16 %v1539
        %v2727 = vunpack.c.l.b16 %v1540
        %v2728 = vunpack.c.l.b16 %v1541
        %v2729 = vunpack.c.l.b16 %v1542
        %v2730 = vunpack.c.l.b16 %v1543
        %v2731 = vunpack.c.l.b16 %v1544
        %v2732 = vpack.c.b16 %v2685, %v2684
        %v2733 = vpack.c.b16 %v2687, %v2686
        %v2734 = vpack.c.b16 %v2689, %v2688
        %v2735 = vpack.c.b16 %v2691, %v2690
        %v2736 = vpack.c.b16 %v2693, %v2692
        %v2737 = vpack.c.b16 %v2695, %v2694
        %v2738 = vpack.c.b16 %v2697, %v2696
        %v2739 = vpack.c.b16 %v2699, %v2698
        %v2740 = vpack.c.b16 %v2701, %v2700
        %v2741 = vpack.c.b16 %v2703, %v2702
        %v2742 = vpack.c.b16 %v2705, %v2704
        %v2743 = vpack.c.b16 %v2707, %v2706
        %v2744 = vpack.c.b16 %v2709, %v2708
        %v2745 = vpack.c.b16 %v2711, %v2710
        %v2746 = vpack.c.b16 %v2713, %v2712
        %v2747 = vpack.c.b16 %v2715, %v2714
        %v2748 = vpack.c.b16 %v2717, %v2716
        %v2749 = vpack.c.b16 %v2719, %v2718
        %v2750 = vpack.c.b16 %v2721, %v2720
        %v2751 = vpack.c.b16 %v2723, %v2722
        %v2752 = vpack.c.b16 %v2725, %v2724
        %v2753 = vpack.c.b16 %v2727, %v2726
        %v2754 = vpack.c.b16 %v2729, %v2728
        %v2755 = vpack.c.b16 %v2731, %v2730
        %2780 = vmatprep.subr.bf16.mxu0 0
        %2781 = vmatpush1.bf16.msra.mxu0 %v2739
        %2782 = vmatprep.subr.bf16.mxu0 0
        %2783 = vmatpush1.bf16.msra.mxu0 %v2738
        %2784 = vmatprep.subr.bf16.mxu0 0
        %2785 = vmatpush1.bf16.msra.mxu0 %v2737
        %2786 = vmatprep.subr.bf16.mxu0 0
        %2787 = vmatpush1.bf16.msra.mxu0 %v2736
        %2788 = vmatprep.subr.bf16.mxu0 0
        %2789 = vmatpush1.bf16.msra.mxu0 %v2735
        %2790 = vmatprep.subr.bf16.mxu0 0
        %2791 = vmatpush1.bf16.msra.mxu0 %v2734
        %2792 = vmatprep.subr.bf16.mxu0 0
        %2793 = vmatpush1.bf16.msra.mxu0 %v2733
        %2794 = vmatprep.subr.bf16.mxu0 0
        %2795 = vmatpush1.bf16.msra.mxu0 %v2732
        %2796 = vmatprep.subr.bf16.mxu0 0
        %2797 = vmatpush2.bf16.msra.mxu0 %v2747
        %2798 = vmatprep.subr.bf16.mxu0 0
        %2799 = vmatpush2.bf16.msra.mxu0 %v2746
        %2800 = vmatprep.subr.bf16.mxu0 0
        %2801 = vmatpush2.bf16.msra.mxu0 %v2745
        %2802 = vmatprep.subr.bf16.mxu0 0
        %2803 = vmatpush2.bf16.msra.mxu0 %v2744
        %2804 = vmatprep.subr.bf16.mxu0 0
        %2805 = vmatpush2.bf16.msra.mxu0 %v2743
        %2806 = vmatprep.subr.bf16.mxu0 0
        %2807 = vmatpush2.bf16.msra.mxu0 %v2742
        %2808 = vmatprep.subr.bf16.mxu0 0
        %2809 = vmatpush2.bf16.msra.mxu0 %v2741
        %2810 = vmatprep.subr.bf16.mxu0 0
        %2811 = vmatpush2.bf16.msra.mxu0 %v2740
        %2812 = vmatprep.mubr.bf16.mxu0 %v2541
        %2813 = vmatmul.mubr.bf16.gmra.mxu0 %v2540
        %v2814 = vpop.f32.mrf.mxu0
        %v2815 = vadd.f32 %v2254, %v2814
        %v2816 = vpop.f32.mrf.mxu0
        %v2817 = vpop.f32.mrf.mxu0
        %v2818 = vadd.f32 %v2257, %v2817
        %v2819 = vpop.f32.mrf.mxu0
        %2820 = vmatprep.mubr.bf16.mxu0 %v2544
        %2821 = vmatmul.mubr.bf16.gmra.mxu0 %v2543
        %v2822 = vpop.f32.mrf.mxu0
        %v2823 = vadd.f32 %v2262, %v2822
        %v2824 = vpop.f32.mrf.mxu0
        %v2825 = vpop.f32.mrf.mxu0
        %v2826 = vadd.f32 %v2265, %v2825
        %v2827 = vpop.f32.mrf.mxu0
        %2828 = vmatprep.mubr.bf16.mxu0 %v2547
        %2829 = vmatmul.mubr.bf16.gmra.mxu0 %v2546
        %v2830 = vpop.f32.mrf.mxu0
        %v2831 = vadd.f32 %v2270, %v2830
        %v2832 = vpop.f32.mrf.mxu0
        %v2833 = vpop.f32.mrf.mxu0
        %v2834 = vadd.f32 %v2273, %v2833
        %v2835 = vpop.f32.mrf.mxu0
        %2836 = vmatprep.mubr.bf16.mxu0 %v2550
        %2837 = vmatmul.mubr.bf16.gmra.mxu0 %v2549
        %v2838 = vpop.f32.mrf.mxu0
        %v2839 = vadd.f32 %v2278, %v2838
        %v2840 = vpop.f32.mrf.mxu0
        %v2841 = vpop.f32.mrf.mxu0
        %v2842 = vadd.f32 %v2281, %v2841
        %v2843 = vpop.f32.mrf.mxu0
        %2844 = vmatprep.mubr.bf16.mxu0 %v2553
        %2845 = vmatmul.mubr.bf16.gmra.mxu0 %v2552
        %v2846 = vpop.f32.mrf.mxu0
        %v2847 = vadd.f32 %v2286, %v2846
        %v2848 = vpop.f32.mrf.mxu0
        %v2849 = vpop.f32.mrf.mxu0
        %v2850 = vadd.f32 %v2289, %v2849
        %v2851 = vpop.f32.mrf.mxu0
        %2852 = vmatprep.mubr.bf16.mxu0 %v2556
        %2853 = vmatmul.mubr.bf16.gmra.mxu0 %v2555
        %v2854 = vpop.f32.mrf.mxu0
        %v2855 = vadd.f32 %v2294, %v2854
        %v2856 = vpop.f32.mrf.mxu0
        %v2857 = vpop.f32.mrf.mxu0
        %v2858 = vadd.f32 %v2297, %v2857
        %v2859 = vpop.f32.mrf.mxu0
        %2860 = vmatprep.mubr.bf16.mxu0 %v2559
        %2861 = vmatmul.mubr.bf16.gmra.mxu0 %v2558
        %v2862 = vpop.f32.mrf.mxu0
        %v2863 = vadd.f32 %v2302, %v2862
        %v2864 = vpop.f32.mrf.mxu0
        %v2865 = vpop.f32.mrf.mxu0
        %v2866 = vadd.f32 %v2305, %v2865
        %v2867 = vpop.f32.mrf.mxu0
        %2868 = vmatprep.mubr.bf16.mxu0 %v2562
        %2869 = vmatmul.mubr.bf16.gmra.mxu0 %v2561
        %v2870 = vpop.f32.mrf.mxu0
        %v2871 = vadd.f32 %v2310, %v2870
        %v2872 = vpop.f32.mrf.mxu0
        %v2873 = vpop.f32.mrf.mxu0
        %v2874 = vadd.f32 %v2313, %v2873
        %v2875 = vpop.f32.mrf.mxu0
        %2876 = vmatprep.mubr.bf16.mxu0 %v2565
        %2877 = vmatmul.mubr.bf16.gmra.mxu0 %v2564
        %v2878 = vpop.f32.mrf.mxu0
        %v2879 = vadd.f32 %v2318, %v2878
        %v2880 = vpop.f32.mrf.mxu0
        %v2881 = vpop.f32.mrf.mxu0
        %v2882 = vadd.f32 %v2321, %v2881
        %v2883 = vpop.f32.mrf.mxu0
        %2884 = vmatprep.mubr.bf16.mxu0 %v2568
        %2885 = vmatmul.mubr.bf16.gmra.mxu0 %v2567
        %v2886 = vpop.f32.mrf.mxu0
        %v2887 = vadd.f32 %v2326, %v2886
        %v2888 = vpop.f32.mrf.mxu0
        %v2889 = vpop.f32.mrf.mxu0
        %v2890 = vadd.f32 %v2329, %v2889
        %v2891 = vpop.f32.mrf.mxu0
        %2892 = vmatprep.mubr.bf16.mxu0 %v2571
        %2893 = vmatmul.mubr.bf16.gmra.mxu0 %v2570
        %v2894 = vpop.f32.mrf.mxu0
        %v2895 = vadd.f32 %v2334, %v2894
        %v2896 = vpop.f32.mrf.mxu0
        %v2897 = vpop.f32.mrf.mxu0
        %v2898 = vadd.f32 %v2337, %v2897
        %v2899 = vpop.f32.mrf.mxu0
        %2900 = vmatprep.mubr.bf16.mxu0 %v2574
        %2901 = vmatmul.mubr.bf16.gmra.mxu0 %v2573
        %v2902 = vpop.f32.mrf.mxu0
        %v2903 = vadd.f32 %v2342, %v2902
        %v2904 = vpop.f32.mrf.mxu0
        %v2905 = vpop.f32.mrf.mxu0
        %v2906 = vadd.f32 %v2345, %v2905
        %v2907 = vpop.f32.mrf.mxu0
        %2908 = vmatprep.mubr.bf16.mxu0 %v2577
        %2909 = vmatmul.mubr.bf16.gmra.mxu0 %v2576
        %v2910 = vpop.f32.mrf.mxu0
        %v2911 = vadd.f32 %v2350, %v2910
        %v2912 = vpop.f32.mrf.mxu0
        %v2913 = vpop.f32.mrf.mxu0
        %v2914 = vadd.f32 %v2353, %v2913
        %v2915 = vpop.f32.mrf.mxu0
        %2916 = vmatprep.mubr.bf16.mxu0 %v2580
        %2917 = vmatmul.mubr.bf16.gmra.mxu0 %v2579
        %v2918 = vpop.f32.mrf.mxu0
        %v2919 = vadd.f32 %v2358, %v2918
        %v2920 = vpop.f32.mrf.mxu0
        %v2921 = vpop.f32.mrf.mxu0
        %v2922 = vadd.f32 %v2361, %v2921
        %v2923 = vpop.f32.mrf.mxu0
        %2924 = vmatprep.mubr.bf16.mxu0 %v2583
        %2925 = vmatmul.mubr.bf16.gmra.mxu0 %v2582
        %v2926 = vpop.f32.mrf.mxu0
        %v2927 = vadd.f32 %v2366, %v2926
        %v2928 = vpop.f32.mrf.mxu0
        %v2929 = vpop.f32.mrf.mxu0
        %v2930 = vadd.f32 %v2369, %v2929
        %v2931 = vpop.f32.mrf.mxu0
        %2932 = vmatprep.mubr.bf16.mxu0 %v2586
        %2933 = vmatmul.mubr.bf16.gmra.mxu0 %v2585
        %v2934 = vpop.f32.mrf.mxu0
        %v2935 = vadd.f32 %v2374, %v2934
        %v2936 = vpop.f32.mrf.mxu0
        %v2937 = vpop.f32.mrf.mxu0
        %v2938 = vadd.f32 %v2377, %v2937
        %v2939 = vpop.f32.mrf.mxu0
        %2940 = vdwg.mxu0
        %2941 = vmatprep.subr.bf16.mxu0 0
        %2942 = vmatpush1.bf16.msra.mxu0 %v2755
        %2943 = vmatprep.subr.bf16.mxu0 0
        %2944 = vmatpush1.bf16.msra.mxu0 %v2754
        %2945 = vmatprep.subr.bf16.mxu0 0
        %2946 = vmatpush1.bf16.msra.mxu0 %v2753
        %2947 = vmatprep.subr.bf16.mxu0 0
        %2948 = vmatpush1.bf16.msra.mxu0 %v2752
        %2949 = vmatprep.subr.bf16.mxu0 0
        %2950 = vmatpush1.bf16.msra.mxu0 %v2751
        %2951 = vmatprep.subr.bf16.mxu0 0
        %2952 = vmatpush1.bf16.msra.mxu0 %v2750
        %2953 = vmatprep.subr.bf16.mxu0 0
        %2954 = vmatpush1.bf16.msra.mxu0 %v2749
        %2955 = vmatprep.subr.bf16.mxu0 0
        %2956 = vmatpush1.bf16.msra.mxu0 %v2748
        %2957 = vmatprep.subr.bf16.mxu0 0
        %2958 = vmatpush2.bf16.msra.mxu0 0
        %2959 = vmatprep.subr.bf16.mxu0 0
        %2960 = vmatpush2.bf16.msra.mxu0 0
        %2961 = vmatprep.subr.bf16.mxu0 0
        %2962 = vmatpush2.bf16.msra.mxu0 0
        %2963 = vmatprep.subr.bf16.mxu0 0
        %2964 = vmatpush2.bf16.msra.mxu0 0
        %2965 = vmatprep.subr.bf16.mxu0 0
        %2966 = vmatpush2.bf16.msra.mxu0 0
        %2967 = vmatprep.subr.bf16.mxu0 0
        %2968 = vmatpush2.bf16.msra.mxu0 0
        %2969 = vmatprep.subr.bf16.mxu0 0
        %2970 = vmatpush2.bf16.msra.mxu0 0
        %2971 = vmatprep.subr.bf16.mxu0 0
        %2972 = vmatpush2.bf16.msra.mxu0 0
        %2973 = vmatprep.mubr.bf16.mxu0 0
        %2974 = vmatmul.mubr.bf16.gmra.mxu0 %v2542
        %v2975 = vpop.f32.mrf.mxu0
        %v2976 = vadd.f32 %v2815, %v2975
        %v2977 = vpop.f32.mrf.mxu0
        %v2978 = vpop.f32.mrf.mxu0
        %v2979 = vadd.f32 %v2818, %v2978
        %v2980 = vpop.f32.mrf.mxu0
        %2981 = vmatprep.mubr.bf16.mxu0 0
        %2982 = vmatmul.mubr.bf16.gmra.mxu0 %v2545
        %v2983 = vpop.f32.mrf.mxu0
        %v2984 = vadd.f32 %v2823, %v2983
        %v2985 = vpop.f32.mrf.mxu0
        %v2986 = vpop.f32.mrf.mxu0
        %v2987 = vadd.f32 %v2826, %v2986
        %v2988 = vpop.f32.mrf.mxu0
        %2989 = vmatprep.mubr.bf16.mxu0 0
        %2990 = vmatmul.mubr.bf16.gmra.mxu0 %v2548
        %v2991 = vpop.f32.mrf.mxu0
        %v2992 = vadd.f32 %v2831, %v2991
        %v2993 = vpop.f32.mrf.mxu0
        %v2994 = vpop.f32.mrf.mxu0
        %v2995 = vadd.f32 %v2834, %v2994
        %v2996 = vpop.f32.mrf.mxu0
        %2997 = vmatprep.mubr.bf16.mxu0 0
        %2998 = vmatmul.mubr.bf16.gmra.mxu0 %v2551
        %v2999 = vpop.f32.mrf.mxu0
        %v3000 = vadd.f32 %v2839, %v2999
        %v3001 = vpop.f32.mrf.mxu0
        %v3002 = vpop.f32.mrf.mxu0
        %v3003 = vadd.f32 %v2842, %v3002
        %v3004 = vpop.f32.mrf.mxu0
        %3005 = vmatprep.mubr.bf16.mxu0 0
        %3006 = vmatmul.mubr.bf16.gmra.mxu0 %v2554
        %v3007 = vpop.f32.mrf.mxu0
        %v3008 = vadd.f32 %v2847, %v3007
        %v3009 = vpop.f32.mrf.mxu0
        %v3010 = vpop.f32.mrf.mxu0
        %v3011 = vadd.f32 %v2850, %v3010
        %v3012 = vpop.f32.mrf.mxu0
        %3013 = vmatprep.mubr.bf16.mxu0 0
        %3014 = vmatmul.mubr.bf16.gmra.mxu0 %v2557
        %v3015 = vpop.f32.mrf.mxu0
        %v3016 = vadd.f32 %v2855, %v3015
        %v3017 = vpop.f32.mrf.mxu0
        %v3018 = vpop.f32.mrf.mxu0
        %v3019 = vadd.f32 %v2858, %v3018
        %v3020 = vpop.f32.mrf.mxu0
        %3021 = vmatprep.mubr.bf16.mxu0 0
        %3022 = vmatmul.mubr.bf16.gmra.mxu0 %v2560
        %v3023 = vpop.f32.mrf.mxu0
        %v3024 = vadd.f32 %v2863, %v3023
        %v3025 = vpop.f32.mrf.mxu0
        %v3026 = vpop.f32.mrf.mxu0
        %v3027 = vadd.f32 %v2866, %v3026
        %v3028 = vpop.f32.mrf.mxu0
        %3029 = vmatprep.mubr.bf16.mxu0 0
        %3030 = vmatmul.mubr.bf16.gmra.mxu0 %v2563
        %v3031 = vpop.f32.mrf.mxu0
        %v3032 = vadd.f32 %v2871, %v3031
        %v3033 = vpop.f32.mrf.mxu0
        %v3034 = vpop.f32.mrf.mxu0
        %v3035 = vadd.f32 %v2874, %v3034
        %v3036 = vpop.f32.mrf.mxu0
        %3037 = vmatprep.mubr.bf16.mxu0 0
        %3038 = vmatmul.mubr.bf16.gmra.mxu0 %v2566
        %v3039 = vpop.f32.mrf.mxu0
        %v3040 = vadd.f32 %v2879, %v3039
        %v3041 = vpop.f32.mrf.mxu0
        %v3042 = vpop.f32.mrf.mxu0
        %v3043 = vadd.f32 %v2882, %v3042
        %v3044 = vpop.f32.mrf.mxu0
        %3045 = vmatprep.mubr.bf16.mxu0 0
        %3046 = vmatmul.mubr.bf16.gmra.mxu0 %v2569
        %v3047 = vpop.f32.mrf.mxu0
        %v3048 = vadd.f32 %v2887, %v3047
        %v3049 = vpop.f32.mrf.mxu0
        %v3050 = vpop.f32.mrf.mxu0
        %v3051 = vadd.f32 %v2890, %v3050
        %v3052 = vpop.f32.mrf.mxu0
        %3053 = vmatprep.mubr.bf16.mxu0 0
        %3054 = vmatmul.mubr.bf16.gmra.mxu0 %v2572
        %v3055 = vpop.f32.mrf.mxu0
        %v3056 = vadd.f32 %v2895, %v3055
        %v3057 = vpop.f32.mrf.mxu0
        %v3058 = vpop.f32.mrf.mxu0
        %v3059 = vadd.f32 %v2898, %v3058
        %v3060 = vpop.f32.mrf.mxu0
        %3061 = vmatprep.mubr.bf16.mxu0 0
        %3062 = vmatmul.mubr.bf16.gmra.mxu0 %v2575
        %v3063 = vpop.f32.mrf.mxu0
        %v3064 = vadd.f32 %v2903, %v3063
        %v3065 = vpop.f32.mrf.mxu0
        %v3066 = vpop.f32.mrf.mxu0
        %v3067 = vadd.f32 %v2906, %v3066
        %v3068 = vpop.f32.mrf.mxu0
        %3069 = vmatprep.mubr.bf16.mxu0 0
        %3070 = vmatmul.mubr.bf16.gmra.mxu0 %v2578
        %v3071 = vpop.f32.mrf.mxu0
        %v3072 = vadd.f32 %v2911, %v3071
        %v3073 = vpop.f32.mrf.mxu0
        %v3074 = vpop.f32.mrf.mxu0
        %v3075 = vadd.f32 %v2914, %v3074
        %v3076 = vpop.f32.mrf.mxu0
        %3077 = vmatprep.mubr.bf16.mxu0 0
        %3078 = vmatmul.mubr.bf16.gmra.mxu0 %v2581
        %v3079 = vpop.f32.mrf.mxu0
        %v3080 = vadd.f32 %v2919, %v3079
        %v3081 = vpop.f32.mrf.mxu0
        %v3082 = vpop.f32.mrf.mxu0
        %v3083 = vadd.f32 %v2922, %v3082
        %v3084 = vpop.f32.mrf.mxu0
        %3085 = vmatprep.mubr.bf16.mxu0 0
        %3086 = vmatmul.mubr.bf16.gmra.mxu0 %v2584
        %v3087 = vpop.f32.mrf.mxu0
        %v3088 = vadd.f32 %v2927, %v3087
        %v3089 = vpop.f32.mrf.mxu0
        %v3090 = vpop.f32.mrf.mxu0
        %v3091 = vadd.f32 %v2930, %v3090
        %v3092 = vpop.f32.mrf.mxu0
        %3093 = vmatprep.mubr.bf16.mxu0 0
        %3094 = vmatmul.mubr.bf16.gmra.mxu0 %v2587
        %v3095 = vpop.f32.mrf.mxu0
        %v3096 = vadd.f32 %v2935, %v3095
        %v3097 = vpop.f32.mrf.mxu0
        %v3098 = vpop.f32.mrf.mxu0
        %v3099 = vadd.f32 %v2938, %v3098
        %v3100 = vpop.f32.mrf.mxu0
        %3101 = vdwg.mxu0
        %s3102 = scalar_lea.vmem [#allocation2], 48
        %v3103 = vld [vmem:[%s3102] sm:$0xff]
        %v3104 = vld [vmem:[%s3102 + $0x8] sm:$0xf]
        %v3105 = vld [vmem:[%s3102 + $0xc] sm:$0xff]
        %v3106 = vld [vmem:[%s3102 + $0x14] sm:$0xf]
        %v3107 = vld [vmem:[%s3102 + $0x18] sm:$0xff]
        %v3108 = vld [vmem:[%s3102 + $0x20] sm:$0xf]
        %v3109 = vld [vmem:[%s3102 + $0x24] sm:$0xff]
        %v3110 = vld [vmem:[%s3102 + $0x2c] sm:$0xf]
        %v3111 = vld [vmem:[%s3102 + $0x30] sm:$0xff]
        %v3112 = vld [vmem:[%s3102 + $0x38] sm:$0xf]
        %v3113 = vld [vmem:[%s3102 + $0x3c] sm:$0xff]
        %v3114 = vld [vmem:[%s3102 + $0x44] sm:$0xf]
        %v3115 = vld [vmem:[%s3102 + $0x48] sm:$0xff]
        %v3116 = vld [vmem:[%s3102 + $0x50] sm:$0xf]
        %v3117 = vld [vmem:[%s3102 + $0x54] sm:$0xff]
        %v3118 = vld [vmem:[%s3102 + $0x5c] sm:$0xf]
        %v3119 = vld [vmem:[%s3102 + $0x60] sm:$0xff]
        %v3120 = vld [vmem:[%s3102 + $0x68] sm:$0xf]
        %v3121 = vld [vmem:[%s3102 + $0x6c] sm:$0xff]
        %v3122 = vld [vmem:[%s3102 + $0x74] sm:$0xf]
        %v3123 = vld [vmem:[%s3102 + $0x78] sm:$0xff]
        %v3124 = vld [vmem:[%s3102 + $0x80] sm:$0xf]
        %v3125 = vld [vmem:[%s3102 + $0x84] sm:$0xff]
        %v3126 = vld [vmem:[%s3102 + $0x8c] sm:$0xf]
        %v3127 = vld [vmem:[%s3102 + $0x90] sm:$0xff]
        %v3128 = vld [vmem:[%s3102 + $0x98] sm:$0xf]
        %v3129 = vld [vmem:[%s3102 + $0x9c] sm:$0xff]
        %v3130 = vld [vmem:[%s3102 + $0xa4] sm:$0xf]
        %v3131 = vld [vmem:[%s3102 + $0xa8] sm:$0xff]
        %v3132 = vld [vmem:[%s3102 + $0xb0] sm:$0xf]
        %v3133 = vld [vmem:[%s3102 + $0xb4] sm:$0xff]
        %v3134 = vld [vmem:[%s3102 + $0xbc] sm:$0xf]
        %v3135 = vld [vmem:[%s3102 + $0xc0] sm:$0xff]
        %v3136 = vld [vmem:[%s3102 + $0xc8] sm:$0xf]
        %v3137 = vld [vmem:[%s3102 + $0xcc] sm:$0xff]
        %v3138 = vld [vmem:[%s3102 + $0xd4] sm:$0xf]
        %v3139 = vld [vmem:[%s3102 + $0xd8] sm:$0xff]
        %v3140 = vld [vmem:[%s3102 + $0xe0] sm:$0xf]
        %v3141 = vld [vmem:[%s3102 + $0xe4] sm:$0xff]
        %v3142 = vld [vmem:[%s3102 + $0xec] sm:$0xf]
        %v3143 = vld [vmem:[%s3102 + $0xf0] sm:$0xff]
        %v3144 = vld [vmem:[%s3102 + $0xf8] sm:$0xf]
        %v3145 = vld [vmem:[%s3102 + $0xfc] sm:$0xff]
        %v3146 = vld [vmem:[%s3102 + $0x104] sm:$0xf]
        %v3147 = vld [vmem:[%s3102 + $0x108] sm:$0xff]
        %v3148 = vld [vmem:[%s3102 + $0x110] sm:$0xf]
        %v3149 = vld [vmem:[%s3102 + $0x114] sm:$0xff]
        %v3150 = vld [vmem:[%s3102 + $0x11c] sm:$0xf]
        %v3151 = vld [vmem:[%s3102 + $0x120] sm:$0xff]
        %v3152 = vld [vmem:[%s3102 + $0x128] sm:$0xf]
        %v3153 = vld [vmem:[%s3102 + $0x12c] sm:$0xff]
        %v3154 = vld [vmem:[%s3102 + $0x134] sm:$0xf]
        %v3155 = vld [vmem:[%s3102 + $0x138] sm:$0xff]
        %v3156 = vld [vmem:[%s3102 + $0x140] sm:$0xf]
        %v3157 = vld [vmem:[%s3102 + $0x144] sm:$0xff]
        %v3158 = vld [vmem:[%s3102 + $0x14c] sm:$0xf]
        %v3159 = vld [vmem:[%s3102 + $0x150] sm:$0xff]
        %v3160 = vld [vmem:[%s3102 + $0x158] sm:$0xf]
        %v3161 = vld [vmem:[%s3102 + $0x15c] sm:$0xff]
        %v3162 = vld [vmem:[%s3102 + $0x164] sm:$0xf]
        %v3163 = vld [vmem:[%s3102 + $0x168] sm:$0xff]
        %v3164 = vld [vmem:[%s3102 + $0x170] sm:$0xf]
        %v3165 = vld [vmem:[%s3102 + $0x174] sm:$0xff]
        %v3166 = vld [vmem:[%s3102 + $0x17c] sm:$0xf]
        %s3167 = scalar_lea.vmem [#allocation8], 384
        %v3168 = vld [vmem:[%s3167] sm:$0xf]
        %v3169 = vld [vmem:[%s3167 + $0x4] sm:$0xf]
        %v3170 = vld [vmem:[%s3167 + $0x8] sm:$0xf]
        %v3171 = vld [vmem:[%s3167 + $0xc] sm:$0xf]
        %v3172 = vld [vmem:[%s3167 + $0x10] sm:$0xf]
        %v3173 = vld [vmem:[%s3167 + $0x14] sm:$0xf]
        %v3174 = vld [vmem:[%s3167 + $0x18] sm:$0xf]
        %v3175 = vld [vmem:[%s3167 + $0x1c] sm:$0xf]
        %v3176 = vld [vmem:[%s3167 + $0x20] sm:$0xf]
        %v3177 = vld [vmem:[%s3167 + $0x24] sm:$0xf]
        %v3178 = vld [vmem:[%s3167 + $0x28] sm:$0xf]
        %v3179 = vld [vmem:[%s3167 + $0x2c] sm:$0xf]
        %v3180 = vld [vmem:[%s3167 + $0x30] sm:$0xf]
        %v3181 = vld [vmem:[%s3167 + $0x34] sm:$0xf]
        %v3182 = vld [vmem:[%s3167 + $0x38] sm:$0xf]
        %v3183 = vld [vmem:[%s3167 + $0x3c] sm:$0xf]
        %v3184 = vld [vmem:[%s3167 + $0x40] sm:$0xf]
        %v3185 = vld [vmem:[%s3167 + $0x44] sm:$0xf]
        %v3186 = vld [vmem:[%s3167 + $0x48] sm:$0xf]
        %v3187 = vld [vmem:[%s3167 + $0x4c] sm:$0xf]
        %v3188 = vld [vmem:[%s3167 + $0x50] sm:$0xf]
        %v3189 = vld [vmem:[%s3167 + $0x54] sm:$0xf]
        %v3190 = vld [vmem:[%s3167 + $0x58] sm:$0xf]
        %v3191 = vld [vmem:[%s3167 + $0x5c] sm:$0xf]
        %v3192 = vld [vmem:[%s3167 + $0x60] sm:$0xf]
        %v3193 = vld [vmem:[%s3167 + $0x64] sm:$0xf]
        %v3194 = vld [vmem:[%s3167 + $0x68] sm:$0xf]
        %v3195 = vld [vmem:[%s3167 + $0x6c] sm:$0xf]
        %v3196 = vld [vmem:[%s3167 + $0x70] sm:$0xf]
        %v3197 = vld [vmem:[%s3167 + $0x74] sm:$0xf]
        %v3198 = vld [vmem:[%s3167 + $0x78] sm:$0xf]
        %v3199 = vld [vmem:[%s3167 + $0x7c] sm:$0xf]
        %v3200 = vld [vmem:[%s3167 + $0x80] sm:$0xf]
        %v3201 = vld [vmem:[%s3167 + $0x84] sm:$0xf]
        %v3202 = vld [vmem:[%s3167 + $0x88] sm:$0xf]
        %v3203 = vld [vmem:[%s3167 + $0x8c] sm:$0xf]
        %v3204 = vld [vmem:[%s3167 + $0x90] sm:$0xf]
        %v3205 = vld [vmem:[%s3167 + $0x94] sm:$0xf]
        %v3206 = vld [vmem:[%s3167 + $0x98] sm:$0xf]
        %v3207 = vld [vmem:[%s3167 + $0x9c] sm:$0xf]
        %v3208 = vld [vmem:[%s3167 + $0xa0] sm:$0xf]
        %v3209 = vld [vmem:[%s3167 + $0xa4] sm:$0xf]
        %v3210 = vld [vmem:[%s3167 + $0xa8] sm:$0xf]
        %v3211 = vld [vmem:[%s3167 + $0xac] sm:$0xf]
        %v3212 = vld [vmem:[%s3167 + $0xb0] sm:$0xf]
        %v3213 = vld [vmem:[%s3167 + $0xb4] sm:$0xf]
        %v3214 = vld [vmem:[%s3167 + $0xb8] sm:$0xf]
        %v3215 = vld [vmem:[%s3167 + $0xbc] sm:$0xf]
        %v3280 = vunpack.c.l.b16 %v3103
        %v3281 = vunpack.c.h.b16 %v3103
        %v3282 = vunpack.c.l.b16 %v3104
        %v3283 = vunpack.c.l.b16 %v3105
        %v3284 = vunpack.c.h.b16 %v3105
        %v3285 = vunpack.c.l.b16 %v3106
        %v3286 = vunpack.c.l.b16 %v3107
        %v3287 = vunpack.c.h.b16 %v3107
        %v3288 = vunpack.c.l.b16 %v3108
        %v3289 = vunpack.c.l.b16 %v3109
        %v3290 = vunpack.c.h.b16 %v3109
        %v3291 = vunpack.c.l.b16 %v3110
        %v3292 = vunpack.c.l.b16 %v3111
        %v3293 = vunpack.c.h.b16 %v3111
        %v3294 = vunpack.c.l.b16 %v3112
        %v3295 = vunpack.c.l.b16 %v3113
        %v3296 = vunpack.c.h.b16 %v3113
        %v3297 = vunpack.c.l.b16 %v3114
        %v3298 = vunpack.c.l.b16 %v3115
        %v3299 = vunpack.c.h.b16 %v3115
        %v3300 = vunpack.c.l.b16 %v3116
        %v3301 = vunpack.c.l.b16 %v3117
        %v3302 = vunpack.c.h.b16 %v3117
        %v3303 = vunpack.c.l.b16 %v3118
        %v3304 = vunpack.c.l.b16 %v3119
        %v3305 = vunpack.c.h.b16 %v3119
        %v3306 = vunpack.c.l.b16 %v3120
        %v3307 = vunpack.c.l.b16 %v3121
        %v3308 = vunpack.c.h.b16 %v3121
        %v3309 = vunpack.c.l.b16 %v3122
        %v3310 = vunpack.c.l.b16 %v3123
        %v3311 = vunpack.c.h.b16 %v3123
        %v3312 = vunpack.c.l.b16 %v3124
        %v3313 = vunpack.c.l.b16 %v3125
        %v3314 = vunpack.c.h.b16 %v3125
        %v3315 = vunpack.c.l.b16 %v3126
        %v3316 = vunpack.c.l.b16 %v3127
        %v3317 = vunpack.c.h.b16 %v3127
        %v3318 = vunpack.c.l.b16 %v3128
        %v3319 = vunpack.c.l.b16 %v3129
        %v3320 = vunpack.c.h.b16 %v3129
        %v3321 = vunpack.c.l.b16 %v3130
        %v3322 = vunpack.c.l.b16 %v3131
        %v3323 = vunpack.c.h.b16 %v3131
        %v3324 = vunpack.c.l.b16 %v3132
        %v3325 = vunpack.c.l.b16 %v3133
        %v3326 = vunpack.c.h.b16 %v3133
        %v3327 = vunpack.c.l.b16 %v3134
        %v3328 = vunpack.c.l.b16 %v3135
        %v3329 = vunpack.c.h.b16 %v3135
        %v3330 = vunpack.c.l.b16 %v3136
        %v3331 = vunpack.c.l.b16 %v3137
        %v3332 = vunpack.c.h.b16 %v3137
        %v3333 = vunpack.c.l.b16 %v3138
        %v3334 = vunpack.c.l.b16 %v3139
        %v3335 = vunpack.c.h.b16 %v3139
        %v3336 = vunpack.c.l.b16 %v3140
        %v3337 = vunpack.c.l.b16 %v3141
        %v3338 = vunpack.c.h.b16 %v3141
        %v3339 = vunpack.c.l.b16 %v3142
        %v3340 = vunpack.c.l.b16 %v3143
        %v3341 = vunpack.c.h.b16 %v3143
        %v3342 = vunpack.c.l.b16 %v3144
        %v3343 = vunpack.c.l.b16 %v3145
        %v3344 = vunpack.c.h.b16 %v3145
        %v3345 = vunpack.c.l.b16 %v3146
        %v3346 = vunpack.c.l.b16 %v3147
        %v3347 = vunpack.c.h.b16 %v3147
        %v3348 = vunpack.c.l.b16 %v3148
        %v3349 = vunpack.c.l.b16 %v3149
        %v3350 = vunpack.c.h.b16 %v3149
        %v3351 = vunpack.c.l.b16 %v3150
        %v3352 = vunpack.c.l.b16 %v3151
        %v3353 = vunpack.c.h.b16 %v3151
        %v3354 = vunpack.c.l.b16 %v3152
        %v3355 = vunpack.c.l.b16 %v3153
        %v3356 = vunpack.c.h.b16 %v3153
        %v3357 = vunpack.c.l.b16 %v3154
        %v3358 = vunpack.c.l.b16 %v3155
        %v3359 = vunpack.c.h.b16 %v3155
        %v3360 = vunpack.c.l.b16 %v3156
        %v3361 = vunpack.c.l.b16 %v3157
        %v3362 = vunpack.c.h.b16 %v3157
        %v3363 = vunpack.c.l.b16 %v3158
        %v3364 = vunpack.c.l.b16 %v3159
        %v3365 = vunpack.c.h.b16 %v3159
        %v3366 = vunpack.c.l.b16 %v3160
        %v3367 = vunpack.c.l.b16 %v3161
        %v3368 = vunpack.c.h.b16 %v3161
        %v3369 = vunpack.c.l.b16 %v3162
        %v3370 = vunpack.c.l.b16 %v3163
        %v3371 = vunpack.c.h.b16 %v3163
        %v3372 = vunpack.c.l.b16 %v3164
        %v3373 = vunpack.c.l.b16 %v3165
        %v3374 = vunpack.c.h.b16 %v3165
        %v3375 = vunpack.c.l.b16 %v3166
        %v3376 = vpack.c.b16 %v3283, %v3280
        %v3377 = vpack.c.b16 %v3284, %v3281
        %v3378 = vpack.c.b16 %v3285, %v3282
        %v3379 = vpack.c.b16 %v3289, %v3286
        %v3380 = vpack.c.b16 %v3290, %v3287
        %v3381 = vpack.c.b16 %v3291, %v3288
        %v3382 = vpack.c.b16 %v3295, %v3292
        %v3383 = vpack.c.b16 %v3296, %v3293
        %v3384 = vpack.c.b16 %v3297, %v3294
        %v3385 = vpack.c.b16 %v3301, %v3298
        %v3386 = vpack.c.b16 %v3302, %v3299
        %v3387 = vpack.c.b16 %v3303, %v3300
        %v3388 = vpack.c.b16 %v3307, %v3304
        %v3389 = vpack.c.b16 %v3308, %v3305
        %v3390 = vpack.c.b16 %v3309, %v3306
        %v3391 = vpack.c.b16 %v3313, %v3310
        %v3392 = vpack.c.b16 %v3314, %v3311
        %v3393 = vpack.c.b16 %v3315, %v3312
        %v3394 = vpack.c.b16 %v3319, %v3316
        %v3395 = vpack.c.b16 %v3320, %v3317
        %v3396 = vpack.c.b16 %v3321, %v3318
        %v3397 = vpack.c.b16 %v3325, %v3322
        %v3398 = vpack.c.b16 %v3326, %v3323
        %v3399 = vpack.c.b16 %v3327, %v3324
        %v3400 = vpack.c.b16 %v3331, %v3328
        %v3401 = vpack.c.b16 %v3332, %v3329
        %v3402 = vpack.c.b16 %v3333, %v3330
        %v3403 = vpack.c.b16 %v3337, %v3334
        %v3404 = vpack.c.b16 %v3338, %v3335
        %v3405 = vpack.c.b16 %v3339, %v3336
        %v3406 = vpack.c.b16 %v3343, %v3340
        %v3407 = vpack.c.b16 %v3344, %v3341
        %v3408 = vpack.c.b16 %v3345, %v3342
        %v3409 = vpack.c.b16 %v3349, %v3346
        %v3410 = vpack.c.b16 %v3350, %v3347
        %v3411 = vpack.c.b16 %v3351, %v3348
        %v3412 = vpack.c.b16 %v3355, %v3352
        %v3413 = vpack.c.b16 %v3356, %v3353
        %v3414 = vpack.c.b16 %v3357, %v3354
        %v3415 = vpack.c.b16 %v3361, %v3358
        %v3416 = vpack.c.b16 %v3362, %v3359
        %v3417 = vpack.c.b16 %v3363, %v3360
        %v3418 = vpack.c.b16 %v3367, %v3364
        %v3419 = vpack.c.b16 %v3368, %v3365
        %v3420 = vpack.c.b16 %v3369, %v3366
        %v3421 = vpack.c.b16 %v3373, %v3370
        %v3422 = vpack.c.b16 %v3374, %v3371
        %v3423 = vpack.c.b16 %v3375, %v3372
        %v3520 = vunpack.c.l.b16 %v3168
        %v3521 = vunpack.c.l.b16 %v3169
        %v3522 = vunpack.c.l.b16 %v3170
        %v3523 = vunpack.c.l.b16 %v3171
        %v3524 = vunpack.c.l.b16 %v3172
        %v3525 = vunpack.c.l.b16 %v3173
        %v3526 = vunpack.c.l.b16 %v3174
        %v3527 = vunpack.c.l.b16 %v3175
        %v3528 = vunpack.c.l.b16 %v3176
        %v3529 = vunpack.c.l.b16 %v3177
        %v3530 = vunpack.c.l.b16 %v3178
        %v3531 = vunpack.c.l.b16 %v3179
        %v3532 = vunpack.c.l.b16 %v3180
        %v3533 = vunpack.c.l.b16 %v3181
        %v3534 = vunpack.c.l.b16 %v3182
        %v3535 = vunpack.c.l.b16 %v3183
        %v3536 = vunpack.c.l.b16 %v3184
        %v3537 = vunpack.c.l.b16 %v3185
        %v3538 = vunpack.c.l.b16 %v3186
        %v3539 = vunpack.c.l.b16 %v3187
        %v3540 = vunpack.c.l.b16 %v3188
        %v3541 = vunpack.c.l.b16 %v3189
        %v3542 = vunpack.c.l.b16 %v3190
        %v3543 = vunpack.c.l.b16 %v3191
        %v3544 = vunpack.c.l.b16 %v3192
        %v3545 = vunpack.c.l.b16 %v3193
        %v3546 = vunpack.c.l.b16 %v3194
        %v3547 = vunpack.c.l.b16 %v3195
        %v3548 = vunpack.c.l.b16 %v3196
        %v3549 = vunpack.c.l.b16 %v3197
        %v3550 = vunpack.c.l.b16 %v3198
        %v3551 = vunpack.c.l.b16 %v3199
        %v3552 = vunpack.c.l.b16 %v3200
        %v3553 = vunpack.c.l.b16 %v3201
        %v3554 = vunpack.c.l.b16 %v3202
        %v3555 = vunpack.c.l.b16 %v3203
        %v3556 = vunpack.c.l.b16 %v3204
        %v3557 = vunpack.c.l.b16 %v3205
        %v3558 = vunpack.c.l.b16 %v3206
        %v3559 = vunpack.c.l.b16 %v3207
        %v3560 = vunpack.c.l.b16 %v3208
        %v3561 = vunpack.c.l.b16 %v3209
        %v3562 = vunpack.c.l.b16 %v3210
        %v3563 = vunpack.c.l.b16 %v3211
        %v3564 = vunpack.c.l.b16 %v3212
        %v3565 = vunpack.c.l.b16 %v3213
        %v3566 = vunpack.c.l.b16 %v3214
        %v3567 = vunpack.c.l.b16 %v3215
        %v3568 = vpack.c.b16 %v3521, %v3520
        %v3569 = vpack.c.b16 %v3523, %v3522
        %v3570 = vpack.c.b16 %v3525, %v3524
        %v3571 = vpack.c.b16 %v3527, %v3526
        %v3572 = vpack.c.b16 %v3529, %v3528
        %v3573 = vpack.c.b16 %v3531, %v3530
        %v3574 = vpack.c.b16 %v3533, %v3532
        %v3575 = vpack.c.b16 %v3535, %v3534
        %v3576 = vpack.c.b16 %v3537, %v3536
        %v3577 = vpack.c.b16 %v3539, %v3538
        %v3578 = vpack.c.b16 %v3541, %v3540
        %v3579 = vpack.c.b16 %v3543, %v3542
        %v3580 = vpack.c.b16 %v3545, %v3544
        %v3581 = vpack.c.b16 %v3547, %v3546
        %v3582 = vpack.c.b16 %v3549, %v3548
        %v3583 = vpack.c.b16 %v3551, %v3550
        %v3584 = vpack.c.b16 %v3553, %v3552
        %v3585 = vpack.c.b16 %v3555, %v3554
        %v3586 = vpack.c.b16 %v3557, %v3556
        %v3587 = vpack.c.b16 %v3559, %v3558
        %v3588 = vpack.c.b16 %v3561, %v3560
        %v3589 = vpack.c.b16 %v3563, %v3562
        %v3590 = vpack.c.b16 %v3565, %v3564
        %v3591 = vpack.c.b16 %v3567, %v3566
        %3616 = vmatprep.subr.bf16.mxu0 0
        %3617 = vmatpush1.bf16.msra.mxu0 %v3575
        %3618 = vmatprep.subr.bf16.mxu0 0
        %3619 = vmatpush1.bf16.msra.mxu0 %v3574
        %3620 = vmatprep.subr.bf16.mxu0 0
        %3621 = vmatpush1.bf16.msra.mxu0 %v3573
        %3622 = vmatprep.subr.bf16.mxu0 0
        %3623 = vmatpush1.bf16.msra.mxu0 %v3572
        %3624 = vmatprep.subr.bf16.mxu0 0
        %3625 = vmatpush1.bf16.msra.mxu0 %v3571
        %3626 = vmatprep.subr.bf16.mxu0 0
        %3627 = vmatpush1.bf16.msra.mxu0 %v3570
        %3628 = vmatprep.subr.bf16.mxu0 0
        %3629 = vmatpush1.bf16.msra.mxu0 %v3569
        %3630 = vmatprep.subr.bf16.mxu0 0
        %3631 = vmatpush1.bf16.msra.mxu0 %v3568
        %3632 = vmatprep.subr.bf16.mxu0 0
        %3633 = vmatpush2.bf16.msra.mxu0 %v3583
        %3634 = vmatprep.subr.bf16.mxu0 0
        %3635 = vmatpush2.bf16.msra.mxu0 %v3582
        %3636 = vmatprep.subr.bf16.mxu0 0
        %3637 = vmatpush2.bf16.msra.mxu0 %v3581
        %3638 = vmatprep.subr.bf16.mxu0 0
        %3639 = vmatpush2.bf16.msra.mxu0 %v3580
        %3640 = vmatprep.subr.bf16.mxu0 0
        %3641 = vmatpush2.bf16.msra.mxu0 %v3579
        %3642 = vmatprep.subr.bf16.mxu0 0
        %3643 = vmatpush2.bf16.msra.mxu0 %v3578
        %3644 = vmatprep.subr.bf16.mxu0 0
        %3645 = vmatpush2.bf16.msra.mxu0 %v3577
        %3646 = vmatprep.subr.bf16.mxu0 0
        %3647 = vmatpush2.bf16.msra.mxu0 %v3576
        %3648 = vmatprep.mubr.bf16.mxu0 %v3377
        %3649 = vmatmul.mubr.bf16.gmra.mxu0 %v3376
        %v3650 = vpop.f32.mrf.mxu0
        %v3651 = vadd.f32 0.0, %v3650
        %v3652 = vpop.f32.mrf.mxu0
        %v3653 = vpop.f32.mrf.mxu0
        %v3654 = vadd.f32 0.0, %v3653
        %v3655 = vpop.f32.mrf.mxu0
        %3656 = vmatprep.mubr.bf16.mxu0 %v3380
        %3657 = vmatmul.mubr.bf16.gmra.mxu0 %v3379
        %v3658 = vpop.f32.mrf.mxu0
        %v3659 = vadd.f32 0.0, %v3658
        %v3660 = vpop.f32.mrf.mxu0
        %v3661 = vpop.f32.mrf.mxu0
        %v3662 = vadd.f32 0.0, %v3661
        %v3663 = vpop.f32.mrf.mxu0
        %3664 = vmatprep.mubr.bf16.mxu0 %v3383
        %3665 = vmatmul.mubr.bf16.gmra.mxu0 %v3382
        %v3666 = vpop.f32.mrf.mxu0
        %v3667 = vadd.f32 0.0, %v3666
        %v3668 = vpop.f32.mrf.mxu0
        %v3669 = vpop.f32.mrf.mxu0
        %v3670 = vadd.f32 0.0, %v3669
        %v3671 = vpop.f32.mrf.mxu0
        %3672 = vmatprep.mubr.bf16.mxu0 %v3386
        %3673 = vmatmul.mubr.bf16.gmra.mxu0 %v3385
        %v3674 = vpop.f32.mrf.mxu0
        %v3675 = vadd.f32 0.0, %v3674
        %v3676 = vpop.f32.mrf.mxu0
        %v3677 = vpop.f32.mrf.mxu0
        %v3678 = vadd.f32 0.0, %v3677
        %v3679 = vpop.f32.mrf.mxu0
        %3680 = vmatprep.mubr.bf16.mxu0 %v3389
        %3681 = vmatmul.mubr.bf16.gmra.mxu0 %v3388
        %v3682 = vpop.f32.mrf.mxu0
        %v3683 = vadd.f32 0.0, %v3682
        %v3684 = vpop.f32.mrf.mxu0
        %v3685 = vpop.f32.mrf.mxu0
        %v3686 = vadd.f32 0.0, %v3685
        %v3687 = vpop.f32.mrf.mxu0
        %3688 = vmatprep.mubr.bf16.mxu0 %v3392
        %3689 = vmatmul.mubr.bf16.gmra.mxu0 %v3391
        %v3690 = vpop.f32.mrf.mxu0
        %v3691 = vadd.f32 0.0, %v3690
        %v3692 = vpop.f32.mrf.mxu0
        %v3693 = vpop.f32.mrf.mxu0
        %v3694 = vadd.f32 0.0, %v3693
        %v3695 = vpop.f32.mrf.mxu0
        %3696 = vmatprep.mubr.bf16.mxu0 %v3395
        %3697 = vmatmul.mubr.bf16.gmra.mxu0 %v3394
        %v3698 = vpop.f32.mrf.mxu0
        %v3699 = vadd.f32 0.0, %v3698
        %v3700 = vpop.f32.mrf.mxu0
        %v3701 = vpop.f32.mrf.mxu0
        %v3702 = vadd.f32 0.0, %v3701
        %v3703 = vpop.f32.mrf.mxu0
        %3704 = vmatprep.mubr.bf16.mxu0 %v3398
        %3705 = vmatmul.mubr.bf16.gmra.mxu0 %v3397
        %v3706 = vpop.f32.mrf.mxu0
        %v3707 = vadd.f32 0.0, %v3706
        %v3708 = vpop.f32.mrf.mxu0
        %v3709 = vpop.f32.mrf.mxu0
        %v3710 = vadd.f32 0.0, %v3709
        %v3711 = vpop.f32.mrf.mxu0
        %3712 = vmatprep.mubr.bf16.mxu0 %v3401
        %3713 = vmatmul.mubr.bf16.gmra.mxu0 %v3400
        %v3714 = vpop.f32.mrf.mxu0
        %v3715 = vadd.f32 0.0, %v3714
        %v3716 = vpop.f32.mrf.mxu0
        %v3717 = vpop.f32.mrf.mxu0
        %v3718 = vadd.f32 0.0, %v3717
        %v3719 = vpop.f32.mrf.mxu0
        %3720 = vmatprep.mubr.bf16.mxu0 %v3404
        %3721 = vmatmul.mubr.bf16.gmra.mxu0 %v3403
        %v3722 = vpop.f32.mrf.mxu0
        %v3723 = vadd.f32 0.0, %v3722
        %v3724 = vpop.f32.mrf.mxu0
        %v3725 = vpop.f32.mrf.mxu0
        %v3726 = vadd.f32 0.0, %v3725
        %v3727 = vpop.f32.mrf.mxu0
        %3728 = vmatprep.mubr.bf16.mxu0 %v3407
        %3729 = vmatmul.mubr.bf16.gmra.mxu0 %v3406
        %v3730 = vpop.f32.mrf.mxu0
        %v3731 = vadd.f32 0.0, %v3730
        %v3732 = vpop.f32.mrf.mxu0
        %v3733 = vpop.f32.mrf.mxu0
        %v3734 = vadd.f32 0.0, %v3733
        %v3735 = vpop.f32.mrf.mxu0
        %3736 = vmatprep.mubr.bf16.mxu0 %v3410
        %3737 = vmatmul.mubr.bf16.gmra.mxu0 %v3409
        %v3738 = vpop.f32.mrf.mxu0
        %v3739 = vadd.f32 0.0, %v3738
        %v3740 = vpop.f32.mrf.mxu0
        %v3741 = vpop.f32.mrf.mxu0
        %v3742 = vadd.f32 0.0, %v3741
        %v3743 = vpop.f32.mrf.mxu0
        %3744 = vmatprep.mubr.bf16.mxu0 %v3413
        %3745 = vmatmul.mubr.bf16.gmra.mxu0 %v3412
        %v3746 = vpop.f32.mrf.mxu0
        %v3747 = vadd.f32 0.0, %v3746
        %v3748 = vpop.f32.mrf.mxu0
        %v3749 = vpop.f32.mrf.mxu0
        %v3750 = vadd.f32 0.0, %v3749
        %v3751 = vpop.f32.mrf.mxu0
        %3752 = vmatprep.mubr.bf16.mxu0 %v3416
        %3753 = vmatmul.mubr.bf16.gmra.mxu0 %v3415
        %v3754 = vpop.f32.mrf.mxu0
        %v3755 = vadd.f32 0.0, %v3754
        %v3756 = vpop.f32.mrf.mxu0
        %v3757 = vpop.f32.mrf.mxu0
        %v3758 = vadd.f32 0.0, %v3757
        %v3759 = vpop.f32.mrf.mxu0
        %3760 = vmatprep.mubr.bf16.mxu0 %v3419
        %3761 = vmatmul.mubr.bf16.gmra.mxu0 %v3418
        %v3762 = vpop.f32.mrf.mxu0
        %v3763 = vadd.f32 0.0, %v3762
        %v3764 = vpop.f32.mrf.mxu0
        %v3765 = vpop.f32.mrf.mxu0
        %v3766 = vadd.f32 0.0, %v3765
        %v3767 = vpop.f32.mrf.mxu0
        %3768 = vmatprep.mubr.bf16.mxu0 %v3422
        %3769 = vmatmul.mubr.bf16.gmra.mxu0 %v3421
        %v3770 = vpop.f32.mrf.mxu0
        %v3771 = vadd.f32 0.0, %v3770
        %v3772 = vpop.f32.mrf.mxu0
        %v3773 = vpop.f32.mrf.mxu0
        %v3774 = vadd.f32 0.0, %v3773
        %v3775 = vpop.f32.mrf.mxu0
        %3776 = vdwg.mxu0
        %3777 = vmatprep.subr.bf16.mxu0 0
        %3778 = vmatpush1.bf16.msra.mxu0 %v3591
        %3779 = vmatprep.subr.bf16.mxu0 0
        %3780 = vmatpush1.bf16.msra.mxu0 %v3590
        %3781 = vmatprep.subr.bf16.mxu0 0
        %3782 = vmatpush1.bf16.msra.mxu0 %v3589
        %3783 = vmatprep.subr.bf16.mxu0 0
        %3784 = vmatpush1.bf16.msra.mxu0 %v3588
        %3785 = vmatprep.subr.bf16.mxu0 0
        %3786 = vmatpush1.bf16.msra.mxu0 %v3587
        %3787 = vmatprep.subr.bf16.mxu0 0
        %3788 = vmatpush1.bf16.msra.mxu0 %v3586
        %3789 = vmatprep.subr.bf16.mxu0 0
        %3790 = vmatpush1.bf16.msra.mxu0 %v3585
        %3791 = vmatprep.subr.bf16.mxu0 0
        %3792 = vmatpush1.bf16.msra.mxu0 %v3584
        %3793 = vmatprep.subr.bf16.mxu0 0
        %3794 = vmatpush2.bf16.msra.mxu0 0
        %3795 = vmatprep.subr.bf16.mxu0 0
        %3796 = vmatpush2.bf16.msra.mxu0 0
        %3797 = vmatprep.subr.bf16.mxu0 0
        %3798 = vmatpush2.bf16.msra.mxu0 0
        %3799 = vmatprep.subr.bf16.mxu0 0
        %3800 = vmatpush2.bf16.msra.mxu0 0
        %3801 = vmatprep.subr.bf16.mxu0 0
        %3802 = vmatpush2.bf16.msra.mxu0 0
        %3803 = vmatprep.subr.bf16.mxu0 0
        %3804 = vmatpush2.bf16.msra.mxu0 0
        %3805 = vmatprep.subr.bf16.mxu0 0
        %3806 = vmatpush2.bf16.msra.mxu0 0
        %3807 = vmatprep.subr.bf16.mxu0 0
        %3808 = vmatpush2.bf16.msra.mxu0 0
        %3809 = vmatprep.mubr.bf16.mxu0 0
        %3810 = vmatmul.mubr.bf16.gmra.mxu0 %v3378
        %v3811 = vpop.f32.mrf.mxu0
        %v3812 = vadd.f32 %v3651, %v3811
        %v3813 = vpop.f32.mrf.mxu0
        %v3814 = vpop.f32.mrf.mxu0
        %v3815 = vadd.f32 %v3654, %v3814
        %v3816 = vpop.f32.mrf.mxu0
        %3817 = vmatprep.mubr.bf16.mxu0 0
        %3818 = vmatmul.mubr.bf16.gmra.mxu0 %v3381
        %v3819 = vpop.f32.mrf.mxu0
        %v3820 = vadd.f32 %v3659, %v3819
        %v3821 = vpop.f32.mrf.mxu0
        %v3822 = vpop.f32.mrf.mxu0
        %v3823 = vadd.f32 %v3662, %v3822
        %v3824 = vpop.f32.mrf.mxu0
        %3825 = vmatprep.mubr.bf16.mxu0 0
        %3826 = vmatmul.mubr.bf16.gmra.mxu0 %v3384
        %v3827 = vpop.f32.mrf.mxu0
        %v3828 = vadd.f32 %v3667, %v3827
        %v3829 = vpop.f32.mrf.mxu0
        %v3830 = vpop.f32.mrf.mxu0
        %v3831 = vadd.f32 %v3670, %v3830
        %v3832 = vpop.f32.mrf.mxu0
        %3833 = vmatprep.mubr.bf16.mxu0 0
        %3834 = vmatmul.mubr.bf16.gmra.mxu0 %v3387
        %v3835 = vpop.f32.mrf.mxu0
        %v3836 = vadd.f32 %v3675, %v3835
        %v3837 = vpop.f32.mrf.mxu0
        %v3838 = vpop.f32.mrf.mxu0
        %v3839 = vadd.f32 %v3678, %v3838
        %v3840 = vpop.f32.mrf.mxu0
        %3841 = vmatprep.mubr.bf16.mxu0 0
        %3842 = vmatmul.mubr.bf16.gmra.mxu0 %v3390
        %v3843 = vpop.f32.mrf.mxu0
        %v3844 = vadd.f32 %v3683, %v3843
        %v3845 = vpop.f32.mrf.mxu0
        %v3846 = vpop.f32.mrf.mxu0
        %v3847 = vadd.f32 %v3686, %v3846
        %v3848 = vpop.f32.mrf.mxu0
        %3849 = vmatprep.mubr.bf16.mxu0 0
        %3850 = vmatmul.mubr.bf16.gmra.mxu0 %v3393
        %v3851 = vpop.f32.mrf.mxu0
        %v3852 = vadd.f32 %v3691, %v3851
        %v3853 = vpop.f32.mrf.mxu0
        %v3854 = vpop.f32.mrf.mxu0
        %v3855 = vadd.f32 %v3694, %v3854
        %v3856 = vpop.f32.mrf.mxu0
        %3857 = vmatprep.mubr.bf16.mxu0 0
        %3858 = vmatmul.mubr.bf16.gmra.mxu0 %v3396
        %v3859 = vpop.f32.mrf.mxu0
        %v3860 = vadd.f32 %v3699, %v3859
        %v3861 = vpop.f32.mrf.mxu0
        %v3862 = vpop.f32.mrf.mxu0
        %v3863 = vadd.f32 %v3702, %v3862
        %v3864 = vpop.f32.mrf.mxu0
        %3865 = vmatprep.mubr.bf16.mxu0 0
        %3866 = vmatmul.mubr.bf16.gmra.mxu0 %v3399
        %v3867 = vpop.f32.mrf.mxu0
        %v3868 = vadd.f32 %v3707, %v3867
        %v3869 = vpop.f32.mrf.mxu0
        %v3870 = vpop.f32.mrf.mxu0
        %v3871 = vadd.f32 %v3710, %v3870
        %v3872 = vpop.f32.mrf.mxu0
        %3873 = vmatprep.mubr.bf16.mxu0 0
        %3874 = vmatmul.mubr.bf16.gmra.mxu0 %v3402
        %v3875 = vpop.f32.mrf.mxu0
        %v3876 = vadd.f32 %v3715, %v3875
        %v3877 = vpop.f32.mrf.mxu0
        %v3878 = vpop.f32.mrf.mxu0
        %v3879 = vadd.f32 %v3718, %v3878
        %v3880 = vpop.f32.mrf.mxu0
        %3881 = vmatprep.mubr.bf16.mxu0 0
        %3882 = vmatmul.mubr.bf16.gmra.mxu0 %v3405
        %v3883 = vpop.f32.mrf.mxu0
        %v3884 = vadd.f32 %v3723, %v3883
        %v3885 = vpop.f32.mrf.mxu0
        %v3886 = vpop.f32.mrf.mxu0
        %v3887 = vadd.f32 %v3726, %v3886
        %v3888 = vpop.f32.mrf.mxu0
        %3889 = vmatprep.mubr.bf16.mxu0 0
        %3890 = vmatmul.mubr.bf16.gmra.mxu0 %v3408
        %v3891 = vpop.f32.mrf.mxu0
        %v3892 = vadd.f32 %v3731, %v3891
        %v3893 = vpop.f32.mrf.mxu0
        %v3894 = vpop.f32.mrf.mxu0
        %v3895 = vadd.f32 %v3734, %v3894
        %v3896 = vpop.f32.mrf.mxu0
        %3897 = vmatprep.mubr.bf16.mxu0 0
        %3898 = vmatmul.mubr.bf16.gmra.mxu0 %v3411
        %v3899 = vpop.f32.mrf.mxu0
        %v3900 = vadd.f32 %v3739, %v3899
        %v3901 = vpop.f32.mrf.mxu0
        %v3902 = vpop.f32.mrf.mxu0
        %v3903 = vadd.f32 %v3742, %v3902
        %v3904 = vpop.f32.mrf.mxu0
        %3905 = vmatprep.mubr.bf16.mxu0 0
        %3906 = vmatmul.mubr.bf16.gmra.mxu0 %v3414
        %v3907 = vpop.f32.mrf.mxu0
        %v3908 = vadd.f32 %v3747, %v3907
        %v3909 = vpop.f32.mrf.mxu0
        %v3910 = vpop.f32.mrf.mxu0
        %v3911 = vadd.f32 %v3750, %v3910
        %v3912 = vpop.f32.mrf.mxu0
        %3913 = vmatprep.mubr.bf16.mxu0 0
        %3914 = vmatmul.mubr.bf16.gmra.mxu0 %v3417
        %v3915 = vpop.f32.mrf.mxu0
        %v3916 = vadd.f32 %v3755, %v3915
        %v3917 = vpop.f32.mrf.mxu0
        %v3918 = vpop.f32.mrf.mxu0
        %v3919 = vadd.f32 %v3758, %v3918
        %v3920 = vpop.f32.mrf.mxu0
        %3921 = vmatprep.mubr.bf16.mxu0 0
        %3922 = vmatmul.mubr.bf16.gmra.mxu0 %v3420
        %v3923 = vpop.f32.mrf.mxu0
        %v3924 = vadd.f32 %v3763, %v3923
        %v3925 = vpop.f32.mrf.mxu0
        %v3926 = vpop.f32.mrf.mxu0
        %v3927 = vadd.f32 %v3766, %v3926
        %v3928 = vpop.f32.mrf.mxu0
        %3929 = vmatprep.mubr.bf16.mxu0 0
        %3930 = vmatmul.mubr.bf16.gmra.mxu0 %v3423
        %v3931 = vpop.f32.mrf.mxu0
        %v3932 = vadd.f32 %v3771, %v3931
        %v3933 = vpop.f32.mrf.mxu0
        %v3934 = vpop.f32.mrf.mxu0
        %v3935 = vadd.f32 %v3774, %v3934
        %v3936 = vpop.f32.mrf.mxu0
        %3937 = vdwg.mxu0
        %v3938 = vadd.f32 %v2976, %v3812
        %v3939 = vadd.f32 %v2979, %v3815
        %v3940 = vadd.f32 %v2984, %v3820
        %v3941 = vadd.f32 %v2987, %v3823
        %v3942 = vadd.f32 %v2992, %v3828
        %v3943 = vadd.f32 %v2995, %v3831
        %v3944 = vadd.f32 %v3000, %v3836
        %v3945 = vadd.f32 %v3003, %v3839
        %v3946 = vadd.f32 %v3008, %v3844
        %v3947 = vadd.f32 %v3011, %v3847
        %v3948 = vadd.f32 %v3016, %v3852
        %v3949 = vadd.f32 %v3019, %v3855
        %v3950 = vadd.f32 %v3024, %v3860
        %v3951 = vadd.f32 %v3027, %v3863
        %v3952 = vadd.f32 %v3032, %v3868
        %v3953 = vadd.f32 %v3035, %v3871
        %v3954 = vadd.f32 %v3040, %v3876
        %v3955 = vadd.f32 %v3043, %v3879
        %v3956 = vadd.f32 %v3048, %v3884
        %v3957 = vadd.f32 %v3051, %v3887
        %v3958 = vadd.f32 %v3056, %v3892
        %v3959 = vadd.f32 %v3059, %v3895
        %v3960 = vadd.f32 %v3064, %v3900
        %v3961 = vadd.f32 %v3067, %v3903
        %v3962 = vadd.f32 %v3072, %v3908
        %v3963 = vadd.f32 %v3075, %v3911
        %v3964 = vadd.f32 %v3080, %v3916
        %v3965 = vadd.f32 %v3083, %v3919
        %v3966 = vadd.f32 %v3088, %v3924
        %v3967 = vadd.f32 %v3091, %v3927
        %v3968 = vadd.f32 %v3096, %v3932
        %v3969 = vadd.f32 %v3099, %v3935
        %v3970 = vld [vmem:[%s5] sm:$0x1]
        %v3972 = vlaneseq
        %v3973 = vshrl.u32 %v3972, 7
        %v3974 = vsub.s32 0, %v3973
        %v3975 = vrot.slane %v3970, %v3974
        %v3977 = vadd.f32 %v3938, %v3975
        %v3978 = vadd.f32 %v3939, %v3975
        %v3979 = vadd.f32 %v3940, %v3975
        %v3980 = vadd.f32 %v3941, %v3975
        %v3981 = vadd.f32 %v3942, %v3975
        %v3982 = vadd.f32 %v3943, %v3975
        %v3983 = vadd.f32 %v3944, %v3975
        %v3984 = vadd.f32 %v3945, %v3975
        %v3985 = vadd.f32 %v3946, %v3975
        %v3986 = vadd.f32 %v3947, %v3975
        %v3987 = vadd.f32 %v3948, %v3975
        %v3988 = vadd.f32 %v3949, %v3975
        %v3989 = vadd.f32 %v3950, %v3975
        %v3990 = vadd.f32 %v3951, %v3975
        %v3991 = vadd.f32 %v3952, %v3975
        %v3992 = vadd.f32 %v3953, %v3975
        %v3993 = vadd.f32 %v3954, %v3975
        %v3994 = vadd.f32 %v3955, %v3975
        %v3995 = vadd.f32 %v3956, %v3975
        %v3996 = vadd.f32 %v3957, %v3975
        %v3997 = vadd.f32 %v3958, %v3975
        %v3998 = vadd.f32 %v3959, %v3975
        %v3999 = vadd.f32 %v3960, %v3975
        %v4000 = vadd.f32 %v3961, %v3975
        %v4001 = vadd.f32 %v3962, %v3975
        %v4002 = vadd.f32 %v3963, %v3975
        %v4003 = vadd.f32 %v3964, %v3975
        %v4004 = vadd.f32 %v3965, %v3975
        %v4005 = vadd.f32 %v3966, %v3975
        %v4006 = vadd.f32 %v3967, %v3975
        %v4007 = vadd.f32 %v3968, %v3975
        %v4008 = vadd.f32 %v3969, %v3975
        %v4009 = vmax.f32 %v3977, 0.0
        %v4010 = vmax.f32 %v3978, 0.0
        %v4011 = vmax.f32 %v3979, 0.0
        %v4012 = vmax.f32 %v3980, 0.0
        %v4013 = vmax.f32 %v3981, 0.0
        %v4014 = vmax.f32 %v3982, 0.0
        %v4015 = vmax.f32 %v3983, 0.0
        %v4016 = vmax.f32 %v3984, 0.0
        %v4017 = vmax.f32 %v3985, 0.0
        %v4018 = vmax.f32 %v3986, 0.0
        %v4019 = vmax.f32 %v3987, 0.0
        %v4020 = vmax.f32 %v3988, 0.0
        %v4021 = vmax.f32 %v3989, 0.0
        %v4022 = vmax.f32 %v3990, 0.0
        %v4023 = vmax.f32 %v3991, 0.0
        %v4024 = vmax.f32 %v3992, 0.0
        %v4025 = vmax.f32 %v3993, 0.0
        %v4026 = vmax.f32 %v3994, 0.0
        %v4027 = vmax.f32 %v3995, 0.0
        %v4028 = vmax.f32 %v3996, 0.0
        %v4029 = vmax.f32 %v3997, 0.0
        %v4030 = vmax.f32 %v3998, 0.0
        %v4031 = vmax.f32 %v3999, 0.0
        %v4032 = vmax.f32 %v4000, 0.0
        %v4033 = vmax.f32 %v4001, 0.0
        %v4034 = vmax.f32 %v4002, 0.0
        %v4035 = vmax.f32 %v4003, 0.0
        %v4036 = vmax.f32 %v4004, 0.0
        %v4037 = vmax.f32 %v4005, 0.0
        %v4038 = vmax.f32 %v4006, 0.0
        %v4039 = vmax.f32 %v4007, 0.0
        %v4040 = vmax.f32 %v4008, 0.0
        %v4041 = vpack.c.bf16 %v4010, %v4009
        %v4042 = vpack.c.bf16 %v4012, %v4011
        %v4043 = vpack.c.bf16 %v4014, %v4013
        %v4044 = vpack.c.bf16 %v4016, %v4015
        %v4045 = vpack.c.bf16 %v4018, %v4017
        %v4046 = vpack.c.bf16 %v4020, %v4019
        %v4047 = vpack.c.bf16 %v4022, %v4021
        %v4048 = vpack.c.bf16 %v4024, %v4023
        %v4049 = vpack.c.bf16 %v4026, %v4025
        %v4050 = vpack.c.bf16 %v4028, %v4027
        %v4051 = vpack.c.bf16 %v4030, %v4029
        %v4052 = vpack.c.bf16 %v4032, %v4031
        %v4053 = vpack.c.bf16 %v4034, %v4033
        %v4054 = vpack.c.bf16 %v4036, %v4035
        %v4055 = vpack.c.bf16 %v4038, %v4037
        %v4056 = vpack.c.bf16 %v4040, %v4039
        %v4057 = vld [vmem:[#allocation9] sm:$0xf]
        %v4058 = vld [vmem:[#allocation9 + $0x4] sm:$0xf]
        %v4059 = vld [vmem:[#allocation9 + $0x8] sm:$0xf]
        %v4060 = vld [vmem:[#allocation9 + $0xc] sm:$0xf]
        %v4061 = vld [vmem:[#allocation9 + $0x10] sm:$0xf]
        %v4062 = vld [vmem:[#allocation9 + $0x14] sm:$0xf]
        %v4063 = vld [vmem:[#allocation9 + $0x18] sm:$0xf]
        %v4064 = vld [vmem:[#allocation9 + $0x1c] sm:$0xf]
        %v4065 = vld [vmem:[#allocation9 + $0x20] sm:$0xf]
        %v4066 = vld [vmem:[#allocation9 + $0x24] sm:$0xf]
        %v4067 = vld [vmem:[#allocation9 + $0x28] sm:$0xf]
        %v4068 = vld [vmem:[#allocation9 + $0x2c] sm:$0xf]
        %v4069 = vld [vmem:[#allocation9 + $0x30] sm:$0xf]
        %v4070 = vld [vmem:[#allocation9 + $0x34] sm:$0xf]
        %v4071 = vld [vmem:[#allocation9 + $0x38] sm:$0xf]
        %v4072 = vld [vmem:[#allocation9 + $0x3c] sm:$0xf]
        %v4073 = vld [vmem:[%s6] sm:$0x1]
        %v4075 = vlaneseq
        %v4076 = vshrl.u32 %v4075, 7
        %v4077 = vsub.s32 0, %v4076
        %v4078 = vrot.slane %v4073, %v4077
        %v4096 = vunpack.c.l.b16 %v4057
        %v4097 = vunpack.c.l.b16 %v4058
        %v4098 = vunpack.c.l.b16 %v4059
        %v4099 = vunpack.c.l.b16 %v4060
        %v4100 = vunpack.c.l.b16 %v4061
        %v4101 = vunpack.c.l.b16 %v4062
        %v4102 = vunpack.c.l.b16 %v4063
        %v4103 = vunpack.c.l.b16 %v4064
        %v4104 = vunpack.c.l.b16 %v4065
        %v4105 = vunpack.c.l.b16 %v4066
        %v4106 = vunpack.c.l.b16 %v4067
        %v4107 = vunpack.c.l.b16 %v4068
        %v4108 = vunpack.c.l.b16 %v4069
        %v4109 = vunpack.c.l.b16 %v4070
        %v4110 = vunpack.c.l.b16 %v4071
        %v4111 = vunpack.c.l.b16 %v4072
        %v4112 = vpack.c.b16 %v4097, %v4096
        %v4113 = vpack.c.b16 %v4099, %v4098
        %v4114 = vpack.c.b16 %v4101, %v4100
        %v4115 = vpack.c.b16 %v4103, %v4102
        %v4116 = vpack.c.b16 %v4105, %v4104
        %v4117 = vpack.c.b16 %v4107, %v4106
        %v4118 = vpack.c.b16 %v4109, %v4108
        %v4119 = vpack.c.b16 %v4111, %v4110
        %4128 = vmatprep.subr.bf16.mxu0 0
        %4129 = vmatpush1.bf16.msra.mxu0 %v4119
        %4130 = vmatprep.subr.bf16.mxu0 0
        %4131 = vmatpush1.bf16.msra.mxu0 %v4118
        %4132 = vmatprep.subr.bf16.mxu0 0
        %4133 = vmatpush1.bf16.msra.mxu0 %v4117
        %4134 = vmatprep.subr.bf16.mxu0 0
        %4135 = vmatpush1.bf16.msra.mxu0 %v4116
        %4136 = vmatprep.subr.bf16.mxu0 0
        %4137 = vmatpush1.bf16.msra.mxu0 %v4115
        %4138 = vmatprep.subr.bf16.mxu0 0
        %4139 = vmatpush1.bf16.msra.mxu0 %v4114
        %4140 = vmatprep.subr.bf16.mxu0 0
        %4141 = vmatpush1.bf16.msra.mxu0 %v4113
        %4142 = vmatprep.subr.bf16.mxu0 0
        %4143 = vmatpush1.bf16.msra.mxu0 %v4112
        %4144 = vmatprep.subr.bf16.mxu0 0
        %4145 = vmatpush2.bf16.msra.mxu0 0
        %4146 = vmatprep.subr.bf16.mxu0 0
        %4147 = vmatpush2.bf16.msra.mxu0 0
        %4148 = vmatprep.subr.bf16.mxu0 0
        %4149 = vmatpush2.bf16.msra.mxu0 0
        %4150 = vmatprep.subr.bf16.mxu0 0
        %4151 = vmatpush2.bf16.msra.mxu0 0
        %4152 = vmatprep.subr.bf16.mxu0 0
        %4153 = vmatpush2.bf16.msra.mxu0 0
        %4154 = vmatprep.subr.bf16.mxu0 0
        %4155 = vmatpush2.bf16.msra.mxu0 0
        %4156 = vmatprep.subr.bf16.mxu0 0
        %4157 = vmatpush2.bf16.msra.mxu0 0
        %4158 = vmatprep.subr.bf16.mxu0 0
        %4159 = vmatpush2.bf16.msra.mxu0 0
        %4160 = vmatprep.mubr.bf16.mxu0 0
        %4161 = vmatmul.mubr.bf16.gmra.mxu0 %v4041
        %v4162 = vpop.f32.mrf.mxu0
        %v4163 = vadd.f32 %v4078, %v4162
        %v4164 = vpop.f32.mrf.mxu0
        %v4165 = vpop.f32.mrf.mxu0
        %v4166 = vadd.f32 %v4078, %v4165
        %v4167 = vpop.f32.mrf.mxu0
        %4168 = vmatprep.mubr.bf16.mxu0 0
        %4169 = vmatmul.mubr.bf16.gmra.mxu0 %v4042
        %v4170 = vpop.f32.mrf.mxu0
        %v4171 = vadd.f32 %v4078, %v4170
        %v4172 = vpop.f32.mrf.mxu0
        %v4173 = vpop.f32.mrf.mxu0
        %v4174 = vadd.f32 %v4078, %v4173
        %v4175 = vpop.f32.mrf.mxu0
        %4176 = vmatprep.mubr.bf16.mxu0 0
        %4177 = vmatmul.mubr.bf16.gmra.mxu0 %v4043
        %v4178 = vpop.f32.mrf.mxu0
        %v4179 = vadd.f32 %v4078, %v4178
        %v4180 = vpop.f32.mrf.mxu0
        %v4181 = vpop.f32.mrf.mxu0
        %v4182 = vadd.f32 %v4078, %v4181
        %v4183 = vpop.f32.mrf.mxu0
        %4184 = vmatprep.mubr.bf16.mxu0 0
        %4185 = vmatmul.mubr.bf16.gmra.mxu0 %v4044
        %v4186 = vpop.f32.mrf.mxu0
        %v4187 = vadd.f32 %v4078, %v4186
        %v4188 = vpop.f32.mrf.mxu0
        %v4189 = vpop.f32.mrf.mxu0
        %v4190 = vadd.f32 %v4078, %v4189
        %v4191 = vpop.f32.mrf.mxu0
        %4192 = vmatprep.mubr.bf16.mxu0 0
        %4193 = vmatmul.mubr.bf16.gmra.mxu0 %v4045
        %v4194 = vpop.f32.mrf.mxu0
        %v4195 = vadd.f32 %v4078, %v4194
        %v4196 = vpop.f32.mrf.mxu0
        %v4197 = vpop.f32.mrf.mxu0
        %v4198 = vadd.f32 %v4078, %v4197
        %v4199 = vpop.f32.mrf.mxu0
        %4200 = vmatprep.mubr.bf16.mxu0 0
        %4201 = vmatmul.mubr.bf16.gmra.mxu0 %v4046
        %v4202 = vpop.f32.mrf.mxu0
        %v4203 = vadd.f32 %v4078, %v4202
        %v4204 = vpop.f32.mrf.mxu0
        %v4205 = vpop.f32.mrf.mxu0
        %v4206 = vadd.f32 %v4078, %v4205
        %v4207 = vpop.f32.mrf.mxu0
        %4208 = vmatprep.mubr.bf16.mxu0 0
        %4209 = vmatmul.mubr.bf16.gmra.mxu0 %v4047
        %v4210 = vpop.f32.mrf.mxu0
        %v4211 = vadd.f32 %v4078, %v4210
        %v4212 = vpop.f32.mrf.mxu0
        %v4213 = vpop.f32.mrf.mxu0
        %v4214 = vadd.f32 %v4078, %v4213
        %v4215 = vpop.f32.mrf.mxu0
        %4216 = vmatprep.mubr.bf16.mxu0 0
        %4217 = vmatmul.mubr.bf16.gmra.mxu0 %v4048
        %v4218 = vpop.f32.mrf.mxu0
        %v4219 = vadd.f32 %v4078, %v4218
        %v4220 = vpop.f32.mrf.mxu0
        %v4221 = vpop.f32.mrf.mxu0
        %v4222 = vadd.f32 %v4078, %v4221
        %v4223 = vpop.f32.mrf.mxu0
        %4224 = vmatprep.mubr.bf16.mxu0 0
        %4225 = vmatmul.mubr.bf16.gmra.mxu0 %v4049
        %v4226 = vpop.f32.mrf.mxu0
        %v4227 = vadd.f32 %v4078, %v4226
        %v4228 = vpop.f32.mrf.mxu0
        %v4229 = vpop.f32.mrf.mxu0
        %v4230 = vadd.f32 %v4078, %v4229
        %v4231 = vpop.f32.mrf.mxu0
        %4232 = vmatprep.mubr.bf16.mxu0 0
        %4233 = vmatmul.mubr.bf16.gmra.mxu0 %v4050
        %v4234 = vpop.f32.mrf.mxu0
        %v4235 = vadd.f32 %v4078, %v4234
        %v4236 = vpop.f32.mrf.mxu0
        %v4237 = vpop.f32.mrf.mxu0
        %v4238 = vadd.f32 %v4078, %v4237
        %v4239 = vpop.f32.mrf.mxu0
        %4240 = vmatprep.mubr.bf16.mxu0 0
        %4241 = vmatmul.mubr.bf16.gmra.mxu0 %v4051
        %v4242 = vpop.f32.mrf.mxu0
        %v4243 = vadd.f32 %v4078, %v4242
        %v4244 = vpop.f32.mrf.mxu0
        %v4245 = vpop.f32.mrf.mxu0
        %v4246 = vadd.f32 %v4078, %v4245
        %v4247 = vpop.f32.mrf.mxu0
        %4248 = vmatprep.mubr.bf16.mxu0 0
        %4249 = vmatmul.mubr.bf16.gmra.mxu0 %v4052
        %v4250 = vpop.f32.mrf.mxu0
        %v4251 = vadd.f32 %v4078, %v4250
        %v4252 = vpop.f32.mrf.mxu0
        %v4253 = vpop.f32.mrf.mxu0
        %v4254 = vadd.f32 %v4078, %v4253
        %v4255 = vpop.f32.mrf.mxu0
        %4256 = vmatprep.mubr.bf16.mxu0 0
        %4257 = vmatmul.mubr.bf16.gmra.mxu0 %v4053
        %v4258 = vpop.f32.mrf.mxu0
        %v4259 = vadd.f32 %v4078, %v4258
        %v4260 = vpop.f32.mrf.mxu0
        %v4261 = vpop.f32.mrf.mxu0
        %v4262 = vadd.f32 %v4078, %v4261
        %v4263 = vpop.f32.mrf.mxu0
        %4264 = vmatprep.mubr.bf16.mxu0 0
        %4265 = vmatmul.mubr.bf16.gmra.mxu0 %v4054
        %v4266 = vpop.f32.mrf.mxu0
        %v4267 = vadd.f32 %v4078, %v4266
        %v4268 = vpop.f32.mrf.mxu0
        %v4269 = vpop.f32.mrf.mxu0
        %v4270 = vadd.f32 %v4078, %v4269
        %v4271 = vpop.f32.mrf.mxu0
        %4272 = vmatprep.mubr.bf16.mxu0 0
        %4273 = vmatmul.mubr.bf16.gmra.mxu0 %v4055
        %v4274 = vpop.f32.mrf.mxu0
        %v4275 = vadd.f32 %v4078, %v4274
        %v4276 = vpop.f32.mrf.mxu0
        %v4277 = vpop.f32.mrf.mxu0
        %v4278 = vadd.f32 %v4078, %v4277
        %v4279 = vpop.f32.mrf.mxu0
        %4280 = vmatprep.mubr.bf16.mxu0 0
        %4281 = vmatmul.mubr.bf16.gmra.mxu0 %v4056
        %v4282 = vpop.f32.mrf.mxu0
        %v4283 = vadd.f32 %v4078, %v4282
        %v4284 = vpop.f32.mrf.mxu0
        %v4285 = vpop.f32.mrf.mxu0
        %v4286 = vadd.f32 %v4078, %v4285
        %v4287 = vpop.f32.mrf.mxu0
        %4288 = vdwg.mxu0
        %v4289 = vld [vmem:[%s298] sm:$0xf]
        %v4290 = vld [vmem:[%s298 + $0x4] sm:$0xf]
        %v4291 = vld [vmem:[%s298 + $0x8] sm:$0xf]
        %v4292 = vld [vmem:[%s298 + $0xc] sm:$0xf]
        %v4293 = vld [vmem:[%s298 + $0x10] sm:$0xf]
        %v4294 = vld [vmem:[%s298 + $0x14] sm:$0xf]
        %v4295 = vld [vmem:[%s298 + $0x18] sm:$0xf]
        %v4296 = vld [vmem:[%s298 + $0x1c] sm:$0xf]
        %v4297 = vld [vmem:[%s298 + $0x20] sm:$0xf]
        %v4298 = vld [vmem:[%s298 + $0x24] sm:$0xf]
        %v4299 = vld [vmem:[%s298 + $0x28] sm:$0xf]
        %v4300 = vld [vmem:[%s298 + $0x2c] sm:$0xf]
        %v4301 = vld [vmem:[%s298 + $0x30] sm:$0xf]
        %v4302 = vld [vmem:[%s298 + $0x34] sm:$0xf]
        %v4303 = vld [vmem:[%s298 + $0x38] sm:$0xf]
        %v4304 = vld [vmem:[%s298 + $0x3c] sm:$0xf]
        %v4305 = vld [vmem:[%s298 + $0x40] sm:$0xf]
        %v4306 = vld [vmem:[%s298 + $0x44] sm:$0xf]
        %v4307 = vld [vmem:[%s298 + $0x48] sm:$0xf]
        %v4308 = vld [vmem:[%s298 + $0x4c] sm:$0xf]
        %v4309 = vld [vmem:[%s298 + $0x50] sm:$0xf]
        %v4310 = vld [vmem:[%s298 + $0x54] sm:$0xf]
        %v4311 = vld [vmem:[%s298 + $0x58] sm:$0xf]
        %v4312 = vld [vmem:[%s298 + $0x5c] sm:$0xf]
        %v4313 = vld [vmem:[%s298 + $0x60] sm:$0xf]
        %v4314 = vld [vmem:[%s298 + $0x64] sm:$0xf]
        %v4315 = vld [vmem:[%s298 + $0x68] sm:$0xf]
        %v4316 = vld [vmem:[%s298 + $0x6c] sm:$0xf]
        %v4317 = vld [vmem:[%s298 + $0x70] sm:$0xf]
        %v4318 = vld [vmem:[%s298 + $0x74] sm:$0xf]
        %v4319 = vld [vmem:[%s298 + $0x78] sm:$0xf]
        %v4320 = vld [vmem:[%s298 + $0x7c] sm:$0xf]
        %v4321 = vunpack.c.l.bf16 %v4289
        %v4322 = vunpack.c.l.bf16 %v4290
        %v4323 = vunpack.c.l.bf16 %v4291
        %v4324 = vunpack.c.l.bf16 %v4292
        %v4325 = vunpack.c.l.bf16 %v4293
        %v4326 = vunpack.c.l.bf16 %v4294
        %v4327 = vunpack.c.l.bf16 %v4295
        %v4328 = vunpack.c.l.bf16 %v4296
        %v4329 = vunpack.c.l.bf16 %v4297
        %v4330 = vunpack.c.l.bf16 %v4298
        %v4331 = vunpack.c.l.bf16 %v4299
        %v4332 = vunpack.c.l.bf16 %v4300
        %v4333 = vunpack.c.l.bf16 %v4301
        %v4334 = vunpack.c.l.bf16 %v4302
        %v4335 = vunpack.c.l.bf16 %v4303
        %v4336 = vunpack.c.l.bf16 %v4304
        %v4337 = vunpack.c.l.bf16 %v4305
        %v4338 = vunpack.c.l.bf16 %v4306
        %v4339 = vunpack.c.l.bf16 %v4307
        %v4340 = vunpack.c.l.bf16 %v4308
        %v4341 = vunpack.c.l.bf16 %v4309
        %v4342 = vunpack.c.l.bf16 %v4310
        %v4343 = vunpack.c.l.bf16 %v4311
        %v4344 = vunpack.c.l.bf16 %v4312
        %v4345 = vunpack.c.l.bf16 %v4313
        %v4346 = vunpack.c.l.bf16 %v4314
        %v4347 = vunpack.c.l.bf16 %v4315
        %v4348 = vunpack.c.l.bf16 %v4316
        %v4349 = vunpack.c.l.bf16 %v4317
        %v4350 = vunpack.c.l.bf16 %v4318
        %v4351 = vunpack.c.l.bf16 %v4319
        %v4352 = vunpack.c.l.bf16 %v4320
        %v4353 = vadd.f32 %v4163, %v4321
        %v4354 = vadd.f32 %v4166, %v4322
        %v4355 = vadd.f32 %v4171, %v4323
        %v4356 = vadd.f32 %v4174, %v4324
        %v4357 = vadd.f32 %v4179, %v4325
        %v4358 = vadd.f32 %v4182, %v4326
        %v4359 = vadd.f32 %v4187, %v4327
        %v4360 = vadd.f32 %v4190, %v4328
        %v4361 = vadd.f32 %v4195, %v4329
        %v4362 = vadd.f32 %v4198, %v4330
        %v4363 = vadd.f32 %v4203, %v4331
        %v4364 = vadd.f32 %v4206, %v4332
        %v4365 = vadd.f32 %v4211, %v4333
        %v4366 = vadd.f32 %v4214, %v4334
        %v4367 = vadd.f32 %v4219, %v4335
        %v4368 = vadd.f32 %v4222, %v4336
        %v4369 = vadd.f32 %v4227, %v4337
        %v4370 = vadd.f32 %v4230, %v4338
        %v4371 = vadd.f32 %v4235, %v4339
        %v4372 = vadd.f32 %v4238, %v4340
        %v4373 = vadd.f32 %v4243, %v4341
        %v4374 = vadd.f32 %v4246, %v4342
        %v4375 = vadd.f32 %v4251, %v4343
        %v4376 = vadd.f32 %v4254, %v4344
        %v4377 = vadd.f32 %v4259, %v4345
        %v4378 = vadd.f32 %v4262, %v4346
        %v4379 = vadd.f32 %v4267, %v4347
        %v4380 = vadd.f32 %v4270, %v4348
        %v4381 = vadd.f32 %v4275, %v4349
        %v4382 = vadd.f32 %v4278, %v4350
        %v4383 = vadd.f32 %v4283, %v4351
        %v4384 = vadd.f32 %v4286, %v4352
        %v4385 = vmax.f32 %v4353, 0.0
        %v4386 = vmax.f32 %v4354, 0.0
        %v4387 = vmax.f32 %v4355, 0.0
        %v4388 = vmax.f32 %v4356, 0.0
        %v4389 = vmax.f32 %v4357, 0.0
        %v4390 = vmax.f32 %v4358, 0.0
        %v4391 = vmax.f32 %v4359, 0.0
        %v4392 = vmax.f32 %v4360, 0.0
        %v4393 = vmax.f32 %v4361, 0.0
        %v4394 = vmax.f32 %v4362, 0.0
        %v4395 = vmax.f32 %v4363, 0.0
        %v4396 = vmax.f32 %v4364, 0.0
        %v4397 = vmax.f32 %v4365, 0.0
        %v4398 = vmax.f32 %v4366, 0.0
        %v4399 = vmax.f32 %v4367, 0.0
        %v4400 = vmax.f32 %v4368, 0.0
        %v4401 = vmax.f32 %v4369, 0.0
        %v4402 = vmax.f32 %v4370, 0.0
        %v4403 = vmax.f32 %v4371, 0.0
        %v4404 = vmax.f32 %v4372, 0.0
        %v4405 = vmax.f32 %v4373, 0.0
        %v4406 = vmax.f32 %v4374, 0.0
        %v4407 = vmax.f32 %v4375, 0.0
        %v4408 = vmax.f32 %v4376, 0.0
        %v4409 = vmax.f32 %v4377, 0.0
        %v4410 = vmax.f32 %v4378, 0.0
        %v4411 = vmax.f32 %v4379, 0.0
        %v4412 = vmax.f32 %v4380, 0.0
        %v4413 = vmax.f32 %v4381, 0.0
        %v4414 = vmax.f32 %v4382, 0.0
        %v4415 = vmax.f32 %v4383, 0.0
        %v4416 = vmax.f32 %v4384, 0.0
        %v4417 = vpack.c.bf16 %v4386, %v4385
        %v4418 = vpack.c.bf16 %v4388, %v4387
        %v4419 = vpack.c.bf16 %v4390, %v4389
        %v4420 = vpack.c.bf16 %v4392, %v4391
        %v4421 = vpack.c.bf16 %v4394, %v4393
        %v4422 = vpack.c.bf16 %v4396, %v4395
        %v4423 = vpack.c.bf16 %v4398, %v4397
        %v4424 = vpack.c.bf16 %v4400, %v4399
        %v4425 = vpack.c.bf16 %v4402, %v4401
        %v4426 = vpack.c.bf16 %v4404, %v4403
        %v4427 = vpack.c.bf16 %v4406, %v4405
        %v4428 = vpack.c.bf16 %v4408, %v4407
        %v4429 = vpack.c.bf16 %v4410, %v4409
        %v4430 = vpack.c.bf16 %v4412, %v4411
        %v4431 = vpack.c.bf16 %v4414, %v4413
        %v4432 = vpack.c.bf16 %v4416, %v4415
        %v4449 = vunpack.c.l.b16 %v4417
        %v4450 = vunpack.c.h.b16 %v4417
        %v4451 = vunpack.c.l.b16 %v4418
        %v4452 = vunpack.c.h.b16 %v4418
        %v4453 = vunpack.c.l.b16 %v4419
        %v4454 = vunpack.c.h.b16 %v4419
        %v4455 = vunpack.c.l.b16 %v4420
        %v4456 = vunpack.c.h.b16 %v4420
        %v4457 = vunpack.c.l.b16 %v4421
        %v4458 = vunpack.c.h.b16 %v4421
        %v4459 = vunpack.c.l.b16 %v4422
        %v4460 = vunpack.c.h.b16 %v4422
        %v4461 = vunpack.c.l.b16 %v4423
        %v4462 = vunpack.c.h.b16 %v4423
        %v4463 = vunpack.c.l.b16 %v4424
        %v4464 = vunpack.c.h.b16 %v4424
        %v4465 = vunpack.c.l.b16 %v4425
        %v4466 = vunpack.c.h.b16 %v4425
        %v4467 = vunpack.c.l.b16 %v4426
        %v4468 = vunpack.c.h.b16 %v4426
        %v4469 = vunpack.c.l.b16 %v4427
        %v4470 = vunpack.c.h.b16 %v4427
        %v4471 = vunpack.c.l.b16 %v4428
        %v4472 = vunpack.c.h.b16 %v4428
        %v4473 = vunpack.c.l.b16 %v4429
        %v4474 = vunpack.c.h.b16 %v4429
        %v4475 = vunpack.c.l.b16 %v4430
        %v4476 = vunpack.c.h.b16 %v4430
        %v4477 = vunpack.c.l.b16 %v4431
        %v4478 = vunpack.c.h.b16 %v4431
        %v4479 = vunpack.c.l.b16 %v4432
        %v4480 = vunpack.c.h.b16 %v4432
        %v4481 = vpack.c.b16 %v4449, %v4449
        %v4482 = vpack.c.b16 %v4450, %v4450
        %v4483 = vpack.c.b16 %v4451, %v4451
        %v4484 = vpack.c.b16 %v4452, %v4452
        %v4485 = vpack.c.b16 %v4453, %v4453
        %v4486 = vpack.c.b16 %v4454, %v4454
        %v4487 = vpack.c.b16 %v4455, %v4455
        %v4488 = vpack.c.b16 %v4456, %v4456
        %v4489 = vpack.c.b16 %v4457, %v4457
        %v4490 = vpack.c.b16 %v4458, %v4458
        %v4491 = vpack.c.b16 %v4459, %v4459
        %v4492 = vpack.c.b16 %v4460, %v4460
        %v4493 = vpack.c.b16 %v4461, %v4461
        %v4494 = vpack.c.b16 %v4462, %v4462
        %v4495 = vpack.c.b16 %v4463, %v4463
        %v4496 = vpack.c.b16 %v4464, %v4464
        %v4497 = vpack.c.b16 %v4465, %v4465
        %v4498 = vpack.c.b16 %v4466, %v4466
        %v4499 = vpack.c.b16 %v4467, %v4467
        %v4500 = vpack.c.b16 %v4468, %v4468
        %v4501 = vpack.c.b16 %v4469, %v4469
        %v4502 = vpack.c.b16 %v4470, %v4470
        %v4503 = vpack.c.b16 %v4471, %v4471
        %v4504 = vpack.c.b16 %v4472, %v4472
        %v4505 = vpack.c.b16 %v4473, %v4473
        %v4506 = vpack.c.b16 %v4474, %v4474
        %v4507 = vpack.c.b16 %v4475, %v4475
        %v4508 = vpack.c.b16 %v4476, %v4476
        %v4509 = vpack.c.b16 %v4477, %v4477
        %v4510 = vpack.c.b16 %v4478, %v4478
        %v4511 = vpack.c.b16 %v4479, %v4479
        %v4512 = vpack.c.b16 %v4480, %v4480
        %4545 = vst [vmem:[%s340] sm:$0xf] %v4481
        %4546 = vst [vmem:[%s340 + $0x4] sm:$0xf] %v4482
        %4547 = vst [vmem:[%s340 + $0x8] sm:$0xf] %v4483
        %4548 = vst [vmem:[%s340 + $0xc] sm:$0xf] %v4484
        %4549 = vst [vmem:[%s340 + $0x10] sm:$0xf] %v4485
        %4550 = vst [vmem:[%s340 + $0x14] sm:$0xf] %v4486
        %4551 = vst [vmem:[%s340 + $0x18] sm:$0xf] %v4487
        %4552 = vst [vmem:[%s340 + $0x1c] sm:$0xf] %v4488
        %4553 = vst [vmem:[%s340 + $0x20] sm:$0xf] %v4489
        %4554 = vst [vmem:[%s340 + $0x24] sm:$0xf] %v4490
        %4555 = vst [vmem:[%s340 + $0x28] sm:$0xf] %v4491
        %4556 = vst [vmem:[%s340 + $0x2c] sm:$0xf] %v4492
        %4557 = vst [vmem:[%s340 + $0x30] sm:$0xf] %v4493
        %4558 = vst [vmem:[%s340 + $0x34] sm:$0xf] %v4494
        %4559 = vst [vmem:[%s340 + $0x38] sm:$0xf] %v4495
        %4560 = vst [vmem:[%s340 + $0x3c] sm:$0xf] %v4496
        %4561 = vst [vmem:[%s340 + $0x40] sm:$0xf] %v4497
        %4562 = vst [vmem:[%s340 + $0x44] sm:$0xf] %v4498
        %4563 = vst [vmem:[%s340 + $0x48] sm:$0xf] %v4499
        %4564 = vst [vmem:[%s340 + $0x4c] sm:$0xf] %v4500
        %4565 = vst [vmem:[%s340 + $0x50] sm:$0xf] %v4501
        %4566 = vst [vmem:[%s340 + $0x54] sm:$0xf] %v4502
        %4567 = vst [vmem:[%s340 + $0x58] sm:$0xf] %v4503
        %4568 = vst [vmem:[%s340 + $0x5c] sm:$0xf] %v4504
        %4569 = vst [vmem:[%s340 + $0x60] sm:$0xf] %v4505
        %4570 = vst [vmem:[%s340 + $0x64] sm:$0xf] %v4506
        %4571 = vst [vmem:[%s340 + $0x68] sm:$0xf] %v4507
        %4572 = vst [vmem:[%s340 + $0x6c] sm:$0xf] %v4508
        %4573 = vst [vmem:[%s340 + $0x70] sm:$0xf] %v4509
        %4574 = vst [vmem:[%s340 + $0x74] sm:$0xf] %v4510
        %4575 = vst [vmem:[%s340 + $0x78] sm:$0xf] %v4511
        %4576 = vst [vmem:[%s340 + $0x7c] sm:$0xf] %v4512
        %s4577 = sand.u32 %s186, 1
        %s4578 = scalar_lea.sflag [#allocation5], %s4577
        %s4579 = sand.u32 %s186, 1
        %s4580 = smul.addr %s4579, 128
        %s4581 = scalar_lea.vmem [#allocation11], %s4580
        // Predicated region
        $region65: #{tpu_custom_call.1} parent=47 // pred_check
          %p4582 = pneg %p196
        $region66: #{tpu_custom_call.1} parent=47 // pred_check_branch
          %4584 = sbr.rel (%p4582) target = $region68
        $region67: #{tpu_custom_call.1} parent=47 // pred_region
          %s4586 = ssub.s32 2048, 2048
          %4587 = vsyncadd %s4578, %s4586
          %s4588 = smul.addr %s26, 32
          %s4589 = smul.addr %s4588, 64
          %s4590 = scalar_lea.hbm %s7, %s4589
          %s4591 = sshll.u32 %s4581, 4
          %s4592 = int_to_ptr.vmem [resolvable:$true] %s4591
          %4597 = dma.vmem_to_hbm [thread:$0]  %s4592, 2048, %s4590, %s4578, 64, 64, 4
        $region68: #{tpu_custom_call.1} parent=47 // pred_fallthru
          _
      $region48: #{tpu_custom_call.1} parent=5 // pred_fallthru
        _
      %p4598 = scmp.le.s32.totalorder 2, %s21
      // Predicated region
      $region69: #{tpu_custom_call.1} parent=5 // pred_check
        %p4599 = pneg %p4598
      $region70: #{tpu_custom_call.1} parent=5 // pred_check_branch
        %4601 = sbr.rel (%p4599) target = $region72
      $region71: #{tpu_custom_call.1} parent=5 // pred_region
        %s4602 = ssub.s32 %s21, 2
        // Predicated region
        $region73: #{tpu_custom_call.1} parent=71 // pred_check
          %p4603 = pneg %p202
        $region74: #{tpu_custom_call.1} parent=71 // pred_check_branch
          %4605 = sbr.rel (%p4603) target = $region76
        $region75: #{tpu_custom_call.1} parent=71 // pred_region
          %s4606 = sand.u32 %s187, 1
          %s4607 = scalar_lea.sflag [#allocation5], %s4606
          %s4608 = sand.u32 %s187, 1
          %s4609 = smul.addr %s4608, 128
          %s4610 = scalar_lea.vmem [#allocation11], %s4609
          %4611 = dma.done %s4607, 2048
        $region76: #{tpu_custom_call.1} parent=71 // pred_fallthru
          _
      $region72: #{tpu_custom_call.1} parent=5 // pred_fallthru
        _
    $region6: #{tpu_custom_call.1} parent=1 // loop_footer
      %s25 = sadd.s32 1, %s21
    $region7: #{tpu_custom_call.1} parent=1 // loop_footer_branch
      %20 = sbr.rel target = $region3
    $region8: #{tpu_custom_call.1} parent=1 // loop_exit
      _
    %4612 = vsyncpa [#allocation4], 1
    %s4613 = scalar_lea.sflag [#allocation4], 1
    %4614 = vsyncpa %s4613, 1
    %4615 = vsyncpa [#allocation7], 1
    %4616 = vsyncpa [#allocation10], 1
    %4617 = vsyncpa [#allocation5], 1
    %s4618 = scalar_lea.sflag [#allocation5], 1
    %4619 = vsyncpa %s4618, 1

</llo_original>
